<compile_context>
chip_gen: v7x
topology: tpu7x:2x2x1
jax: 0.10.0
libtpu: 0.0.40
codegen_flags: <defaults>
</compile_context>

<pallas_src>
import functools

import jax
import jax.numpy as jnp
from jax import lax
from jax.experimental import pallas as pl
from jax.experimental.pallas import tpu as pltpu


# ----------------------------------------------------------------------------
# Fused kernel: CSM/CM convolutional merge -> unrolled LSTM -> decoder matmul.
# ----------------------------------------------------------------------------
def _fused_kernel(s_ref, w_ref, wconv_ref, h0_ref, c0_ref,
                  wih_ref, whh_ref, b_ref, wdec_ref, bdec_ref,
                  logits_ref, hn_ref, cn_ref, y_scr,
                  *, n_lines, n_chars, seq_len, batch, hidden):
    B, T, H = batch, seq_len, hidden
    wc = wconv_ref  # 18 packed conv taps/biases in SMEM

    def lrelu(v):
        return jnp.where(v >= 0, v, 0.01 * v)

    # ------------------ CSM / CM: context vector u (B, H) -------------------
    x = s_ref[...]                                            # (B, D, L, H)
    v = lrelu(wc[0] * x[:, :, :-1, :] + wc[1] * x[:, :, 1:, :] + wc[2])      # csm_l1 (1,2,1)
    v = lrelu(wc[3] * v[:, :, :-1, :] + wc[4] * v[:, :, 1:, :] + wc[5])      # csm_l2 (1,2,1)
    v = lrelu(wc[6] * v[:, :, :-2, :] + wc[7] * v[:, :, 1:-1, :]
              + wc[8] * v[:, :, 2:, :] + wc[9])                              # csm_l3 (1,3,1)
    if n_chars == 7:                                          # csm_l4 (static branch)
        v = lrelu(wc[10] * v[:, :, :-2, :] + wc[11] * v[:, :, 1:-1, :]
                  + wc[12] * v[:, :, 2:, :] + wc[13])
    v = v[:, :, 0, :]                                         # (B, D, H)
    if n_lines == 1:
        u = v[:, 0, :]
    elif n_lines == 2:                                        # cm_21 (2,1)
        u = lrelu(wc[14] * v[:, 0, :] + wc[15] * v[:, 1, :] + wc[17])
    else:                                                     # cm_31 (3,1)
        u = lrelu(wc[14] * v[:, 0, :] + wc[15] * v[:, 1, :]
                  + wc[16] * v[:, 2, :] + wc[17])

    # ----------- LSTM prologue: hoisted input projection (per gate) ---------
    # uw_t = [w_emb_t, u]; split x@W_ih into the time-varying w-part (one
    # (T*B, H)@(H, H) matmul per gate, done once) and the time-invariant u-part.
    w_all = w_ref[...]                                        # (T*B, H), time-major
    wih = wih_ref[...]                                        # (4, 2H, H)
    whh = whh_ref[...]                                        # (4, H, H)
    bg = b_ref[...]                                           # (4, 1, H)

    xw, xu, whh_g = [], [], []
    for g in range(4):                                        # gate order i, f, g, o
        xw.append(jnp.dot(w_all, wih[g, :H, :],
                          preferred_element_type=jnp.float32))           # (T*B, H)
        xu.append(jnp.dot(u, wih[g, H:, :],
                          preferred_element_type=jnp.float32) + bg[g])   # (B, H)
        whh_g.append(whh[g])                                             # (H, H)

    # --------------- recurrence: statically unrolled over T -----------------
    h = h0_ref[...]                                           # (B, H)
    c = c0_ref[...]                                           # (B, H)
    for t in range(T):                                        # static -> fully unrolled
        lo = t * B
        gate = []
        for g in range(4):
            gate.append(xw[g][lo:lo + B, :] + xu[g]
                        + jnp.dot(h, whh_g[g], preferred_element_type=jnp.float32))
        i_g = jax.nn.sigmoid(gate[0])
        f_g = jax.nn.sigmoid(gate[1])
        g_g = jnp.tanh(gate[2])
        o_g = jax.nn.sigmoid(gate[3])
        c = f_g * c + i_g * g_g
        h = o_g * jnp.tanh(c)
        y_scr[:, t, :] = h                                    # (B, T, H) layout

    hn_ref[...] = h                                           # stored exactly once
    cn_ref[...] = c

    # ------------- fused decoder: one matmul, lane-dense store --------------
    y = y_scr[...].reshape(B * T, H)                          # free relabel (T % 8 == 0)
    logits_ref[...] = (jnp.dot(y, wdec_ref[...],
                               preferred_element_type=jnp.float32)
                       + bdec_ref[...])


# ----------------------------------------------------------------------------
# Wrapper: embedding gathers in XLA, everything else in the fused kernel.
# ----------------------------------------------------------------------------
def poetry_generator_forward(kparams, w_idx, s_idx, hidden):
    E = kparams["embedding"]
    B, T = w_idx.shape
    H = E.shape[1]
    D, L = s_idx.shape[-2], s_idx.shape[-1]
    V = kparams["vocab_size"]
    Vp = kparams["wdec_p"].shape[1]
    h0, c0 = hidden  # each (1, B, H)

    # encoder (embedding gathers); w in time-major flat (T*B, H)
    w_flat = jnp.take(E, jnp.transpose(w_idx).reshape(-1), axis=0)         # (T*B, H)
    s_emb = jnp.take(E, s_idx.reshape(B, -1), axis=0).reshape(B, D, L, H)  # (B, D, L, H)

    kern = functools.partial(_fused_kernel, n_lines=D, n_chars=L,
                             seq_len=T, batch=B, hidden=H)
    logits_p, h_n, c_n = pl.pallas_call(
        kern,
        out_shape=(
            jax.ShapeDtypeStruct((B * T, Vp), jnp.float32),
            jax.ShapeDtypeStruct((B, H), jnp.float32),
            jax.ShapeDtypeStruct((B, H), jnp.float32),
        ),
        grid=(1,),
        in_specs=[
            pl.BlockSpec((B, D, L, H), lambda i: (0, 0, 0, 0)),
            pl.BlockSpec((T * B, H), lambda i: (0, 0)),
            pl.BlockSpec(memory_space=pltpu.MemorySpace.SMEM),
            pl.BlockSpec((B, H), lambda i: (0, 0)),
            pl.BlockSpec((B, H), lambda i: (0, 0)),
            pl.BlockSpec((4, 2 * H, H), lambda i: (0, 0, 0)),
            pl.BlockSpec((4, H, H), lambda i: (0, 0, 0)),
            pl.BlockSpec((4, 1, H), lambda i: (0, 0, 0)),
            pl.BlockSpec((H, Vp), lambda i: (0, 0)),
            pl.BlockSpec((1, Vp), lambda i: (0, 0)),
        ],
        out_specs=(
            pl.BlockSpec((B * T, Vp), lambda i: (0, 0)),
            pl.BlockSpec((B, H), lambda i: (0, 0)),
            pl.BlockSpec((B, H), lambda i: (0, 0)),
        ),
        scratch_shapes=[pltpu.VMEM((B, T, H), jnp.float32)],
        compiler_params=pltpu.CompilerParams(
            dimension_semantics=("arbitrary",)),
    )(s_emb, w_flat, kparams["wconv"], h0[0], c0[0],
      kparams["wih_g"], kparams["whh_g"], kparams["b_g"],
      kparams["wdec_p"], kparams["bdec_p"])

    return logits_p[:, :V], (h_n[None], c_n[None])


# ----------------------------------------------------------------------------
# Pure-JAX reference for validation (uses the "natural" parameter layout)
# ----------------------------------------------------------------------------
def reference_forward(params, w_idx, s_idx, hidden):
    E = params["embedding"]
    B, T = w_idx.shape
    H = E.shape[1]
    D, L = s_idx.shape[-2], s_idx.shape[-1]
    h0, c0 = hidden
    wc = params["wconv"]

    def lrelu(v):
        return jnp.where(v >= 0, v, 0.01 * v)

    w_emb = jnp.take(E, w_idx, axis=0)
    s_emb = jnp.take(E, s_idx.reshape(B, -1), axis=0).reshape(B, D, L, H)

    v = lrelu(wc[0] * s_emb[:, :, :-1] + wc[1] * s_emb[:, :, 1:] + wc[2])
    v = lrelu(wc[3] * v[:, :, :-1] + wc[4] * v[:, :, 1:] + wc[5])
    v = lrelu(wc[6] * v[:, :, :-2] + wc[7] * v[:, :, 1:-1] + wc[8] * v[:, :, 2:] + wc[9])
    if L == 7:
        v = lrelu(wc[10] * v[:, :, :-2] + wc[11] * v[:, :, 1:-1]
                  + wc[12] * v[:, :, 2:] + wc[13])
    v = v[:, :, 0, :]
    if D == 1:
        u = v[:, 0, :]
    elif D == 2:
        u = lrelu(wc[14] * v[:, 0] + wc[15] * v[:, 1] + wc[17])
    else:
        u = lrelu(wc[14] * v[:, 0] + wc[15] * v[:, 1] + wc[16] * v[:, 2] + wc[17])

    u_rep = jnp.broadcast_to(u[:, None, :], (B, T, H))
    uw = jnp.concatenate([w_emb, u_rep], axis=2)

    wih_t, whh_t, bias = params["wih_t"], params["whh_t"], params["b_lstm"][0]

    def step(carry, x_t):
        h, c = carry
        gates = x_t @ wih_t + h @ whh_t + bias
        i_g = jax.nn.sigmoid(gates[:, :H])
        f_g = jax.nn.sigmoid(gates[:, H:2 * H])
        g_g = jnp.tanh(gates[:, 2 * H:3 * H])
        o_g = jax.nn.sigmoid(gates[:, 3 * H:])
        c2 = f_g * c + i_g * g_g
        h2 = o_g * jnp.tanh(c2)
        return (h2, c2), h2

    (hT, cT), ys = lax.scan(step, (h0[0], c0[0]), jnp.transpose(uw, (1, 0, 2)))
    y_flat = jnp.transpose(ys, (1, 0, 2)).reshape(B * T, H)
    logits = y_flat @ params["wdec_t"] + params["bdec"]
    return logits, (hT[None], cT[None])


# ----------------------------------------------------------------------------
# Deterministic parameter construction + kernel-layout packing
# ----------------------------------------------------------------------------
def init_params(key, vocab_size, hidden):
    ks = jax.random.split(key, 8)
    u = lambda k, shape: jax.random.uniform(k, shape, jnp.float32, -0.1, 0.1)
    params = {
        "embedding": u(ks[0], (vocab_size, hidden)),
        # packed conv taps: l1(w0,w1,b) l2(w0,w1,b) l3(w0,w1,w2,b) l4(w0,w1,w2,b) cm(w0,w1,w2,b)
        "wconv": u(ks[1], (18,)),
        "wih_t": u(ks[2], (2 * hidden, 4 * hidden)),    # transposed W_ih
        "whh_t": u(ks[3], (hidden, 4 * hidden)),        # transposed W_hh
        "b_lstm": (u(ks[4], (4 * hidden,)) + u(ks[5], (4 * hidden,))).reshape(1, -1),
        "wdec_t": u(ks[6], (hidden, vocab_size)),       # transposed decoder weight
        "bdec": u(ks[7], (vocab_size,)).reshape(1, -1),
    }
    return params


def pack_params(params, hidden, vocab_size):
    """Repack natural params into gate-split / lane-padded kernel layout."""
    H, V = hidden, vocab_size
    Vp = max(128, ((V + 127) // 128) * 128)
    wih_t, whh_t, b = params["wih_t"], params["whh_t"], params["b_lstm"]
    wih_g = jnp.stack([wih_t[:, g * H:(g + 1) * H] for g in range(4)])   # (4, 2H, H)
    whh_g = jnp.stack([whh_t[:, g * H:(g + 1) * H] for g in range(4)])   # (4, H, H)
    b_g = jnp.stack([b[:, g * H:(g + 1) * H] for g in range(4)])         # (4, 1, H)
    wdec_p = jnp.pad(params["wdec_t"], ((0, 0), (0, Vp - V)))            # (H, Vp)
    bdec_p = jnp.pad(params["bdec"], ((0, 0), (0, Vp - V)))              # (1, Vp)
    return {
        "embedding": params["embedding"],
        "wconv": params["wconv"],
        "wih_g": wih_g, "whh_g": whh_g, "b_g": b_g,
        "wdec_p": wdec_p, "bdec_p": bdec_p,
        "vocab_size": V,
    }


if __name__ == "__main__":
    VOCAB = 100
    H = 32          # embedding_dim == rnn_hidden_size
    B, T = 2, 8     # batch, current-line length
    D, L = 3, 7     # n previous lines, chars per line (7 -> csm_l4 path, cm_31 path)

    key = jax.random.PRNGKey(0)
    kp, kw, ks = jax.random.split(key, 3)
    params = init_params(kp, VOCAB, H)
    kparams = pack_params(params, H, VOCAB)

    w_idx = jax.random.randint(kw, (B, T), 0, VOCAB, dtype=jnp.int32)
    s_idx = jax.random.randint(ks, (B, 1, D, L), 0, VOCAB, dtype=jnp.int32)
    hidden = (jnp.zeros((1, B, H), jnp.float32), jnp.zeros((1, B, H), jnp.float32))

    logits, (h_n, c_n) = poetry_generator_forward(kparams, w_idx, s_idx, hidden)
    jax.block_until_ready((logits, h_n, c_n))

    ref_logits, (ref_h, ref_c) = reference_forward(params, w_idx, s_idx, hidden)
    assert logits.shape == (B * T, VOCAB)
    assert h_n.shape == (1, B, H) and c_n.shape == (1, B, H)
    assert jnp.allclose(logits, ref_logits, atol=1e-3, rtol=1e-3)
    assert jnp.allclose(h_n, ref_h, atol=1e-3, rtol=1e-3)
    assert jnp.allclose(c_n, ref_c, atol=1e-3, rtol=1e-3)

    print("KERNEL_OK")
</pallas_src>

<mosaic_0001>
module attributes {stable_mosaic.version = 11 : i64} {
  func.func @_fused_kernel(%arg0: i32, %arg1: memref<2x3x7x32xf32, #tpu.memory_space<vmem>>, %arg2: memref<16x32xf32, #tpu.memory_space<vmem>>, %arg3: memref<18xf32, #tpu.memory_space<smem>>, %arg4: memref<2x32xf32, #tpu.memory_space<vmem>>, %arg5: memref<2x32xf32, #tpu.memory_space<vmem>>, %arg6: memref<4x64x32xf32, #tpu.memory_space<vmem>>, %arg7: memref<4x32x32xf32, #tpu.memory_space<vmem>>, %arg8: memref<4x1x32xf32, #tpu.memory_space<vmem>>, %arg9: memref<32x128xf32, #tpu.memory_space<vmem>>, %arg10: memref<1x128xf32, #tpu.memory_space<vmem>>, %arg11: memref<16x128xf32, #tpu.memory_space<vmem>>, %arg12: memref<2x32xf32, #tpu.memory_space<vmem>>, %arg13: memref<2x32xf32, #tpu.memory_space<vmem>>, %arg14: memref<2x8x32xf32, #tpu.memory_space<vmem>>) attributes {dimension_semantics = [#tpu.dimension_semantics<arbitrary>], iteration_bounds = array<i64: 1>, scalar_prefetch = 0 : i64, scratch_operands = 1 : i64, tpu.core_type = #tpu.core_type<tc>, window_params = [{pipeline_mode = #tpu.pipeline_mode<synchronous>, transform_indices = @transform_0, window_bounds = array<i64: 2, 3, 7, 32>}, {pipeline_mode = #tpu.pipeline_mode<synchronous>, transform_indices = @transform_1, window_bounds = array<i64: 16, 32>}, {transform_indices = @transform_2, window_bounds = array<i64: 18>}, {pipeline_mode = #tpu.pipeline_mode<synchronous>, transform_indices = @transform_3, window_bounds = array<i64: 2, 32>}, {pipeline_mode = #tpu.pipeline_mode<synchronous>, transform_indices = @transform_4, window_bounds = array<i64: 2, 32>}, {pipeline_mode = #tpu.pipeline_mode<synchronous>, transform_indices = @transform_5, window_bounds = array<i64: 4, 64, 32>}, {pipeline_mode = #tpu.pipeline_mode<synchronous>, transform_indices = @transform_6, window_bounds = array<i64: 4, 32, 32>}, {pipeline_mode = #tpu.pipeline_mode<synchronous>, transform_indices = @transform_7, window_bounds = array<i64: 4, 1, 32>}, {pipeline_mode = #tpu.pipeline_mode<synchronous>, transform_indices = @transform_8, window_bounds = array<i64: 32, 128>}, {pipeline_mode = #tpu.pipeline_mode<synchronous>, transform_indices = @transform_9, window_bounds = array<i64: 1, 128>}, {pipeline_mode = #tpu.pipeline_mode<synchronous>, transform_indices = @transform_10, window_bounds = array<i64: 16, 128>}, {pipeline_mode = #tpu.pipeline_mode<synchronous>, transform_indices = @transform_11, window_bounds = array<i64: 2, 32>}, {pipeline_mode = #tpu.pipeline_mode<synchronous>, transform_indices = @transform_12, window_bounds = array<i64: 2, 32>}]} {
    %c0 = arith.constant 0 : index
    %c0_0 = arith.constant 0 : index
    %c0_1 = arith.constant 0 : index
    %c0_2 = arith.constant 0 : index
    %0 = vector.load %arg1[%c0, %c0_0, %c0_1, %c0_2] : memref<2x3x7x32xf32, #tpu.memory_space<vmem>>, vector<2x3x7x32xf32>
    %c0_3 = arith.constant 0 : index
    %1 = memref.load %arg3[%c0_3] : memref<18xf32, #tpu.memory_space<smem>>
    %2 = vector.extract_strided_slice %0 {offsets = [0, 0, 0, 0], sizes = [2, 3, 6, 32], strides = [1, 1, 1, 1]} : vector<2x3x7x32xf32> to vector<2x3x6x32xf32>
    %3 = vector.broadcast %1 : f32 to vector<2x3x6x32xf32>
    %4 = arith.mulf %3, %2 : vector<2x3x6x32xf32>
    %c1 = arith.constant 1 : index
    %5 = memref.load %arg3[%c1] : memref<18xf32, #tpu.memory_space<smem>>
    %6 = vector.extract_strided_slice %0 {offsets = [0, 0, 1, 0], sizes = [2, 3, 6, 32], strides = [1, 1, 1, 1]} : vector<2x3x7x32xf32> to vector<2x3x6x32xf32>
    %7 = vector.broadcast %5 : f32 to vector<2x3x6x32xf32>
    %8 = arith.mulf %7, %6 : vector<2x3x6x32xf32>
    %9 = arith.addf %4, %8 : vector<2x3x6x32xf32>
    %c2 = arith.constant 2 : index
    %10 = memref.load %arg3[%c2] : memref<18xf32, #tpu.memory_space<smem>>
    %11 = vector.broadcast %10 : f32 to vector<2x3x6x32xf32>
    %12 = arith.addf %9, %11 : vector<2x3x6x32xf32>
    %cst = arith.constant 0.000000e+00 : f32
    %13 = vector.broadcast %cst : f32 to vector<2x3x6x32xf32>
    %14 = arith.cmpf oge, %12, %13 : vector<2x3x6x32xf32>
    %cst_4 = arith.constant 0.00999999977 : f32
    %15 = vector.broadcast %cst_4 : f32 to vector<2x3x6x32xf32>
    %16 = arith.mulf %15, %12 : vector<2x3x6x32xf32>
    %17 = arith.select %14, %12, %16 : vector<2x3x6x32xi1>, vector<2x3x6x32xf32>
    %c3 = arith.constant 3 : index
    %18 = memref.load %arg3[%c3] : memref<18xf32, #tpu.memory_space<smem>>
    %19 = vector.extract_strided_slice %17 {offsets = [0, 0, 0, 0], sizes = [2, 3, 5, 32], strides = [1, 1, 1, 1]} : vector<2x3x6x32xf32> to vector<2x3x5x32xf32>
    %20 = vector.broadcast %18 : f32 to vector<2x3x5x32xf32>
    %21 = arith.mulf %20, %19 : vector<2x3x5x32xf32>
    %c4 = arith.constant 4 : index
    %22 = memref.load %arg3[%c4] : memref<18xf32, #tpu.memory_space<smem>>
    %23 = vector.extract_strided_slice %17 {offsets = [0, 0, 1, 0], sizes = [2, 3, 5, 32], strides = [1, 1, 1, 1]} : vector<2x3x6x32xf32> to vector<2x3x5x32xf32>
    %24 = vector.broadcast %22 : f32 to vector<2x3x5x32xf32>
    %25 = arith.mulf %24, %23 : vector<2x3x5x32xf32>
    %26 = arith.addf %21, %25 : vector<2x3x5x32xf32>
    %c5 = arith.constant 5 : index
    %27 = memref.load %arg3[%c5] : memref<18xf32, #tpu.memory_space<smem>>
    %28 = vector.broadcast %27 : f32 to vector<2x3x5x32xf32>
    %29 = arith.addf %26, %28 : vector<2x3x5x32xf32>
    %cst_5 = arith.constant 0.000000e+00 : f32
    %30 = vector.broadcast %cst_5 : f32 to vector<2x3x5x32xf32>
    %31 = arith.cmpf oge, %29, %30 : vector<2x3x5x32xf32>
    %cst_6 = arith.constant 0.00999999977 : f32
    %32 = vector.broadcast %cst_6 : f32 to vector<2x3x5x32xf32>
    %33 = arith.mulf %32, %29 : vector<2x3x5x32xf32>
    %34 = arith.select %31, %29, %33 : vector<2x3x5x32xi1>, vector<2x3x5x32xf32>
    %c6 = arith.constant 6 : index
    %35 = memref.load %arg3[%c6] : memref<18xf32, #tpu.memory_space<smem>>
    %36 = vector.extract_strided_slice %34 {offsets = [0, 0, 0, 0], sizes = [2, 3, 3, 32], strides = [1, 1, 1, 1]} : vector<2x3x5x32xf32> to vector<2x3x3x32xf32>
    %37 = vector.broadcast %35 : f32 to vector<2x3x3x32xf32>
    %38 = arith.mulf %37, %36 : vector<2x3x3x32xf32>
    %c7 = arith.constant 7 : index
    %39 = memref.load %arg3[%c7] : memref<18xf32, #tpu.memory_space<smem>>
    %40 = vector.extract_strided_slice %34 {offsets = [0, 0, 1, 0], sizes = [2, 3, 3, 32], strides = [1, 1, 1, 1]} : vector<2x3x5x32xf32> to vector<2x3x3x32xf32>
    %41 = vector.broadcast %39 : f32 to vector<2x3x3x32xf32>
    %42 = arith.mulf %41, %40 : vector<2x3x3x32xf32>
    %43 = arith.addf %38, %42 : vector<2x3x3x32xf32>
    %c8 = arith.constant 8 : index
    %44 = memref.load %arg3[%c8] : memref<18xf32, #tpu.memory_space<smem>>
    %45 = vector.extract_strided_slice %34 {offsets = [0, 0, 2, 0], sizes = [2, 3, 3, 32], strides = [1, 1, 1, 1]} : vector<2x3x5x32xf32> to vector<2x3x3x32xf32>
    %46 = vector.broadcast %44 : f32 to vector<2x3x3x32xf32>
    %47 = arith.mulf %46, %45 : vector<2x3x3x32xf32>
    %48 = arith.addf %43, %47 : vector<2x3x3x32xf32>
    %c9 = arith.constant 9 : index
    %49 = memref.load %arg3[%c9] : memref<18xf32, #tpu.memory_space<smem>>
    %50 = vector.broadcast %49 : f32 to vector<2x3x3x32xf32>
    %51 = arith.addf %48, %50 : vector<2x3x3x32xf32>
    %cst_7 = arith.constant 0.000000e+00 : f32
    %52 = vector.broadcast %cst_7 : f32 to vector<2x3x3x32xf32>
    %53 = arith.cmpf oge, %51, %52 : vector<2x3x3x32xf32>
    %cst_8 = arith.constant 0.00999999977 : f32
    %54 = vector.broadcast %cst_8 : f32 to vector<2x3x3x32xf32>
    %55 = arith.mulf %54, %51 : vector<2x3x3x32xf32>
    %56 = arith.select %53, %51, %55 : vector<2x3x3x32xi1>, vector<2x3x3x32xf32>
    %c10 = arith.constant 10 : index
    %57 = memref.load %arg3[%c10] : memref<18xf32, #tpu.memory_space<smem>>
    %58 = vector.extract_strided_slice %56 {offsets = [0, 0, 0, 0], sizes = [2, 3, 1, 32], strides = [1, 1, 1, 1]} : vector<2x3x3x32xf32> to vector<2x3x1x32xf32>
    %59 = vector.broadcast %57 : f32 to vector<2x3x1x32xf32>
    %60 = arith.mulf %59, %58 : vector<2x3x1x32xf32>
    %c11 = arith.constant 11 : index
    %61 = memref.load %arg3[%c11] : memref<18xf32, #tpu.memory_space<smem>>
    %62 = vector.extract_strided_slice %56 {offsets = [0, 0, 1, 0], sizes = [2, 3, 1, 32], strides = [1, 1, 1, 1]} : vector<2x3x3x32xf32> to vector<2x3x1x32xf32>
    %63 = vector.broadcast %61 : f32 to vector<2x3x1x32xf32>
    %64 = arith.mulf %63, %62 : vector<2x3x1x32xf32>
    %65 = arith.addf %60, %64 : vector<2x3x1x32xf32>
    %c12 = arith.constant 12 : index
    %66 = memref.load %arg3[%c12] : memref<18xf32, #tpu.memory_space<smem>>
    %67 = vector.extract_strided_slice %56 {offsets = [0, 0, 2, 0], sizes = [2, 3, 1, 32], strides = [1, 1, 1, 1]} : vector<2x3x3x32xf32> to vector<2x3x1x32xf32>
    %68 = vector.broadcast %66 : f32 to vector<2x3x1x32xf32>
    %69 = arith.mulf %68, %67 : vector<2x3x1x32xf32>
    %70 = arith.addf %65, %69 : vector<2x3x1x32xf32>
    %c13 = arith.constant 13 : index
    %71 = memref.load %arg3[%c13] : memref<18xf32, #tpu.memory_space<smem>>
    %72 = vector.broadcast %71 : f32 to vector<2x3x1x32xf32>
    %73 = arith.addf %70, %72 : vector<2x3x1x32xf32>
    %cst_9 = arith.constant 0.000000e+00 : f32
    %74 = vector.broadcast %cst_9 : f32 to vector<2x3x1x32xf32>
    %75 = arith.cmpf oge, %73, %74 : vector<2x3x1x32xf32>
    %cst_10 = arith.constant 0.00999999977 : f32
    %76 = vector.broadcast %cst_10 : f32 to vector<2x3x1x32xf32>
    %77 = arith.mulf %76, %73 : vector<2x3x1x32xf32>
    %78 = arith.select %75, %73, %77 : vector<2x3x1x32xi1>, vector<2x3x1x32xf32>
    %79 = vector.shape_cast %78 : vector<2x3x1x32xf32> to vector<2x3x32xf32>
    %c14 = arith.constant 14 : index
    %80 = memref.load %arg3[%c14] : memref<18xf32, #tpu.memory_space<smem>>
    %81 = vector.extract_strided_slice %79 {offsets = [0, 0, 0], sizes = [2, 1, 32], strides = [1, 1, 1]} : vector<2x3x32xf32> to vector<2x1x32xf32>
    %82 = vector.shape_cast %81 : vector<2x1x32xf32> to vector<2x32xf32>
    %83 = vector.broadcast %80 : f32 to vector<2x32xf32>
    %84 = arith.mulf %83, %82 : vector<2x32xf32>
    %c15 = arith.constant 15 : index
    %85 = memref.load %arg3[%c15] : memref<18xf32, #tpu.memory_space<smem>>
    %86 = vector.extract_strided_slice %79 {offsets = [0, 1, 0], sizes = [2, 1, 32], strides = [1, 1, 1]} : vector<2x3x32xf32> to vector<2x1x32xf32>
    %87 = vector.shape_cast %86 : vector<2x1x32xf32> to vector<2x32xf32>
    %88 = vector.broadcast %85 : f32 to vector<2x32xf32>
    %89 = arith.mulf %88, %87 : vector<2x32xf32>
    %90 = arith.addf %84, %89 : vector<2x32xf32>
    %c16 = arith.constant 16 : index
    %91 = memref.load %arg3[%c16] : memref<18xf32, #tpu.memory_space<smem>>
    %92 = vector.extract_strided_slice %79 {offsets = [0, 2, 0], sizes = [2, 1, 32], strides = [1, 1, 1]} : vector<2x3x32xf32> to vector<2x1x32xf32>
    %93 = vector.shape_cast %92 : vector<2x1x32xf32> to vector<2x32xf32>
    %94 = vector.broadcast %91 : f32 to vector<2x32xf32>
    %95 = arith.mulf %94, %93 : vector<2x32xf32>
    %96 = arith.addf %90, %95 : vector<2x32xf32>
    %c17 = arith.constant 17 : index
    %97 = memref.load %arg3[%c17] : memref<18xf32, #tpu.memory_space<smem>>
    %98 = vector.broadcast %97 : f32 to vector<2x32xf32>
    %99 = arith.addf %96, %98 : vector<2x32xf32>
    %cst_11 = arith.constant 0.000000e+00 : f32
    %100 = vector.broadcast %cst_11 : f32 to vector<2x32xf32>
    %101 = arith.cmpf oge, %99, %100 : vector<2x32xf32>
    %cst_12 = arith.constant 0.00999999977 : f32
    %102 = vector.broadcast %cst_12 : f32 to vector<2x32xf32>
    %103 = arith.mulf %102, %99 : vector<2x32xf32>
    %104 = arith.select %101, %99, %103 : vector<2x32xi1>, vector<2x32xf32>
    %c0_13 = arith.constant 0 : index
    %c0_14 = arith.constant 0 : index
    %105 = vector.load %arg2[%c0_13, %c0_14] : memref<16x32xf32, #tpu.memory_space<vmem>>, vector<16x32xf32>
    %c0_15 = arith.constant 0 : index
    %c0_16 = arith.constant 0 : index
    %c0_17 = arith.constant 0 : index
    %106 = vector.load %arg6[%c0_15, %c0_16, %c0_17] : memref<4x64x32xf32, #tpu.memory_space<vmem>>, vector<4x64x32xf32>
    %c0_18 = arith.constant 0 : index
    %c0_19 = arith.constant 0 : index
    %c0_20 = arith.constant 0 : index
    %107 = vector.load %arg7[%c0_18, %c0_19, %c0_20] : memref<4x32x32xf32, #tpu.memory_space<vmem>>, vector<4x32x32xf32>
    %c0_21 = arith.constant 0 : index
    %c0_22 = arith.constant 0 : index
    %c0_23 = arith.constant 0 : index
    %108 = vector.load %arg8[%c0_21, %c0_22, %c0_23] : memref<4x1x32xf32, #tpu.memory_space<vmem>>, vector<4x1x32xf32>
    %109 = vector.extract_strided_slice %106 {offsets = [0, 0, 0], sizes = [1, 32, 32], strides = [1, 1, 1]} : vector<4x64x32xf32> to vector<1x32x32xf32>
    %110 = vector.shape_cast %109 : vector<1x32x32xf32> to vector<32x32xf32>
    %cst_24 = arith.constant dense<0.000000e+00> : vector<16x32xf32>
    %111 = tpu.matmul %105, %110, %cst_24 {dimension_numbers = #tpu.dot_dimension_numbers<[1], [0], [0], [1], [0, 0, 1, 1], [], []>} : vector<16x32xf32>, vector<32x32xf32>, vector<16x32xf32> -> vector<16x32xf32>
    %112 = vector.extract_strided_slice %106 {offsets = [0, 32, 0], sizes = [1, 32, 32], strides = [1, 1, 1]} : vector<4x64x32xf32> to vector<1x32x32xf32>
    %113 = vector.shape_cast %112 : vector<1x32x32xf32> to vector<32x32xf32>
    %cst_25 = arith.constant dense<0.000000e+00> : vector<2x32xf32>
    %114 = tpu.matmul %104, %113, %cst_25 {dimension_numbers = #tpu.dot_dimension_numbers<[1], [0], [0], [1], [0, 0, 1, 1], [], []>} : vector<2x32xf32>, vector<32x32xf32>, vector<2x32xf32> -> vector<2x32xf32>
    %115 = vector.extract_strided_slice %108 {offsets = [0, 0, 0], sizes = [1, 1, 32], strides = [1, 1, 1]} : vector<4x1x32xf32> to vector<1x1x32xf32>
    %116 = vector.shape_cast %115 : vector<1x1x32xf32> to vector<1x32xf32>
    %117 = vector.broadcast %116 : vector<1x32xf32> to vector<2x32xf32>
    %118 = arith.addf %114, %117 : vector<2x32xf32>
    %119 = vector.extract_strided_slice %107 {offsets = [0, 0, 0], sizes = [1, 32, 32], strides = [1, 1, 1]} : vector<4x32x32xf32> to vector<1x32x32xf32>
    %120 = vector.shape_cast %119 : vector<1x32x32xf32> to vector<32x32xf32>
    %121 = vector.extract_strided_slice %106 {offsets = [1, 0, 0], sizes = [1, 32, 32], strides = [1, 1, 1]} : vector<4x64x32xf32> to vector<1x32x32xf32>
    %122 = vector.shape_cast %121 : vector<1x32x32xf32> to vector<32x32xf32>
    %cst_26 = arith.constant dense<0.000000e+00> : vector<16x32xf32>
    %123 = tpu.matmul %105, %122, %cst_26 {dimension_numbers = #tpu.dot_dimension_numbers<[1], [0], [0], [1], [0, 0, 1, 1], [], []>} : vector<16x32xf32>, vector<32x32xf32>, vector<16x32xf32> -> vector<16x32xf32>
    %124 = vector.extract_strided_slice %106 {offsets = [1, 32, 0], sizes = [1, 32, 32], strides = [1, 1, 1]} : vector<4x64x32xf32> to vector<1x32x32xf32>
    %125 = vector.shape_cast %124 : vector<1x32x32xf32> to vector<32x32xf32>
    %cst_27 = arith.constant dense<0.000000e+00> : vector<2x32xf32>
    %126 = tpu.matmul %104, %125, %cst_27 {dimension_numbers = #tpu.dot_dimension_numbers<[1], [0], [0], [1], [0, 0, 1, 1], [], []>} : vector<2x32xf32>, vector<32x32xf32>, vector<2x32xf32> -> vector<2x32xf32>
    %127 = vector.extract_strided_slice %108 {offsets = [1, 0, 0], sizes = [1, 1, 32], strides = [1, 1, 1]} : vector<4x1x32xf32> to vector<1x1x32xf32>
    %128 = vector.shape_cast %127 : vector<1x1x32xf32> to vector<1x32xf32>
    %129 = vector.broadcast %128 : vector<1x32xf32> to vector<2x32xf32>
    %130 = arith.addf %126, %129 : vector<2x32xf32>
    %131 = vector.extract_strided_slice %107 {offsets = [1, 0, 0], sizes = [1, 32, 32], strides = [1, 1, 1]} : vector<4x32x32xf32> to vector<1x32x32xf32>
    %132 = vector.shape_cast %131 : vector<1x32x32xf32> to vector<32x32xf32>
    %133 = vector.extract_strided_slice %106 {offsets = [2, 0, 0], sizes = [1, 32, 32], strides = [1, 1, 1]} : vector<4x64x32xf32> to vector<1x32x32xf32>
    %134 = vector.shape_cast %133 : vector<1x32x32xf32> to vector<32x32xf32>
    %cst_28 = arith.constant dense<0.000000e+00> : vector<16x32xf32>
    %135 = tpu.matmul %105, %134, %cst_28 {dimension_numbers = #tpu.dot_dimension_numbers<[1], [0], [0], [1], [0, 0, 1, 1], [], []>} : vector<16x32xf32>, vector<32x32xf32>, vector<16x32xf32> -> vector<16x32xf32>
    %136 = vector.extract_strided_slice %106 {offsets = [2, 32, 0], sizes = [1, 32, 32], strides = [1, 1, 1]} : vector<4x64x32xf32> to vector<1x32x32xf32>
    %137 = vector.shape_cast %136 : vector<1x32x32xf32> to vector<32x32xf32>
    %cst_29 = arith.constant dense<0.000000e+00> : vector<2x32xf32>
    %138 = tpu.matmul %104, %137, %cst_29 {dimension_numbers = #tpu.dot_dimension_numbers<[1], [0], [0], [1], [0, 0, 1, 1], [], []>} : vector<2x32xf32>, vector<32x32xf32>, vector<2x32xf32> -> vector<2x32xf32>
    %139 = vector.extract_strided_slice %108 {offsets = [2, 0, 0], sizes = [1, 1, 32], strides = [1, 1, 1]} : vector<4x1x32xf32> to vector<1x1x32xf32>
    %140 = vector.shape_cast %139 : vector<1x1x32xf32> to vector<1x32xf32>
    %141 = vector.broadcast %140 : vector<1x32xf32> to vector<2x32xf32>
    %142 = arith.addf %138, %141 : vector<2x32xf32>
    %143 = vector.extract_strided_slice %107 {offsets = [2, 0, 0], sizes = [1, 32, 32], strides = [1, 1, 1]} : vector<4x32x32xf32> to vector<1x32x32xf32>
    %144 = vector.shape_cast %143 : vector<1x32x32xf32> to vector<32x32xf32>
    %145 = vector.extract_strided_slice %106 {offsets = [3, 0, 0], sizes = [1, 32, 32], strides = [1, 1, 1]} : vector<4x64x32xf32> to vector<1x32x32xf32>
    %146 = vector.shape_cast %145 : vector<1x32x32xf32> to vector<32x32xf32>
    %cst_30 = arith.constant dense<0.000000e+00> : vector<16x32xf32>
    %147 = tpu.matmul %105, %146, %cst_30 {dimension_numbers = #tpu.dot_dimension_numbers<[1], [0], [0], [1], [0, 0, 1, 1], [], []>} : vector<16x32xf32>, vector<32x32xf32>, vector<16x32xf32> -> vector<16x32xf32>
    %148 = vector.extract_strided_slice %106 {offsets = [3, 32, 0], sizes = [1, 32, 32], strides = [1, 1, 1]} : vector<4x64x32xf32> to vector<1x32x32xf32>
    %149 = vector.shape_cast %148 : vector<1x32x32xf32> to vector<32x32xf32>
    %cst_31 = arith.constant dense<0.000000e+00> : vector<2x32xf32>
    %150 = tpu.matmul %104, %149, %cst_31 {dimension_numbers = #tpu.dot_dimension_numbers<[1], [0], [0], [1], [0, 0, 1, 1], [], []>} : vector<2x32xf32>, vector<32x32xf32>, vector<2x32xf32> -> vector<2x32xf32>
    %151 = vector.extract_strided_slice %108 {offsets = [3, 0, 0], sizes = [1, 1, 32], strides = [1, 1, 1]} : vector<4x1x32xf32> to vector<1x1x32xf32>
    %152 = vector.shape_cast %151 : vector<1x1x32xf32> to vector<1x32xf32>
    %153 = vector.broadcast %152 : vector<1x32xf32> to vector<2x32xf32>
    %154 = arith.addf %150, %153 : vector<2x32xf32>
    %155 = vector.extract_strided_slice %107 {offsets = [3, 0, 0], sizes = [1, 32, 32], strides = [1, 1, 1]} : vector<4x32x32xf32> to vector<1x32x32xf32>
    %156 = vector.shape_cast %155 : vector<1x32x32xf32> to vector<32x32xf32>
    %c0_32 = arith.constant 0 : index
    %c0_33 = arith.constant 0 : index
    %157 = vector.load %arg4[%c0_32, %c0_33] : memref<2x32xf32, #tpu.memory_space<vmem>>, vector<2x32xf32>
    %c0_34 = arith.constant 0 : index
    %c0_35 = arith.constant 0 : index
    %158 = vector.load %arg5[%c0_34, %c0_35] : memref<2x32xf32, #tpu.memory_space<vmem>>, vector<2x32xf32>
    %159 = vector.extract_strided_slice %111 {offsets = [0, 0], sizes = [2, 32], strides = [1, 1]} : vector<16x32xf32> to vector<2x32xf32>
    %160 = arith.addf %159, %118 : vector<2x32xf32>
    %cst_36 = arith.constant dense<0.000000e+00> : vector<2x32xf32>
    %161 = tpu.matmul %157, %120, %cst_36 {dimension_numbers = #tpu.dot_dimension_numbers<[1], [0], [0], [1], [0, 0, 1, 1], [], []>} : vector<2x32xf32>, vector<32x32xf32>, vector<2x32xf32> -> vector<2x32xf32>
    %162 = arith.addf %160, %161 : vector<2x32xf32>
    %163 = vector.extract_strided_slice %123 {offsets = [0, 0], sizes = [2, 32], strides = [1, 1]} : vector<16x32xf32> to vector<2x32xf32>
    %164 = arith.addf %163, %130 : vector<2x32xf32>
    %cst_37 = arith.constant dense<0.000000e+00> : vector<2x32xf32>
    %165 = tpu.matmul %157, %132, %cst_37 {dimension_numbers = #tpu.dot_dimension_numbers<[1], [0], [0], [1], [0, 0, 1, 1], [], []>} : vector<2x32xf32>, vector<32x32xf32>, vector<2x32xf32> -> vector<2x32xf32>
    %166 = arith.addf %164, %165 : vector<2x32xf32>
    %167 = vector.extract_strided_slice %135 {offsets = [0, 0], sizes = [2, 32], strides = [1, 1]} : vector<16x32xf32> to vector<2x32xf32>
    %168 = arith.addf %167, %142 : vector<2x32xf32>
    %cst_38 = arith.constant dense<0.000000e+00> : vector<2x32xf32>
    %169 = tpu.matmul %157, %144, %cst_38 {dimension_numbers = #tpu.dot_dimension_numbers<[1], [0], [0], [1], [0, 0, 1, 1], [], []>} : vector<2x32xf32>, vector<32x32xf32>, vector<2x32xf32> -> vector<2x32xf32>
    %170 = arith.addf %168, %169 : vector<2x32xf32>
    %171 = vector.extract_strided_slice %147 {offsets = [0, 0], sizes = [2, 32], strides = [1, 1]} : vector<16x32xf32> to vector<2x32xf32>
    %172 = arith.addf %171, %154 : vector<2x32xf32>
    %cst_39 = arith.constant dense<0.000000e+00> : vector<2x32xf32>
    %173 = tpu.matmul %157, %156, %cst_39 {dimension_numbers = #tpu.dot_dimension_numbers<[1], [0], [0], [1], [0, 0, 1, 1], [], []>} : vector<2x32xf32>, vector<32x32xf32>, vector<2x32xf32> -> vector<2x32xf32>
    %174 = arith.addf %172, %173 : vector<2x32xf32>
    %175 = arith.negf %162 : vector<2x32xf32>
    %176 = math.exp %175 : vector<2x32xf32>
    %cst_40 = arith.constant 1.000000e+00 : f32
    %177 = vector.broadcast %cst_40 : f32 to vector<2x32xf32>
    %178 = arith.addf %177, %176 : vector<2x32xf32>
    %179 = arith.divf %177, %178 : vector<2x32xf32>
    %180 = arith.negf %166 : vector<2x32xf32>
    %181 = math.exp %180 : vector<2x32xf32>
    %cst_41 = arith.constant 1.000000e+00 : f32
    %182 = vector.broadcast %cst_41 : f32 to vector<2x32xf32>
    %183 = arith.addf %182, %181 : vector<2x32xf32>
    %184 = arith.divf %182, %183 : vector<2x32xf32>
    %185 = math.tanh %170 : vector<2x32xf32>
    %186 = arith.negf %174 : vector<2x32xf32>
    %187 = math.exp %186 : vector<2x32xf32>
    %cst_42 = arith.constant 1.000000e+00 : f32
    %188 = vector.broadcast %cst_42 : f32 to vector<2x32xf32>
    %189 = arith.addf %188, %187 : vector<2x32xf32>
    %190 = arith.divf %188, %189 : vector<2x32xf32>
    %191 = arith.mulf %184, %158 : vector<2x32xf32>
    %192 = arith.mulf %179, %185 : vector<2x32xf32>
    %193 = arith.addf %191, %192 : vector<2x32xf32>
    %194 = math.tanh %193 : vector<2x32xf32>
    %195 = arith.mulf %190, %194 : vector<2x32xf32>
    %c0_43 = arith.constant 0 : index
    %c0_44 = arith.constant 0 : index
    %c0_45 = arith.constant 0 : index
    %196 = vector.load %arg14[%c0_43, %c0_44, %c0_45] : memref<2x8x32xf32, #tpu.memory_space<vmem>>, vector<2x1x32xf32>
    %197 = vector.shape_cast %196 : vector<2x1x32xf32> to vector<2x32xf32>
    %198 = vector.shape_cast %195 : vector<2x32xf32> to vector<2x1x32xf32>
    tpu.vector_store %arg14[%c0_43, %c0_44, %c0_45], %198 {strides = array<i32>} : memref<2x8x32xf32, #tpu.memory_space<vmem>>, vector<2x1x32xf32>,
    %199 = vector.extract_strided_slice %111 {offsets = [2, 0], sizes = [2, 32], strides = [1, 1]} : vector<16x32xf32> to vector<2x32xf32>
    %200 = arith.addf %199, %118 : vector<2x32xf32>
    %cst_46 = arith.constant dense<0.000000e+00> : vector<2x32xf32>
    %201 = tpu.matmul %195, %120, %cst_46 {dimension_numbers = #tpu.dot_dimension_numbers<[1], [0], [0], [1], [0, 0, 1, 1], [], []>} : vector<2x32xf32>, vector<32x32xf32>, vector<2x32xf32> -> vector<2x32xf32>
    %202 = arith.addf %200, %201 : vector<2x32xf32>
    %203 = vector.extract_strided_slice %123 {offsets = [2, 0], sizes = [2, 32], strides = [1, 1]} : vector<16x32xf32> to vector<2x32xf32>
    %204 = arith.addf %203, %130 : vector<2x32xf32>
    %cst_47 = arith.constant dense<0.000000e+00> : vector<2x32xf32>
    %205 = tpu.matmul %195, %132, %cst_47 {dimension_numbers = #tpu.dot_dimension_numbers<[1], [0], [0], [1], [0, 0, 1, 1], [], []>} : vector<2x32xf32>, vector<32x32xf32>, vector<2x32xf32> -> vector<2x32xf32>
    %206 = arith.addf %204, %205 : vector<2x32xf32>
    %207 = vector.extract_strided_slice %135 {offsets = [2, 0], sizes = [2, 32], strides = [1, 1]} : vector<16x32xf32> to vector<2x32xf32>
    %208 = arith.addf %207, %142 : vector<2x32xf32>
    %cst_48 = arith.constant dense<0.000000e+00> : vector<2x32xf32>
    %209 = tpu.matmul %195, %144, %cst_48 {dimension_numbers = #tpu.dot_dimension_numbers<[1], [0], [0], [1], [0, 0, 1, 1], [], []>} : vector<2x32xf32>, vector<32x32xf32>, vector<2x32xf32> -> vector<2x32xf32>
    %210 = arith.addf %208, %209 : vector<2x32xf32>
    %211 = vector.extract_strided_slice %147 {offsets = [2, 0], sizes = [2, 32], strides = [1, 1]} : vector<16x32xf32> to vector<2x32xf32>
    %212 = arith.addf %211, %154 : vector<2x32xf32>
    %cst_49 = arith.constant dense<0.000000e+00> : vector<2x32xf32>
    %213 = tpu.matmul %195, %156, %cst_49 {dimension_numbers = #tpu.dot_dimension_numbers<[1], [0], [0], [1], [0, 0, 1, 1], [], []>} : vector<2x32xf32>, vector<32x32xf32>, vector<2x32xf32> -> vector<2x32xf32>
    %214 = arith.addf %212, %213 : vector<2x32xf32>
    %215 = arith.negf %202 : vector<2x32xf32>
    %216 = math.exp %215 : vector<2x32xf32>
    %cst_50 = arith.constant 1.000000e+00 : f32
    %217 = vector.broadcast %cst_50 : f32 to vector<2x32xf32>
    %218 = arith.addf %217, %216 : vector<2x32xf32>
    %219 = arith.divf %217, %218 : vector<2x32xf32>
    %220 = arith.negf %206 : vector<2x32xf32>
    %221 = math.exp %220 : vector<2x32xf32>
    %cst_51 = arith.constant 1.000000e+00 : f32
    %222 = vector.broadcast %cst_51 : f32 to vector<2x32xf32>
    %223 = arith.addf %222, %221 : vector<2x32xf32>
    %224 = arith.divf %222, %223 : vector<2x32xf32>
    %225 = math.tanh %210 : vector<2x32xf32>
    %226 = arith.negf %214 : vector<2x32xf32>
    %227 = math.exp %226 : vector<2x32xf32>
    %cst_52 = arith.constant 1.000000e+00 : f32
    %228 = vector.broadcast %cst_52 : f32 to vector<2x32xf32>
    %229 = arith.addf %228, %227 : vector<2x32xf32>
    %230 = arith.divf %228, %229 : vector<2x32xf32>
    %231 = arith.mulf %224, %193 : vector<2x32xf32>
    %232 = arith.mulf %219, %225 : vector<2x32xf32>
    %233 = arith.addf %231, %232 : vector<2x32xf32>
    %234 = math.tanh %233 : vector<2x32xf32>
    %235 = arith.mulf %230, %234 : vector<2x32xf32>
    %c0_53 = arith.constant 0 : index
    %c1_54 = arith.constant 1 : index
    %c0_55 = arith.constant 0 : index
    %236 = vector.load %arg14[%c0_53, %c1_54, %c0_55] : memref<2x8x32xf32, #tpu.memory_space<vmem>>, vector<2x1x32xf32>
    %237 = vector.shape_cast %236 : vector<2x1x32xf32> to vector<2x32xf32>
    %238 = vector.shape_cast %235 : vector<2x32xf32> to vector<2x1x32xf32>
    tpu.vector_store %arg14[%c0_53, %c1_54, %c0_55], %238 {strides = array<i32>} : memref<2x8x32xf32, #tpu.memory_space<vmem>>, vector<2x1x32xf32>,
    %239 = vector.extract_strided_slice %111 {offsets = [4, 0], sizes = [2, 32], strides = [1, 1]} : vector<16x32xf32> to vector<2x32xf32>
    %240 = arith.addf %239, %118 : vector<2x32xf32>
    %cst_56 = arith.constant dense<0.000000e+00> : vector<2x32xf32>
    %241 = tpu.matmul %235, %120, %cst_56 {dimension_numbers = #tpu.dot_dimension_numbers<[1], [0], [0], [1], [0, 0, 1, 1], [], []>} : vector<2x32xf32>, vector<32x32xf32>, vector<2x32xf32> -> vector<2x32xf32>
    %242 = arith.addf %240, %241 : vector<2x32xf32>
    %243 = vector.extract_strided_slice %123 {offsets = [4, 0], sizes = [2, 32], strides = [1, 1]} : vector<16x32xf32> to vector<2x32xf32>
    %244 = arith.addf %243, %130 : vector<2x32xf32>
    %cst_57 = arith.constant dense<0.000000e+00> : vector<2x32xf32>
    %245 = tpu.matmul %235, %132, %cst_57 {dimension_numbers = #tpu.dot_dimension_numbers<[1], [0], [0], [1], [0, 0, 1, 1], [], []>} : vector<2x32xf32>, vector<32x32xf32>, vector<2x32xf32> -> vector<2x32xf32>
    %246 = arith.addf %244, %245 : vector<2x32xf32>
    %247 = vector.extract_strided_slice %135 {offsets = [4, 0], sizes = [2, 32], strides = [1, 1]} : vector<16x32xf32> to vector<2x32xf32>
    %248 = arith.addf %247, %142 : vector<2x32xf32>
    %cst_58 = arith.constant dense<0.000000e+00> : vector<2x32xf32>
    %249 = tpu.matmul %235, %144, %cst_58 {dimension_numbers = #tpu.dot_dimension_numbers<[1], [0], [0], [1], [0, 0, 1, 1], [], []>} : vector<2x32xf32>, vector<32x32xf32>, vector<2x32xf32> -> vector<2x32xf32>
    %250 = arith.addf %248, %249 : vector<2x32xf32>
    %251 = vector.extract_strided_slice %147 {offsets = [4, 0], sizes = [2, 32], strides = [1, 1]} : vector<16x32xf32> to vector<2x32xf32>
    %252 = arith.addf %251, %154 : vector<2x32xf32>
    %cst_59 = arith.constant dense<0.000000e+00> : vector<2x32xf32>
    %253 = tpu.matmul %235, %156, %cst_59 {dimension_numbers = #tpu.dot_dimension_numbers<[1], [0], [0], [1], [0, 0, 1, 1], [], []>} : vector<2x32xf32>, vector<32x32xf32>, vector<2x32xf32> -> vector<2x32xf32>
    %254 = arith.addf %252, %253 : vector<2x32xf32>
    %255 = arith.negf %242 : vector<2x32xf32>
    %256 = math.exp %255 : vector<2x32xf32>
    %cst_60 = arith.constant 1.000000e+00 : f32
    %257 = vector.broadcast %cst_60 : f32 to vector<2x32xf32>
    %258 = arith.addf %257, %256 : vector<2x32xf32>
    %259 = arith.divf %257, %258 : vector<2x32xf32>
    %260 = arith.negf %246 : vector<2x32xf32>
    %261 = math.exp %260 : vector<2x32xf32>
    %cst_61 = arith.constant 1.000000e+00 : f32
    %262 = vector.broadcast %cst_61 : f32 to vector<2x32xf32>
    %263 = arith.addf %262, %261 : vector<2x32xf32>
    %264 = arith.divf %262, %263 : vector<2x32xf32>
    %265 = math.tanh %250 : vector<2x32xf32>
    %266 = arith.negf %254 : vector<2x32xf32>
    %267 = math.exp %266 : vector<2x32xf32>
    %cst_62 = arith.constant 1.000000e+00 : f32
    %268 = vector.broadcast %cst_62 : f32 to vector<2x32xf32>
    %269 = arith.addf %268, %267 : vector<2x32xf32>
    %270 = arith.divf %268, %269 : vector<2x32xf32>
    %271 = arith.mulf %264, %233 : vector<2x32xf32>
    %272 = arith.mulf %259, %265 : vector<2x32xf32>
    %273 = arith.addf %271, %272 : vector<2x32xf32>
    %274 = math.tanh %273 : vector<2x32xf32>
    %275 = arith.mulf %270, %274 : vector<2x32xf32>
    %c0_63 = arith.constant 0 : index
    %c2_64 = arith.constant 2 : index
    %c0_65 = arith.constant 0 : index
    %276 = vector.load %arg14[%c0_63, %c2_64, %c0_65] : memref<2x8x32xf32, #tpu.memory_space<vmem>>, vector<2x1x32xf32>
    %277 = vector.shape_cast %276 : vector<2x1x32xf32> to vector<2x32xf32>
    %278 = vector.shape_cast %275 : vector<2x32xf32> to vector<2x1x32xf32>
    tpu.vector_store %arg14[%c0_63, %c2_64, %c0_65], %278 {strides = array<i32>} : memref<2x8x32xf32, #tpu.memory_space<vmem>>, vector<2x1x32xf32>,
    %279 = vector.extract_strided_slice %111 {offsets = [6, 0], sizes = [2, 32], strides = [1, 1]} : vector<16x32xf32> to vector<2x32xf32>
    %280 = arith.addf %279, %118 : vector<2x32xf32>
    %cst_66 = arith.constant dense<0.000000e+00> : vector<2x32xf32>
    %281 = tpu.matmul %275, %120, %cst_66 {dimension_numbers = #tpu.dot_dimension_numbers<[1], [0], [0], [1], [0, 0, 1, 1], [], []>} : vector<2x32xf32>, vector<32x32xf32>, vector<2x32xf32> -> vector<2x32xf32>
    %282 = arith.addf %280, %281 : vector<2x32xf32>
    %283 = vector.extract_strided_slice %123 {offsets = [6, 0], sizes = [2, 32], strides = [1, 1]} : vector<16x32xf32> to vector<2x32xf32>
    %284 = arith.addf %283, %130 : vector<2x32xf32>
    %cst_67 = arith.constant dense<0.000000e+00> : vector<2x32xf32>
    %285 = tpu.matmul %275, %132, %cst_67 {dimension_numbers = #tpu.dot_dimension_numbers<[1], [0], [0], [1], [0, 0, 1, 1], [], []>} : vector<2x32xf32>, vector<32x32xf32>, vector<2x32xf32> -> vector<2x32xf32>
    %286 = arith.addf %284, %285 : vector<2x32xf32>
    %287 = vector.extract_strided_slice %135 {offsets = [6, 0], sizes = [2, 32], strides = [1, 1]} : vector<16x32xf32> to vector<2x32xf32>
    %288 = arith.addf %287, %142 : vector<2x32xf32>
    %cst_68 = arith.constant dense<0.000000e+00> : vector<2x32xf32>
    %289 = tpu.matmul %275, %144, %cst_68 {dimension_numbers = #tpu.dot_dimension_numbers<[1], [0], [0], [1], [0, 0, 1, 1], [], []>} : vector<2x32xf32>, vector<32x32xf32>, vector<2x32xf32> -> vector<2x32xf32>
    %290 = arith.addf %288, %289 : vector<2x32xf32>
    %291 = vector.extract_strided_slice %147 {offsets = [6, 0], sizes = [2, 32], strides = [1, 1]} : vector<16x32xf32> to vector<2x32xf32>
    %292 = arith.addf %291, %154 : vector<2x32xf32>
    %cst_69 = arith.constant dense<0.000000e+00> : vector<2x32xf32>
    %293 = tpu.matmul %275, %156, %cst_69 {dimension_numbers = #tpu.dot_dimension_numbers<[1], [0], [0], [1], [0, 0, 1, 1], [], []>} : vector<2x32xf32>, vector<32x32xf32>, vector<2x32xf32> -> vector<2x32xf32>
    %294 = arith.addf %292, %293 : vector<2x32xf32>
    %295 = arith.negf %282 : vector<2x32xf32>
    %296 = math.exp %295 : vector<2x32xf32>
    %cst_70 = arith.constant 1.000000e+00 : f32
    %297 = vector.broadcast %cst_70 : f32 to vector<2x32xf32>
    %298 = arith.addf %297, %296 : vector<2x32xf32>
    %299 = arith.divf %297, %298 : vector<2x32xf32>
    %300 = arith.negf %286 : vector<2x32xf32>
    %301 = math.exp %300 : vector<2x32xf32>
    %cst_71 = arith.constant 1.000000e+00 : f32
    %302 = vector.broadcast %cst_71 : f32 to vector<2x32xf32>
    %303 = arith.addf %302, %301 : vector<2x32xf32>
    %304 = arith.divf %302, %303 : vector<2x32xf32>
    %305 = math.tanh %290 : vector<2x32xf32>
    %306 = arith.negf %294 : vector<2x32xf32>
    %307 = math.exp %306 : vector<2x32xf32>
    %cst_72 = arith.constant 1.000000e+00 : f32
    %308 = vector.broadcast %cst_72 : f32 to vector<2x32xf32>
    %309 = arith.addf %308, %307 : vector<2x32xf32>
    %310 = arith.divf %308, %309 : vector<2x32xf32>
    %311 = arith.mulf %304, %273 : vector<2x32xf32>
    %312 = arith.mulf %299, %305 : vector<2x32xf32>
    %313 = arith.addf %311, %312 : vector<2x32xf32>
    %314 = math.tanh %313 : vector<2x32xf32>
    %315 = arith.mulf %310, %314 : vector<2x32xf32>
    %c0_73 = arith.constant 0 : index
    %c3_74 = arith.constant 3 : index
    %c0_75 = arith.constant 0 : index
    %316 = vector.load %arg14[%c0_73, %c3_74, %c0_75] : memref<2x8x32xf32, #tpu.memory_space<vmem>>, vector<2x1x32xf32>
    %317 = vector.shape_cast %316 : vector<2x1x32xf32> to vector<2x32xf32>
    %318 = vector.shape_cast %315 : vector<2x32xf32> to vector<2x1x32xf32>
    tpu.vector_store %arg14[%c0_73, %c3_74, %c0_75], %318 {strides = array<i32>} : memref<2x8x32xf32, #tpu.memory_space<vmem>>, vector<2x1x32xf32>,
    %319 = vector.extract_strided_slice %111 {offsets = [8, 0], sizes = [2, 32], strides = [1, 1]} : vector<16x32xf32> to vector<2x32xf32>
    %320 = arith.addf %319, %118 : vector<2x32xf32>
    %cst_76 = arith.constant dense<0.000000e+00> : vector<2x32xf32>
    %321 = tpu.matmul %315, %120, %cst_76 {dimension_numbers = #tpu.dot_dimension_numbers<[1], [0], [0], [1], [0, 0, 1, 1], [], []>} : vector<2x32xf32>, vector<32x32xf32>, vector<2x32xf32> -> vector<2x32xf32>
    %322 = arith.addf %320, %321 : vector<2x32xf32>
    %323 = vector.extract_strided_slice %123 {offsets = [8, 0], sizes = [2, 32], strides = [1, 1]} : vector<16x32xf32> to vector<2x32xf32>
    %324 = arith.addf %323, %130 : vector<2x32xf32>
    %cst_77 = arith.constant dense<0.000000e+00> : vector<2x32xf32>
    %325 = tpu.matmul %315, %132, %cst_77 {dimension_numbers = #tpu.dot_dimension_numbers<[1], [0], [0], [1], [0, 0, 1, 1], [], []>} : vector<2x32xf32>, vector<32x32xf32>, vector<2x32xf32> -> vector<2x32xf32>
    %326 = arith.addf %324, %325 : vector<2x32xf32>
    %327 = vector.extract_strided_slice %135 {offsets = [8, 0], sizes = [2, 32], strides = [1, 1]} : vector<16x32xf32> to vector<2x32xf32>
    %328 = arith.addf %327, %142 : vector<2x32xf32>
    %cst_78 = arith.constant dense<0.000000e+00> : vector<2x32xf32>
    %329 = tpu.matmul %315, %144, %cst_78 {dimension_numbers = #tpu.dot_dimension_numbers<[1], [0], [0], [1], [0, 0, 1, 1], [], []>} : vector<2x32xf32>, vector<32x32xf32>, vector<2x32xf32> -> vector<2x32xf32>
    %330 = arith.addf %328, %329 : vector<2x32xf32>
    %331 = vector.extract_strided_slice %147 {offsets = [8, 0], sizes = [2, 32], strides = [1, 1]} : vector<16x32xf32> to vector<2x32xf32>
    %332 = arith.addf %331, %154 : vector<2x32xf32>
    %cst_79 = arith.constant dense<0.000000e+00> : vector<2x32xf32>
    %333 = tpu.matmul %315, %156, %cst_79 {dimension_numbers = #tpu.dot_dimension_numbers<[1], [0], [0], [1], [0, 0, 1, 1], [], []>} : vector<2x32xf32>, vector<32x32xf32>, vector<2x32xf32> -> vector<2x32xf32>
    %334 = arith.addf %332, %333 : vector<2x32xf32>
    %335 = arith.negf %322 : vector<2x32xf32>
    %336 = math.exp %335 : vector<2x32xf32>
    %cst_80 = arith.constant 1.000000e+00 : f32
    %337 = vector.broadcast %cst_80 : f32 to vector<2x32xf32>
    %338 = arith.addf %337, %336 : vector<2x32xf32>
    %339 = arith.divf %337, %338 : vector<2x32xf32>
    %340 = arith.negf %326 : vector<2x32xf32>
    %341 = math.exp %340 : vector<2x32xf32>
    %cst_81 = arith.constant 1.000000e+00 : f32
    %342 = vector.broadcast %cst_81 : f32 to vector<2x32xf32>
    %343 = arith.addf %342, %341 : vector<2x32xf32>
    %344 = arith.divf %342, %343 : vector<2x32xf32>
    %345 = math.tanh %330 : vector<2x32xf32>
    %346 = arith.negf %334 : vector<2x32xf32>
    %347 = math.exp %346 : vector<2x32xf32>
    %cst_82 = arith.constant 1.000000e+00 : f32
    %348 = vector.broadcast %cst_82 : f32 to vector<2x32xf32>
    %349 = arith.addf %348, %347 : vector<2x32xf32>
    %350 = arith.divf %348, %349 : vector<2x32xf32>
    %351 = arith.mulf %344, %313 : vector<2x32xf32>
    %352 = arith.mulf %339, %345 : vector<2x32xf32>
    %353 = arith.addf %351, %352 : vector<2x32xf32>
    %354 = math.tanh %353 : vector<2x32xf32>
    %355 = arith.mulf %350, %354 : vector<2x32xf32>
    %c0_83 = arith.constant 0 : index
    %c4_84 = arith.constant 4 : index
    %c0_85 = arith.constant 0 : index
    %356 = vector.load %arg14[%c0_83, %c4_84, %c0_85] : memref<2x8x32xf32, #tpu.memory_space<vmem>>, vector<2x1x32xf32>
    %357 = vector.shape_cast %356 : vector<2x1x32xf32> to vector<2x32xf32>
    %358 = vector.shape_cast %355 : vector<2x32xf32> to vector<2x1x32xf32>
    tpu.vector_store %arg14[%c0_83, %c4_84, %c0_85], %358 {strides = array<i32>} : memref<2x8x32xf32, #tpu.memory_space<vmem>>, vector<2x1x32xf32>,
    %359 = vector.extract_strided_slice %111 {offsets = [10, 0], sizes = [2, 32], strides = [1, 1]} : vector<16x32xf32> to vector<2x32xf32>
    %360 = arith.addf %359, %118 : vector<2x32xf32>
    %cst_86 = arith.constant dense<0.000000e+00> : vector<2x32xf32>
    %361 = tpu.matmul %355, %120, %cst_86 {dimension_numbers = #tpu.dot_dimension_numbers<[1], [0], [0], [1], [0, 0, 1, 1], [], []>} : vector<2x32xf32>, vector<32x32xf32>, vector<2x32xf32> -> vector<2x32xf32>
    %362 = arith.addf %360, %361 : vector<2x32xf32>
    %363 = vector.extract_strided_slice %123 {offsets = [10, 0], sizes = [2, 32], strides = [1, 1]} : vector<16x32xf32> to vector<2x32xf32>
    %364 = arith.addf %363, %130 : vector<2x32xf32>
    %cst_87 = arith.constant dense<0.000000e+00> : vector<2x32xf32>
    %365 = tpu.matmul %355, %132, %cst_87 {dimension_numbers = #tpu.dot_dimension_numbers<[1], [0], [0], [1], [0, 0, 1, 1], [], []>} : vector<2x32xf32>, vector<32x32xf32>, vector<2x32xf32> -> vector<2x32xf32>
    %366 = arith.addf %364, %365 : vector<2x32xf32>
    %367 = vector.extract_strided_slice %135 {offsets = [10, 0], sizes = [2, 32], strides = [1, 1]} : vector<16x32xf32> to vector<2x32xf32>
    %368 = arith.addf %367, %142 : vector<2x32xf32>
    %cst_88 = arith.constant dense<0.000000e+00> : vector<2x32xf32>
    %369 = tpu.matmul %355, %144, %cst_88 {dimension_numbers = #tpu.dot_dimension_numbers<[1], [0], [0], [1], [0, 0, 1, 1], [], []>} : vector<2x32xf32>, vector<32x32xf32>, vector<2x32xf32> -> vector<2x32xf32>
    %370 = arith.addf %368, %369 : vector<2x32xf32>
    %371 = vector.extract_strided_slice %147 {offsets = [10, 0], sizes = [2, 32], strides = [1, 1]} : vector<16x32xf32> to vector<2x32xf32>
    %372 = arith.addf %371, %154 : vector<2x32xf32>
    %cst_89 = arith.constant dense<0.000000e+00> : vector<2x32xf32>
    %373 = tpu.matmul %355, %156, %cst_89 {dimension_numbers = #tpu.dot_dimension_numbers<[1], [0], [0], [1], [0, 0, 1, 1], [], []>} : vector<2x32xf32>, vector<32x32xf32>, vector<2x32xf32> -> vector<2x32xf32>
    %374 = arith.addf %372, %373 : vector<2x32xf32>
    %375 = arith.negf %362 : vector<2x32xf32>
    %376 = math.exp %375 : vector<2x32xf32>
    %cst_90 = arith.constant 1.000000e+00 : f32
    %377 = vector.broadcast %cst_90 : f32 to vector<2x32xf32>
    %378 = arith.addf %377, %376 : vector<2x32xf32>
    %379 = arith.divf %377, %378 : vector<2x32xf32>
    %380 = arith.negf %366 : vector<2x32xf32>
    %381 = math.exp %380 : vector<2x32xf32>
    %cst_91 = arith.constant 1.000000e+00 : f32
    %382 = vector.broadcast %cst_91 : f32 to vector<2x32xf32>
    %383 = arith.addf %382, %381 : vector<2x32xf32>
    %384 = arith.divf %382, %383 : vector<2x32xf32>
    %385 = math.tanh %370 : vector<2x32xf32>
    %386 = arith.negf %374 : vector<2x32xf32>
    %387 = math.exp %386 : vector<2x32xf32>
    %cst_92 = arith.constant 1.000000e+00 : f32
    %388 = vector.broadcast %cst_92 : f32 to vector<2x32xf32>
    %389 = arith.addf %388, %387 : vector<2x32xf32>
    %390 = arith.divf %388, %389 : vector<2x32xf32>
    %391 = arith.mulf %384, %353 : vector<2x32xf32>
    %392 = arith.mulf %379, %385 : vector<2x32xf32>
    %393 = arith.addf %391, %392 : vector<2x32xf32>
    %394 = math.tanh %393 : vector<2x32xf32>
    %395 = arith.mulf %390, %394 : vector<2x32xf32>
    %c0_93 = arith.constant 0 : index
    %c5_94 = arith.constant 5 : index
    %c0_95 = arith.constant 0 : index
    %396 = vector.load %arg14[%c0_93, %c5_94, %c0_95] : memref<2x8x32xf32, #tpu.memory_space<vmem>>, vector<2x1x32xf32>
    %397 = vector.shape_cast %396 : vector<2x1x32xf32> to vector<2x32xf32>
    %398 = vector.shape_cast %395 : vector<2x32xf32> to vector<2x1x32xf32>
    tpu.vector_store %arg14[%c0_93, %c5_94, %c0_95], %398 {strides = array<i32>} : memref<2x8x32xf32, #tpu.memory_space<vmem>>, vector<2x1x32xf32>,
    %399 = vector.extract_strided_slice %111 {offsets = [12, 0], sizes = [2, 32], strides = [1, 1]} : vector<16x32xf32> to vector<2x32xf32>
    %400 = arith.addf %399, %118 : vector<2x32xf32>
    %cst_96 = arith.constant dense<0.000000e+00> : vector<2x32xf32>
    %401 = tpu.matmul %395, %120, %cst_96 {dimension_numbers = #tpu.dot_dimension_numbers<[1], [0], [0], [1], [0, 0, 1, 1], [], []>} : vector<2x32xf32>, vector<32x32xf32>, vector<2x32xf32> -> vector<2x32xf32>
    %402 = arith.addf %400, %401 : vector<2x32xf32>
    %403 = vector.extract_strided_slice %123 {offsets = [12, 0], sizes = [2, 32], strides = [1, 1]} : vector<16x32xf32> to vector<2x32xf32>
    %404 = arith.addf %403, %130 : vector<2x32xf32>
    %cst_97 = arith.constant dense<0.000000e+00> : vector<2x32xf32>
    %405 = tpu.matmul %395, %132, %cst_97 {dimension_numbers = #tpu.dot_dimension_numbers<[1], [0], [0], [1], [0, 0, 1, 1], [], []>} : vector<2x32xf32>, vector<32x32xf32>, vector<2x32xf32> -> vector<2x32xf32>
    %406 = arith.addf %404, %405 : vector<2x32xf32>
    %407 = vector.extract_strided_slice %135 {offsets = [12, 0], sizes = [2, 32], strides = [1, 1]} : vector<16x32xf32> to vector<2x32xf32>
    %408 = arith.addf %407, %142 : vector<2x32xf32>
    %cst_98 = arith.constant dense<0.000000e+00> : vector<2x32xf32>
    %409 = tpu.matmul %395, %144, %cst_98 {dimension_numbers = #tpu.dot_dimension_numbers<[1], [0], [0], [1], [0, 0, 1, 1], [], []>} : vector<2x32xf32>, vector<32x32xf32>, vector<2x32xf32> -> vector<2x32xf32>
    %410 = arith.addf %408, %409 : vector<2x32xf32>
    %411 = vector.extract_strided_slice %147 {offsets = [12, 0], sizes = [2, 32], strides = [1, 1]} : vector<16x32xf32> to vector<2x32xf32>
    %412 = arith.addf %411, %154 : vector<2x32xf32>
    %cst_99 = arith.constant dense<0.000000e+00> : vector<2x32xf32>
    %413 = tpu.matmul %395, %156, %cst_99 {dimension_numbers = #tpu.dot_dimension_numbers<[1], [0], [0], [1], [0, 0, 1, 1], [], []>} : vector<2x32xf32>, vector<32x32xf32>, vector<2x32xf32> -> vector<2x32xf32>
    %414 = arith.addf %412, %413 : vector<2x32xf32>
    %415 = arith.negf %402 : vector<2x32xf32>
    %416 = math.exp %415 : vector<2x32xf32>
    %cst_100 = arith.constant 1.000000e+00 : f32
    %417 = vector.broadcast %cst_100 : f32 to vector<2x32xf32>
    %418 = arith.addf %417, %416 : vector<2x32xf32>
    %419 = arith.divf %417, %418 : vector<2x32xf32>
    %420 = arith.negf %406 : vector<2x32xf32>
    %421 = math.exp %420 : vector<2x32xf32>
    %cst_101 = arith.constant 1.000000e+00 : f32
    %422 = vector.broadcast %cst_101 : f32 to vector<2x32xf32>
    %423 = arith.addf %422, %421 : vector<2x32xf32>
    %424 = arith.divf %422, %423 : vector<2x32xf32>
    %425 = math.tanh %410 : vector<2x32xf32>
    %426 = arith.negf %414 : vector<2x32xf32>
    %427 = math.exp %426 : vector<2x32xf32>
    %cst_102 = arith.constant 1.000000e+00 : f32
    %428 = vector.broadcast %cst_102 : f32 to vector<2x32xf32>
    %429 = arith.addf %428, %427 : vector<2x32xf32>
    %430 = arith.divf %428, %429 : vector<2x32xf32>
    %431 = arith.mulf %424, %393 : vector<2x32xf32>
    %432 = arith.mulf %419, %425 : vector<2x32xf32>
    %433 = arith.addf %431, %432 : vector<2x32xf32>
    %434 = math.tanh %433 : vector<2x32xf32>
    %435 = arith.mulf %430, %434 : vector<2x32xf32>
    %c0_103 = arith.constant 0 : index
    %c6_104 = arith.constant 6 : index
    %c0_105 = arith.constant 0 : index
    %436 = vector.load %arg14[%c0_103, %c6_104, %c0_105] : memref<2x8x32xf32, #tpu.memory_space<vmem>>, vector<2x1x32xf32>
    %437 = vector.shape_cast %436 : vector<2x1x32xf32> to vector<2x32xf32>
    %438 = vector.shape_cast %435 : vector<2x32xf32> to vector<2x1x32xf32>
    tpu.vector_store %arg14[%c0_103, %c6_104, %c0_105], %438 {strides = array<i32>} : memref<2x8x32xf32, #tpu.memory_space<vmem>>, vector<2x1x32xf32>,
    %439 = vector.extract_strided_slice %111 {offsets = [14, 0], sizes = [2, 32], strides = [1, 1]} : vector<16x32xf32> to vector<2x32xf32>
    %440 = arith.addf %439, %118 : vector<2x32xf32>
    %cst_106 = arith.constant dense<0.000000e+00> : vector<2x32xf32>
    %441 = tpu.matmul %435, %120, %cst_106 {dimension_numbers = #tpu.dot_dimension_numbers<[1], [0], [0], [1], [0, 0, 1, 1], [], []>} : vector<2x32xf32>, vector<32x32xf32>, vector<2x32xf32> -> vector<2x32xf32>
    %442 = arith.addf %440, %441 : vector<2x32xf32>
    %443 = vector.extract_strided_slice %123 {offsets = [14, 0], sizes = [2, 32], strides = [1, 1]} : vector<16x32xf32> to vector<2x32xf32>
    %444 = arith.addf %443, %130 : vector<2x32xf32>
    %cst_107 = arith.constant dense<0.000000e+00> : vector<2x32xf32>
    %445 = tpu.matmul %435, %132, %cst_107 {dimension_numbers = #tpu.dot_dimension_numbers<[1], [0], [0], [1], [0, 0, 1, 1], [], []>} : vector<2x32xf32>, vector<32x32xf32>, vector<2x32xf32> -> vector<2x32xf32>
    %446 = arith.addf %444, %445 : vector<2x32xf32>
    %447 = vector.extract_strided_slice %135 {offsets = [14, 0], sizes = [2, 32], strides = [1, 1]} : vector<16x32xf32> to vector<2x32xf32>
    %448 = arith.addf %447, %142 : vector<2x32xf32>
    %cst_108 = arith.constant dense<0.000000e+00> : vector<2x32xf32>
    %449 = tpu.matmul %435, %144, %cst_108 {dimension_numbers = #tpu.dot_dimension_numbers<[1], [0], [0], [1], [0, 0, 1, 1], [], []>} : vector<2x32xf32>, vector<32x32xf32>, vector<2x32xf32> -> vector<2x32xf32>
    %450 = arith.addf %448, %449 : vector<2x32xf32>
    %451 = vector.extract_strided_slice %147 {offsets = [14, 0], sizes = [2, 32], strides = [1, 1]} : vector<16x32xf32> to vector<2x32xf32>
    %452 = arith.addf %451, %154 : vector<2x32xf32>
    %cst_109 = arith.constant dense<0.000000e+00> : vector<2x32xf32>
    %453 = tpu.matmul %435, %156, %cst_109 {dimension_numbers = #tpu.dot_dimension_numbers<[1], [0], [0], [1], [0, 0, 1, 1], [], []>} : vector<2x32xf32>, vector<32x32xf32>, vector<2x32xf32> -> vector<2x32xf32>
    %454 = arith.addf %452, %453 : vector<2x32xf32>
    %455 = arith.negf %442 : vector<2x32xf32>
    %456 = math.exp %455 : vector<2x32xf32>
    %cst_110 = arith.constant 1.000000e+00 : f32
    %457 = vector.broadcast %cst_110 : f32 to vector<2x32xf32>
    %458 = arith.addf %457, %456 : vector<2x32xf32>
    %459 = arith.divf %457, %458 : vector<2x32xf32>
    %460 = arith.negf %446 : vector<2x32xf32>
    %461 = math.exp %460 : vector<2x32xf32>
    %cst_111 = arith.constant 1.000000e+00 : f32
    %462 = vector.broadcast %cst_111 : f32 to vector<2x32xf32>
    %463 = arith.addf %462, %461 : vector<2x32xf32>
    %464 = arith.divf %462, %463 : vector<2x32xf32>
    %465 = math.tanh %450 : vector<2x32xf32>
    %466 = arith.negf %454 : vector<2x32xf32>
    %467 = math.exp %466 : vector<2x32xf32>
    %cst_112 = arith.constant 1.000000e+00 : f32
    %468 = vector.broadcast %cst_112 : f32 to vector<2x32xf32>
    %469 = arith.addf %468, %467 : vector<2x32xf32>
    %470 = arith.divf %468, %469 : vector<2x32xf32>
    %471 = arith.mulf %464, %433 : vector<2x32xf32>
    %472 = arith.mulf %459, %465 : vector<2x32xf32>
    %473 = arith.addf %471, %472 : vector<2x32xf32>
    %474 = math.tanh %473 : vector<2x32xf32>
    %475 = arith.mulf %470, %474 : vector<2x32xf32>
    %c0_113 = arith.constant 0 : index
    %c7_114 = arith.constant 7 : index
    %c0_115 = arith.constant 0 : index
    %476 = vector.load %arg14[%c0_113, %c7_114, %c0_115] : memref<2x8x32xf32, #tpu.memory_space<vmem>>, vector<2x1x32xf32>
    %477 = vector.shape_cast %476 : vector<2x1x32xf32> to vector<2x32xf32>
    %478 = vector.shape_cast %475 : vector<2x32xf32> to vector<2x1x32xf32>
    tpu.vector_store %arg14[%c0_113, %c7_114, %c0_115], %478 {strides = array<i32>} : memref<2x8x32xf32, #tpu.memory_space<vmem>>, vector<2x1x32xf32>,
    %c0_116 = arith.constant 0 : index
    %c0_117 = arith.constant 0 : index
    %479 = vector.load %arg12[%c0_116, %c0_117] : memref<2x32xf32, #tpu.memory_space<vmem>>, vector<2x32xf32>
    tpu.vector_store %arg12[%c0_116, %c0_117], %475 {strides = array<i32>} : memref<2x32xf32, #tpu.memory_space<vmem>>, vector<2x32xf32>,
    %c0_118 = arith.constant 0 : index
    %c0_119 = arith.constant 0 : index
    %480 = vector.load %arg13[%c0_118, %c0_119] : memref<2x32xf32, #tpu.memory_space<vmem>>, vector<2x32xf32>
    tpu.vector_store %arg13[%c0_118, %c0_119], %473 {strides = array<i32>} : memref<2x32xf32, #tpu.memory_space<vmem>>, vector<2x32xf32>,
    %c0_120 = arith.constant 0 : index
    %c0_121 = arith.constant 0 : index
    %c0_122 = arith.constant 0 : index
    %481 = vector.load %arg14[%c0_120, %c0_121, %c0_122] : memref<2x8x32xf32, #tpu.memory_space<vmem>>, vector<2x8x32xf32>
    %482 = vector.shape_cast %481 : vector<2x8x32xf32> to vector<16x32xf32>
    %c0_123 = arith.constant 0 : index
    %c0_124 = arith.constant 0 : index
    %483 = vector.load %arg9[%c0_123, %c0_124] : memref<32x128xf32, #tpu.memory_space<vmem>>, vector<32x128xf32>
    %cst_125 = arith.constant dense<0.000000e+00> : vector<16x128xf32>
    %484 = tpu.matmul %482, %483, %cst_125 {dimension_numbers = #tpu.dot_dimension_numbers<[1], [0], [0], [1], [0, 0, 1, 1], [], []>} : vector<16x32xf32>, vector<32x128xf32>, vector<16x128xf32> -> vector<16x128xf32>
    %c0_126 = arith.constant 0 : index
    %c0_127 = arith.constant 0 : index
    %485 = vector.load %arg10[%c0_126, %c0_127] : memref<1x128xf32, #tpu.memory_space<vmem>>, vector<1x128xf32>
    %486 = vector.broadcast %485 : vector<1x128xf32> to vector<16x128xf32>
    %487 = arith.addf %484, %486 : vector<16x128xf32>
    %c0_128 = arith.constant 0 : index
    %c0_129 = arith.constant 0 : index
    %488 = vector.load %arg11[%c0_128, %c0_129] : memref<16x128xf32, #tpu.memory_space<vmem>>, vector<16x128xf32>
    tpu.vector_store %arg11[%c0_128, %c0_129], %487 {strides = array<i32>} : memref<16x128xf32, #tpu.memory_space<vmem>>, vector<16x128xf32>,
    return
  }
  func.func @transform_0(%arg0: i32) -> (i32, i32, i32, i32) {
    %c0_i32 = arith.constant 0 : i32
    %c0_i32_0 = arith.constant 0 : i32
    %c0_i32_1 = arith.constant 0 : i32
    %c0_i32_2 = arith.constant 0 : i32
    %c0_i32_3 = arith.constant 0 : i32
    return %c0_i32, %c0_i32_0, %c0_i32_1, %c0_i32_2 : i32, i32, i32, i32
  }
  func.func @transform_1(%arg0: i32) -> (i32, i32) {
    %c0_i32 = arith.constant 0 : i32
    %c0_i32_0 = arith.constant 0 : i32
    %c0_i32_1 = arith.constant 0 : i32
    return %c0_i32, %c0_i32_0 : i32, i32
  }
  func.func @transform_2(%arg0: i32) -> i32 {
    %c0_i32 = arith.constant 0 : i32
    %c0_i32_0 = arith.constant 0 : i32
    return %c0_i32 : i32
  }
  func.func @transform_3(%arg0: i32) -> (i32, i32) {
    %c0_i32 = arith.constant 0 : i32
    %c0_i32_0 = arith.constant 0 : i32
    %c0_i32_1 = arith.constant 0 : i32
    return %c0_i32, %c0_i32_0 : i32, i32
  }
  func.func @transform_4(%arg0: i32) -> (i32, i32) {
    %c0_i32 = arith.constant 0 : i32
    %c0_i32_0 = arith.constant 0 : i32
    %c0_i32_1 = arith.constant 0 : i32
    return %c0_i32, %c0_i32_0 : i32, i32
  }
  func.func @transform_5(%arg0: i32) -> (i32, i32, i32) {
    %c0_i32 = arith.constant 0 : i32
    %c0_i32_0 = arith.constant 0 : i32
    %c0_i32_1 = arith.constant 0 : i32
    %c0_i32_2 = arith.constant 0 : i32
    return %c0_i32, %c0_i32_0, %c0_i32_1 : i32, i32, i32
  }
  func.func @transform_6(%arg0: i32) -> (i32, i32, i32) {
    %c0_i32 = arith.constant 0 : i32
    %c0_i32_0 = arith.constant 0 : i32
    %c0_i32_1 = arith.constant 0 : i32
    %c0_i32_2 = arith.constant 0 : i32
    return %c0_i32, %c0_i32_0, %c0_i32_1 : i32, i32, i32
  }
  func.func @transform_7(%arg0: i32) -> (i32, i32, i32) {
    %c0_i32 = arith.constant 0 : i32
    %c0_i32_0 = arith.constant 0 : i32
    %c0_i32_1 = arith.constant 0 : i32
    %c0_i32_2 = arith.constant 0 : i32
    return %c0_i32, %c0_i32_0, %c0_i32_1 : i32, i32, i32
  }
  func.func @transform_8(%arg0: i32) -> (i32, i32) {
    %c0_i32 = arith.constant 0 : i32
    %c0_i32_0 = arith.constant 0 : i32
    %c0_i32_1 = arith.constant 0 : i32
    return %c0_i32, %c0_i32_0 : i32, i32
  }
  func.func @transform_9(%arg0: i32) -> (i32, i32) {
    %c0_i32 = arith.constant 0 : i32
    %c0_i32_0 = arith.constant 0 : i32
    %c0_i32_1 = arith.constant 0 : i32
    return %c0_i32, %c0_i32_0 : i32, i32
  }
  func.func @transform_10(%arg0: i32) -> (i32, i32) {
    %c0_i32 = arith.constant 0 : i32
    %c0_i32_0 = arith.constant 0 : i32
    %c0_i32_1 = arith.constant 0 : i32
    return %c0_i32, %c0_i32_0 : i32, i32
  }
  func.func @transform_11(%arg0: i32) -> (i32, i32) {
    %c0_i32 = arith.constant 0 : i32
    %c0_i32_0 = arith.constant 0 : i32
    %c0_i32_1 = arith.constant 0 : i32
    return %c0_i32, %c0_i32_0 : i32, i32
  }
  func.func @transform_12(%arg0: i32) -> (i32, i32) {
    %c0_i32 = arith.constant 0 : i32
    %c0_i32_0 = arith.constant 0 : i32
    %c0_i32_1 = arith.constant 0 : i32
    return %c0_i32, %c0_i32_0 : i32, i32
  }
}

</mosaic_0001>

<llo_original>
// kernel: tpu_custom_call.1
$region0: #{tpu_custom_call.1}
  #allocation0 [shape = 'u32[]', space=smem, size = 0x4, offset = 0x4, fixed_abs, tag = 'smem constant byte address 0x4 - core index']
  #allocation1 [shape = 'u32[144,128]{1,0:T(1,128)}', space=vmem, size = 0x12000, scoped, tag = 'internal scratch']
  #allocation2 [shape = 'f32[2,8,32]{2,1,0:T(8,128)}', space=vmem, size = 0x2000, scoped, tag = 'scratch operand']
  %s0 = inlined_call_operand.vmem [shape: f32[2,3,7,32], index: 0, kind: input, shape index: {}]
  %s1 = inlined_call_operand.vmem [shape: f32[16,32], index: 1, kind: input, shape index: {}]
  %s2 = inlined_call_operand.vmem [shape: f32[18], index: 2, kind: input, shape index: {}]
  %s3 = inlined_call_operand.vmem [shape: f32[2,32], index: 3, kind: input, shape index: {}]
  %s4 = inlined_call_operand.vmem [shape: f32[2,32], index: 4, kind: input, shape index: {}]
  %s5 = inlined_call_operand.vmem [shape: f32[4,64,32], index: 5, kind: input, shape index: {}]
  %s6 = inlined_call_operand.vmem [shape: f32[4,32,32], index: 6, kind: input, shape index: {}]
  %s7 = inlined_call_operand.vmem [shape: f32[4,1,32], index: 7, kind: input, shape index: {}]
  %s8 = inlined_call_operand.vmem [shape: f32[32,128], index: 8, kind: input, shape index: {}]
  %s9 = inlined_call_operand.vmem [shape: f32[1,128], index: 9, kind: input, shape index: {}]
  %s10 = inlined_call_operand.hbm [shape: f32[16,128], index: 10, kind: output, shape index: {0}]
  %s11 = inlined_call_operand.hbm [shape: f32[2,32], index: 11, kind: output, shape index: {1}]
  %s12 = inlined_call_operand.hbm [shape: f32[2,32], index: 12, kind: output, shape index: {2}]
  %13 = xla_tuple %s10, %s11, %s12
  %s14 = sld [smem:[#allocation0]]
  $region70: #{tpu_custom_call.1} parent=0
    _
  %s16 = ssub.s32 1, %s14
  %s17 = scalar_select 0, %s16, %s14
  $region1: #{tpu_custom_call.1} parent=0
    #allocation3 [shape = 'u8[512]{0}', space=smem, size = 0x200, scoped, tag = 'input window, operand 2, single buffered']
    #allocation4 [shape = 's32[1]{0}', space=sflag, size = 0x4, scoped, tag = 'scoped memory for tpu_custom_call.1']
    #allocation5 [shape = 's32[1]{0}', space=sflag, size = 0x4, scoped, tag = 'scoped memory for tpu_custom_call.1']
    #allocation6 [shape = 'u8[8192]{0}', space=vmem, size = 0x2000, scoped, tag = 'output window, operand 0, single buffered']
    #allocation7 [shape = 'u8[1024]{0}', space=vmem, size = 0x400, scoped, tag = 'output window, operand 1, single buffered']
    #allocation8 [shape = 's32[1]{0}', space=sflag, size = 0x4, scoped, tag = 'scoped memory for tpu_custom_call.1']
    #allocation9 [shape = 'u8[1024]{0}', space=vmem, size = 0x400, scoped, tag = 'output window, operand 2, single buffered']
    %18 = vsyncpa [#allocation5], 0
    %19 = vsyncpa [#allocation4], 0
    %20 = vsyncpa [#allocation8], 0
    // Predicated region
    $region2: #{tpu_custom_call.1} parent=1 // pred_check
      _
    $region3: #{tpu_custom_call.1} parent=1 // pred_check_branch
      %22 = sbr.rel (0) target = $region5
    $region4: #{tpu_custom_call.1} parent=1 // pred_region
      _
    $region5: #{tpu_custom_call.1} parent=1 // pred_fallthru
      _
    // Predicated region
    $region6: #{tpu_custom_call.1} parent=1 // pred_check
      _
    $region7: #{tpu_custom_call.1} parent=1 // pred_check_branch
      %24 = sbr.rel (0) target = $region9
    $region8: #{tpu_custom_call.1} parent=1 // pred_region
      _
    $region9: #{tpu_custom_call.1} parent=1 // pred_fallthru
      _
    // Predicated region
    $region10: #{tpu_custom_call.1} parent=1 // pred_check
      _
    $region11: #{tpu_custom_call.1} parent=1 // pred_check_branch
      %26 = sbr.rel (0) target = $region13
    $region12: #{tpu_custom_call.1} parent=1 // pred_region
      %s28 = ssub.s32 16, 16
      %29 = vsyncadd [#allocation5], %s28
      %s31 = sshll.u32 %s2, 4
      %s32 = int_to_ptr.vmem [resolvable:$true] %s31
      %34 = dma.vmem_to_smem %s32, 16, [#allocation3], [#allocation5]
    $region13: #{tpu_custom_call.1} parent=1 // pred_fallthru
      _
    // Predicated region
    $region14: #{tpu_custom_call.1} parent=1 // pred_check
      _
    $region15: #{tpu_custom_call.1} parent=1 // pred_check_branch
      %36 = sbr.rel (0) target = $region17
    $region16: #{tpu_custom_call.1} parent=1 // pred_region
      _
    $region17: #{tpu_custom_call.1} parent=1 // pred_fallthru
      _
    // Predicated region
    $region18: #{tpu_custom_call.1} parent=1 // pred_check
      _
    $region19: #{tpu_custom_call.1} parent=1 // pred_check_branch
      %38 = sbr.rel (0) target = $region21
    $region20: #{tpu_custom_call.1} parent=1 // pred_region
      _
    $region21: #{tpu_custom_call.1} parent=1 // pred_fallthru
      _
    // Predicated region
    $region22: #{tpu_custom_call.1} parent=1 // pred_check
      _
    $region23: #{tpu_custom_call.1} parent=1 // pred_check_branch
      %40 = sbr.rel (0) target = $region25
    $region24: #{tpu_custom_call.1} parent=1 // pred_region
      _
    $region25: #{tpu_custom_call.1} parent=1 // pred_fallthru
      _
    // Predicated region
    $region26: #{tpu_custom_call.1} parent=1 // pred_check
      _
    $region27: #{tpu_custom_call.1} parent=1 // pred_check_branch
      %42 = sbr.rel (0) target = $region29
    $region28: #{tpu_custom_call.1} parent=1 // pred_region
      _
    $region29: #{tpu_custom_call.1} parent=1 // pred_fallthru
      _
    // Predicated region
    $region30: #{tpu_custom_call.1} parent=1 // pred_check
      _
    $region31: #{tpu_custom_call.1} parent=1 // pred_check_branch
      %44 = sbr.rel (0) target = $region33
    $region32: #{tpu_custom_call.1} parent=1 // pred_region
      _
    $region33: #{tpu_custom_call.1} parent=1 // pred_fallthru
      _
    // Predicated region
    $region34: #{tpu_custom_call.1} parent=1 // pred_check
      _
    $region35: #{tpu_custom_call.1} parent=1 // pred_check_branch
      %46 = sbr.rel (0) target = $region37
    $region36: #{tpu_custom_call.1} parent=1 // pred_region
      _
    $region37: #{tpu_custom_call.1} parent=1 // pred_fallthru
      _
    // Predicated region
    $region38: #{tpu_custom_call.1} parent=1 // pred_check
      _
    $region39: #{tpu_custom_call.1} parent=1 // pred_check_branch
      %48 = sbr.rel (0) target = $region41
    $region40: #{tpu_custom_call.1} parent=1 // pred_region
      _
    $region41: #{tpu_custom_call.1} parent=1 // pred_fallthru
      _
    // Predicated region
    $region42: #{tpu_custom_call.1} parent=1 // pred_check
      _
    $region43: #{tpu_custom_call.1} parent=1 // pred_check_branch
      %50 = sbr.rel (0) target = $region45
    $region44: #{tpu_custom_call.1} parent=1 // pred_region
      %51 = dma.done [#allocation5], 16
    $region45: #{tpu_custom_call.1} parent=1 // pred_fallthru
      _
    %52 = sfence
    %v53 = vld [vmem:[%s0] sm:$0x7f]
    %v54 = vld [vmem:[%s0 + $0x8] sm:$0x7f]
    %v55 = vld [vmem:[%s0 + $0x10] sm:$0x7f]
    %v56 = vld [vmem:[%s0 + $0x18] sm:$0x7f]
    %v57 = vld [vmem:[%s0 + $0x20] sm:$0x7f]
    %v58 = vld [vmem:[%s0 + $0x28] sm:$0x7f]
    %s59 = sld [smem:[#allocation3]]
    %v60 = vstv %s59
    %v61 = vmul.f32 %v60, %v53
    %v62 = vmul.f32 %v60, %v54
    %v63 = vmul.f32 %v60, %v55
    %v64 = vmul.f32 %v60, %v56
    %v65 = vmul.f32 %v60, %v57
    %v66 = vmul.f32 %v60, %v58
    %s67 = sld [smem:[#allocation3 + $0x1]]
    %v68 = vstv %s67
    %v69 = vmul.f32 %v68, %v53
    %v70 = vmul.f32 %v68, %v54
    %v71 = vmul.f32 %v68, %v55
    %v72 = vmul.f32 %v68, %v56
    %v73 = vmul.f32 %v68, %v57
    %v74 = vmul.f32 %v68, %v58
    %v81 = vrot.slane %v69, 1
    %v82 = vrot.slane %v70, 1
    %v83 = vrot.slane %v71, 1
    %v84 = vrot.slane %v72, 1
    %v85 = vrot.slane %v73, 1
    %v86 = vrot.slane %v74, 1
    %v93 = vadd.f32 %v61, %v81
    %v94 = vadd.f32 %v62, %v82
    %v95 = vadd.f32 %v63, %v83
    %v96 = vadd.f32 %v64, %v84
    %v97 = vadd.f32 %v65, %v85
    %v98 = vadd.f32 %v66, %v86
    %s99 = sld [smem:[#allocation3 + $0x2]]
    %v100 = vstv %s99
    %v101 = vadd.f32 %v93, %v100
    %v102 = vadd.f32 %v94, %v100
    %v103 = vadd.f32 %v95, %v100
    %v104 = vadd.f32 %v96, %v100
    %v105 = vadd.f32 %v97, %v100
    %v106 = vadd.f32 %v98, %v100
    %vm107 = vcmp.ge.f32.partialorder %v101, 0.0
    %vm108 = vcmp.ge.f32.partialorder %v102, 0.0
    %vm109 = vcmp.ge.f32.partialorder %v103, 0.0
    %vm110 = vcmp.ge.f32.partialorder %v104, 0.0
    %vm111 = vcmp.ge.f32.partialorder %v105, 0.0
    %vm112 = vcmp.ge.f32.partialorder %v106, 0.0
    %v113 = vmul.f32 %v101, 0.01
    %v114 = vmul.f32 %v102, 0.01
    %v115 = vmul.f32 %v103, 0.01
    %v116 = vmul.f32 %v104, 0.01
    %v117 = vmul.f32 %v105, 0.01
    %v118 = vmul.f32 %v106, 0.01
    %v119 = vsel %vm107, %v101, %v113
    %v120 = vsel %vm108, %v102, %v114
    %v121 = vsel %vm109, %v103, %v115
    %v122 = vsel %vm110, %v104, %v116
    %v123 = vsel %vm111, %v105, %v117
    %v124 = vsel %vm112, %v106, %v118
    %s125 = sld [smem:[#allocation3 + $0x3]]
    %v126 = vstv %s125
    %v127 = vmul.f32 %v126, %v119
    %v128 = vmul.f32 %v126, %v120
    %v129 = vmul.f32 %v126, %v121
    %v130 = vmul.f32 %v126, %v122
    %v131 = vmul.f32 %v126, %v123
    %v132 = vmul.f32 %v126, %v124
    %s133 = sld [smem:[#allocation3 + $0x4]]
    %v134 = vstv %s133
    %v135 = vmul.f32 %v134, %v119
    %v136 = vmul.f32 %v134, %v120
    %v137 = vmul.f32 %v134, %v121
    %v138 = vmul.f32 %v134, %v122
    %v139 = vmul.f32 %v134, %v123
    %v140 = vmul.f32 %v134, %v124
    %v147 = vrot.slane %v135, 1
    %v148 = vrot.slane %v136, 1
    %v149 = vrot.slane %v137, 1
    %v150 = vrot.slane %v138, 1
    %v151 = vrot.slane %v139, 1
    %v152 = vrot.slane %v140, 1
    %v159 = vadd.f32 %v127, %v147
    %v160 = vadd.f32 %v128, %v148
    %v161 = vadd.f32 %v129, %v149
    %v162 = vadd.f32 %v130, %v150
    %v163 = vadd.f32 %v131, %v151
    %v164 = vadd.f32 %v132, %v152
    %s165 = sld [smem:[#allocation3 + $0x5]]
    %v166 = vstv %s165
    %v167 = vadd.f32 %v159, %v166
    %v168 = vadd.f32 %v160, %v166
    %v169 = vadd.f32 %v161, %v166
    %v170 = vadd.f32 %v162, %v166
    %v171 = vadd.f32 %v163, %v166
    %v172 = vadd.f32 %v164, %v166
    %vm173 = vcmp.ge.f32.partialorder %v167, 0.0
    %vm174 = vcmp.ge.f32.partialorder %v168, 0.0
    %vm175 = vcmp.ge.f32.partialorder %v169, 0.0
    %vm176 = vcmp.ge.f32.partialorder %v170, 0.0
    %vm177 = vcmp.ge.f32.partialorder %v171, 0.0
    %vm178 = vcmp.ge.f32.partialorder %v172, 0.0
    %v179 = vmul.f32 %v167, 0.01
    %v180 = vmul.f32 %v168, 0.01
    %v181 = vmul.f32 %v169, 0.01
    %v182 = vmul.f32 %v170, 0.01
    %v183 = vmul.f32 %v171, 0.01
    %v184 = vmul.f32 %v172, 0.01
    %v185 = vsel %vm173, %v167, %v179
    %v186 = vsel %vm174, %v168, %v180
    %v187 = vsel %vm175, %v169, %v181
    %v188 = vsel %vm176, %v170, %v182
    %v189 = vsel %vm177, %v171, %v183
    %v190 = vsel %vm178, %v172, %v184
    %s191 = sld [smem:[#allocation3 + $0x6]]
    %v192 = vstv %s191
    %v193 = vmul.f32 %v192, %v185
    %v194 = vmul.f32 %v192, %v186
    %v195 = vmul.f32 %v192, %v187
    %v196 = vmul.f32 %v192, %v188
    %v197 = vmul.f32 %v192, %v189
    %v198 = vmul.f32 %v192, %v190
    %s199 = sld [smem:[#allocation3 + $0x7]]
    %v200 = vstv %s199
    %v201 = vmul.f32 %v200, %v185
    %v202 = vmul.f32 %v200, %v186
    %v203 = vmul.f32 %v200, %v187
    %v204 = vmul.f32 %v200, %v188
    %v205 = vmul.f32 %v200, %v189
    %v206 = vmul.f32 %v200, %v190
    %v213 = vrot.slane %v201, 1
    %v214 = vrot.slane %v202, 1
    %v215 = vrot.slane %v203, 1
    %v216 = vrot.slane %v204, 1
    %v217 = vrot.slane %v205, 1
    %v218 = vrot.slane %v206, 1
    %v225 = vadd.f32 %v193, %v213
    %v226 = vadd.f32 %v194, %v214
    %v227 = vadd.f32 %v195, %v215
    %v228 = vadd.f32 %v196, %v216
    %v229 = vadd.f32 %v197, %v217
    %v230 = vadd.f32 %v198, %v218
    %s231 = sld [smem:[#allocation3 + $0x8]]
    %v232 = vstv %s231
    %v233 = vmul.f32 %v232, %v185
    %v234 = vmul.f32 %v232, %v186
    %v235 = vmul.f32 %v232, %v187
    %v236 = vmul.f32 %v232, %v188
    %v237 = vmul.f32 %v232, %v189
    %v238 = vmul.f32 %v232, %v190
    %v245 = vrot.slane %v233, 2
    %v246 = vrot.slane %v234, 2
    %v247 = vrot.slane %v235, 2
    %v248 = vrot.slane %v236, 2
    %v249 = vrot.slane %v237, 2
    %v250 = vrot.slane %v238, 2
    %v257 = vadd.f32 %v225, %v245
    %v258 = vadd.f32 %v226, %v246
    %v259 = vadd.f32 %v227, %v247
    %v260 = vadd.f32 %v228, %v248
    %v261 = vadd.f32 %v229, %v249
    %v262 = vadd.f32 %v230, %v250
    %s263 = sld [smem:[#allocation3 + $0x9]]
    %v264 = vstv %s263
    %v265 = vadd.f32 %v257, %v264
    %v266 = vadd.f32 %v258, %v264
    %v267 = vadd.f32 %v259, %v264
    %v268 = vadd.f32 %v260, %v264
    %v269 = vadd.f32 %v261, %v264
    %v270 = vadd.f32 %v262, %v264
    %vm271 = vcmp.ge.f32.partialorder %v265, 0.0
    %vm272 = vcmp.ge.f32.partialorder %v266, 0.0
    %vm273 = vcmp.ge.f32.partialorder %v267, 0.0
    %vm274 = vcmp.ge.f32.partialorder %v268, 0.0
    %vm275 = vcmp.ge.f32.partialorder %v269, 0.0
    %vm276 = vcmp.ge.f32.partialorder %v270, 0.0
    %v277 = vmul.f32 %v265, 0.01
    %v278 = vmul.f32 %v266, 0.01
    %v279 = vmul.f32 %v267, 0.01
    %v280 = vmul.f32 %v268, 0.01
    %v281 = vmul.f32 %v269, 0.01
    %v282 = vmul.f32 %v270, 0.01
    %v283 = vsel %vm271, %v265, %v277
    %v284 = vsel %vm272, %v266, %v278
    %v285 = vsel %vm273, %v267, %v279
    %v286 = vsel %vm274, %v268, %v280
    %v287 = vsel %vm275, %v269, %v281
    %v288 = vsel %vm276, %v270, %v282
    %s289 = sld [smem:[#allocation3 + $0xa]]
    %v290 = vstv %s289
    %v291 = vmul.f32 %v290, %v283
    %v292 = vmul.f32 %v290, %v284
    %v293 = vmul.f32 %v290, %v285
    %v294 = vmul.f32 %v290, %v286
    %v295 = vmul.f32 %v290, %v287
    %v296 = vmul.f32 %v290, %v288
    %s297 = sld [smem:[#allocation3 + $0xb]]
    %v298 = vstv %s297
    %v299 = vmul.f32 %v298, %v283
    %v300 = vmul.f32 %v298, %v284
    %v301 = vmul.f32 %v298, %v285
    %v302 = vmul.f32 %v298, %v286
    %v303 = vmul.f32 %v298, %v287
    %v304 = vmul.f32 %v298, %v288
    %v311 = vrot.slane %v299, 1
    %v312 = vrot.slane %v300, 1
    %v313 = vrot.slane %v301, 1
    %v314 = vrot.slane %v302, 1
    %v315 = vrot.slane %v303, 1
    %v316 = vrot.slane %v304, 1
    %v323 = vadd.f32 %v291, %v311
    %v324 = vadd.f32 %v292, %v312
    %v325 = vadd.f32 %v293, %v313
    %v326 = vadd.f32 %v294, %v314
    %v327 = vadd.f32 %v295, %v315
    %v328 = vadd.f32 %v296, %v316
    %s329 = sld [smem:[#allocation3 + $0xc]]
    %v330 = vstv %s329
    %v331 = vmul.f32 %v330, %v283
    %v332 = vmul.f32 %v330, %v284
    %v333 = vmul.f32 %v330, %v285
    %v334 = vmul.f32 %v330, %v286
    %v335 = vmul.f32 %v330, %v287
    %v336 = vmul.f32 %v330, %v288
    %v343 = vrot.slane %v331, 2
    %v344 = vrot.slane %v332, 2
    %v345 = vrot.slane %v333, 2
    %v346 = vrot.slane %v334, 2
    %v347 = vrot.slane %v335, 2
    %v348 = vrot.slane %v336, 2
    %v355 = vadd.f32 %v323, %v343
    %v356 = vadd.f32 %v324, %v344
    %v357 = vadd.f32 %v325, %v345
    %v358 = vadd.f32 %v326, %v346
    %v359 = vadd.f32 %v327, %v347
    %v360 = vadd.f32 %v328, %v348
    %s361 = sld [smem:[#allocation3 + $0xd]]
    %v362 = vstv %s361
    %v363 = vadd.f32 %v355, %v362
    %v364 = vadd.f32 %v356, %v362
    %v365 = vadd.f32 %v357, %v362
    %v366 = vadd.f32 %v358, %v362
    %v367 = vadd.f32 %v359, %v362
    %v368 = vadd.f32 %v360, %v362
    %vm369 = vcmp.ge.f32.partialorder %v363, 0.0
    %vm370 = vcmp.ge.f32.partialorder %v364, 0.0
    %vm371 = vcmp.ge.f32.partialorder %v365, 0.0
    %vm372 = vcmp.ge.f32.partialorder %v366, 0.0
    %vm373 = vcmp.ge.f32.partialorder %v367, 0.0
    %vm374 = vcmp.ge.f32.partialorder %v368, 0.0
    %v375 = vmul.f32 %v363, 0.01
    %v376 = vmul.f32 %v364, 0.01
    %v377 = vmul.f32 %v365, 0.01
    %v378 = vmul.f32 %v366, 0.01
    %v379 = vmul.f32 %v367, 0.01
    %v380 = vmul.f32 %v368, 0.01
    %v381 = vsel %vm369, %v363, %v375
    %v382 = vsel %vm370, %v364, %v376
    %v383 = vsel %vm371, %v365, %v377
    %v384 = vsel %vm372, %v366, %v378
    %v385 = vsel %vm373, %v367, %v379
    %v386 = vsel %vm374, %v368, %v380
    %s387 = sld [smem:[#allocation3 + $0xe]]
    %v388 = vstv %s387
    %v389 = vmul.f32 %v388, %v381
    %v390 = vmul.f32 %v388, %v384
    %s391 = sld [smem:[#allocation3 + $0xf]]
    %v392 = vstv %s391
    %v393 = vmul.f32 %v392, %v382
    %v394 = vmul.f32 %v392, %v385
    %v395 = vadd.f32 %v389, %v393
    %v396 = vadd.f32 %v390, %v394
    %s397 = sld [smem:[#allocation3 + $0x10]]
    %v398 = vstv %s397
    %v399 = vmul.f32 %v398, %v383
    %v400 = vmul.f32 %v398, %v386
    %v401 = vadd.f32 %v395, %v399
    %v402 = vadd.f32 %v396, %v400
    %s403 = sld [smem:[#allocation3 + $0x11]]
    %v404 = vstv %s403
    %v405 = vadd.f32 %v401, %v404
    %v406 = vadd.f32 %v402, %v404
    %vm407 = vcmp.ge.f32.partialorder %v405, 0.0
    %vm408 = vcmp.ge.f32.partialorder %v406, 0.0
    %v409 = vmul.f32 %v405, 0.01
    %v410 = vmul.f32 %v406, 0.01
    %v411 = vsel %vm407, %v405, %v409
    %v412 = vsel %vm408, %v406, %v410
    %v413 = vld [vmem:[%s1] sm:$0xff]
    %v414 = vld [vmem:[%s1 + $0x8] sm:$0xff]
    %v415 = vld [vmem:[%s5] sm:$0xff]
    %v416 = vld [vmem:[%s5 + $0x8] sm:$0xff]
    %v417 = vld [vmem:[%s5 + $0x10] sm:$0xff]
    %v418 = vld [vmem:[%s5 + $0x18] sm:$0xff]
    %v419 = vld [vmem:[%s5 + $0x20] sm:$0xff]
    %v420 = vld [vmem:[%s5 + $0x28] sm:$0xff]
    %v421 = vld [vmem:[%s5 + $0x30] sm:$0xff]
    %v422 = vld [vmem:[%s5 + $0x38] sm:$0xff]
    %v423 = vld [vmem:[%s5 + $0x40] sm:$0xff]
    %v424 = vld [vmem:[%s5 + $0x48] sm:$0xff]
    %v425 = vld [vmem:[%s5 + $0x50] sm:$0xff]
    %v426 = vld [vmem:[%s5 + $0x58] sm:$0xff]
    %v427 = vld [vmem:[%s5 + $0x60] sm:$0xff]
    %v428 = vld [vmem:[%s5 + $0x68] sm:$0xff]
    %v429 = vld [vmem:[%s5 + $0x70] sm:$0xff]
    %v430 = vld [vmem:[%s5 + $0x78] sm:$0xff]
    %v431 = vld [vmem:[%s5 + $0x80] sm:$0xff]
    %v432 = vld [vmem:[%s5 + $0x88] sm:$0xff]
    %v433 = vld [vmem:[%s5 + $0x90] sm:$0xff]
    %v434 = vld [vmem:[%s5 + $0x98] sm:$0xff]
    %v435 = vld [vmem:[%s5 + $0xa0] sm:$0xff]
    %v436 = vld [vmem:[%s5 + $0xa8] sm:$0xff]
    %v437 = vld [vmem:[%s5 + $0xb0] sm:$0xff]
    %v438 = vld [vmem:[%s5 + $0xb8] sm:$0xff]
    %v439 = vld [vmem:[%s5 + $0xc0] sm:$0xff]
    %v440 = vld [vmem:[%s5 + $0xc8] sm:$0xff]
    %v441 = vld [vmem:[%s5 + $0xd0] sm:$0xff]
    %v442 = vld [vmem:[%s5 + $0xd8] sm:$0xff]
    %v443 = vld [vmem:[%s5 + $0xe0] sm:$0xff]
    %v444 = vld [vmem:[%s5 + $0xe8] sm:$0xff]
    %v445 = vld [vmem:[%s5 + $0xf0] sm:$0xff]
    %v446 = vld [vmem:[%s5 + $0xf8] sm:$0xff]
    %v447 = vld [vmem:[%s6] sm:$0xff]
    %v448 = vld [vmem:[%s6 + $0x8] sm:$0xff]
    %v449 = vld [vmem:[%s6 + $0x10] sm:$0xff]
    %v450 = vld [vmem:[%s6 + $0x18] sm:$0xff]
    %v451 = vld [vmem:[%s6 + $0x20] sm:$0xff]
    %v452 = vld [vmem:[%s6 + $0x28] sm:$0xff]
    %v453 = vld [vmem:[%s6 + $0x30] sm:$0xff]
    %v454 = vld [vmem:[%s6 + $0x38] sm:$0xff]
    %v455 = vld [vmem:[%s6 + $0x40] sm:$0xff]
    %v456 = vld [vmem:[%s6 + $0x48] sm:$0xff]
    %v457 = vld [vmem:[%s6 + $0x50] sm:$0xff]
    %v458 = vld [vmem:[%s6 + $0x58] sm:$0xff]
    %v459 = vld [vmem:[%s6 + $0x60] sm:$0xff]
    %v460 = vld [vmem:[%s6 + $0x68] sm:$0xff]
    %v461 = vld [vmem:[%s6 + $0x70] sm:$0xff]
    %v462 = vld [vmem:[%s6 + $0x78] sm:$0xff]
    %v463 = vld [vmem:[%s7] sm:$0x1]
    %v464 = vld [vmem:[%s7 + $0x1] sm:$0x1]
    %v465 = vld [vmem:[%s7 + $0x2] sm:$0x1]
    %v466 = vld [vmem:[%s7 + $0x3] sm:$0x1]
    %vm467 = vcmask 261120
    %v469 = vsel %vm467, %v413, 0
    %v472 = vsel %vm467, %v414, 0
    %474 = vmatprep.subr.mxu0 0.0
    %475 = vmatpush1.msra.mxu0 %v415
    %476 = vmatprep.subr.mxu0 0.0
    %477 = vmatpush1.msra.mxu0 %v416
    %478 = vmatprep.subr.mxu0 0.0
    %479 = vmatpush1.msra.mxu0 %v417
    %480 = vmatprep.subr.mxu0 0.0
    %481 = vmatpush1.msra.mxu0 %v418
    %482 = vmatprep.subr.mxu0 0.0
    %483 = vmatpush1.msra.mxu0 0.0
    %484 = vmatprep.subr.mxu0 0.0
    %485 = vmatpush1.msra.mxu0 0.0
    %486 = vmatprep.subr.mxu0 0.0
    %487 = vmatpush1.msra.mxu0 0.0
    %488 = vmatprep.subr.mxu0 0.0
    %489 = vmatpush1.msra.mxu0 0.0
    %490 = vmatprep.subr.mxu0 0.0
    %491 = vmatpush1.msra.mxu0 0.0
    %492 = vmatprep.subr.mxu0 0.0
    %493 = vmatpush1.msra.mxu0 0.0
    %494 = vmatprep.subr.mxu0 0.0
    %495 = vmatpush1.msra.mxu0 0.0
    %496 = vmatprep.subr.mxu0 0.0
    %497 = vmatpush1.msra.mxu0 0.0
    %498 = vmatprep.subr.mxu0 0.0
    %499 = vmatpush1.msra.mxu0 0.0
    %500 = vmatprep.subr.mxu0 0.0
    %501 = vmatpush1.msra.mxu0 0.0
    %502 = vmatprep.subr.mxu0 0.0
    %503 = vmatpush1.msra.mxu0 0.0
    %504 = vmatprep.subr.mxu0 0.0
    %505 = vmatpush1.msra.mxu0 0.0
    %506 = vmatprep.subr.mxu0 0.0
    %507 = vmatpush1.msra.mxu0 0.0
    %508 = vmatprep.subr.mxu0 0.0
    %509 = vmatpush1.msra.mxu0 0.0
    %510 = vmatprep.subr.mxu0 0.0
    %511 = vmatpush1.msra.mxu0 0.0
    %512 = vmatprep.subr.mxu0 0.0
    %513 = vmatpush1.msra.mxu0 0.0
    %514 = vmatprep.subr.mxu0 0.0
    %515 = vmatpush1.msra.mxu0 0.0
    %516 = vmatprep.subr.mxu0 0.0
    %517 = vmatpush1.msra.mxu0 0.0
    %518 = vmatprep.subr.mxu0 0.0
    %519 = vmatpush1.msra.mxu0 0.0
    %520 = vmatprep.subr.mxu0 0.0
    %521 = vmatpush1.msra.mxu0 0.0
    %522 = vmatprep.subr.mxu0 0.0
    %523 = vmatpush1.msra.mxu0 0.0
    %524 = vmatprep.subr.mxu0 0.0
    %525 = vmatpush1.msra.mxu0 0.0
    %526 = vmatprep.subr.mxu0 0.0
    %527 = vmatpush1.msra.mxu0 0.0
    %528 = vmatprep.subr.mxu0 0.0
    %529 = vmatpush1.msra.mxu0 0.0
    %530 = vmatprep.subr.mxu0 0.0
    %531 = vmatpush1.msra.mxu0 0.0
    %532 = vmatprep.subr.mxu0 0.0
    %533 = vmatpush1.msra.mxu0 0.0
    %534 = vmatprep.subr.mxu0 0.0
    %535 = vmatpush1.msra.mxu0 0.0
    %536 = vmatprep.subr.mxu0 0.0
    %537 = vmatpush1.msra.mxu0 0.0
    %538 = vmatprep.mubr.f32.mxu0 0.0
    %539 = vmatmul.mubr.f32.gmra.mrb[0].mxu0 %v469
    %v540 = vpop.f32.mrb[0].mxu0
    %v541 = vadd.f32 0.0, %v540
    %v542 = vpop.f32.mrb[0].mxu0
    %543 = vmatprep.mubr.f32.mxu0 0.0
    %544 = vmatmul.mubr.f32.gmra.mrb[0].mxu0 %v472
    %v545 = vpop.f32.mrb[0].mxu0
    %v546 = vadd.f32 0.0, %v545
    %v547 = vpop.f32.mrb[0].mxu0
    %548 = vdwg.mxu0
    %v550 = vlaneseq
    %v551 = vshrl.u32 %v550, 7
    %v552 = vsub.s32 0, %v551
    %v553 = vrot.slane %v463, %v552
    %v557 = vrot.slane %v412, 7
    %vm558 = vcmask 1041409
    %v559 = vsel %vm558, %v557, %v411
    %v560 = vsel %vm467, %v559, 0
    %562 = vmatprep.subr.mxu0 0.0
    %563 = vmatpush1.msra.mxu0 %v419
    %564 = vmatprep.subr.mxu0 0.0
    %565 = vmatpush1.msra.mxu0 %v420
    %566 = vmatprep.subr.mxu0 0.0
    %567 = vmatpush1.msra.mxu0 %v421
    %568 = vmatprep.subr.mxu0 0.0
    %569 = vmatpush1.msra.mxu0 %v422
    %570 = vmatprep.subr.mxu0 0.0
    %571 = vmatpush1.msra.mxu0 0.0
    %572 = vmatprep.subr.mxu0 0.0
    %573 = vmatpush1.msra.mxu0 0.0
    %574 = vmatprep.subr.mxu0 0.0
    %575 = vmatpush1.msra.mxu0 0.0
    %576 = vmatprep.subr.mxu0 0.0
    %577 = vmatpush1.msra.mxu0 0.0
    %578 = vmatprep.subr.mxu0 0.0
    %579 = vmatpush1.msra.mxu0 0.0
    %580 = vmatprep.subr.mxu0 0.0
    %581 = vmatpush1.msra.mxu0 0.0
    %582 = vmatprep.subr.mxu0 0.0
    %583 = vmatpush1.msra.mxu0 0.0
    %584 = vmatprep.subr.mxu0 0.0
    %585 = vmatpush1.msra.mxu0 0.0
    %586 = vmatprep.subr.mxu0 0.0
    %587 = vmatpush1.msra.mxu0 0.0
    %588 = vmatprep.subr.mxu0 0.0
    %589 = vmatpush1.msra.mxu0 0.0
    %590 = vmatprep.subr.mxu0 0.0
    %591 = vmatpush1.msra.mxu0 0.0
    %592 = vmatprep.subr.mxu0 0.0
    %593 = vmatpush1.msra.mxu0 0.0
    %594 = vmatprep.subr.mxu0 0.0
    %595 = vmatpush1.msra.mxu0 0.0
    %596 = vmatprep.subr.mxu0 0.0
    %597 = vmatpush1.msra.mxu0 0.0
    %598 = vmatprep.subr.mxu0 0.0
    %599 = vmatpush1.msra.mxu0 0.0
    %600 = vmatprep.subr.mxu0 0.0
    %601 = vmatpush1.msra.mxu0 0.0
    %602 = vmatprep.subr.mxu0 0.0
    %603 = vmatpush1.msra.mxu0 0.0
    %604 = vmatprep.subr.mxu0 0.0
    %605 = vmatpush1.msra.mxu0 0.0
    %606 = vmatprep.subr.mxu0 0.0
    %607 = vmatpush1.msra.mxu0 0.0
    %608 = vmatprep.subr.mxu0 0.0
    %609 = vmatpush1.msra.mxu0 0.0
    %610 = vmatprep.subr.mxu0 0.0
    %611 = vmatpush1.msra.mxu0 0.0
    %612 = vmatprep.subr.mxu0 0.0
    %613 = vmatpush1.msra.mxu0 0.0
    %614 = vmatprep.subr.mxu0 0.0
    %615 = vmatpush1.msra.mxu0 0.0
    %616 = vmatprep.subr.mxu0 0.0
    %617 = vmatpush1.msra.mxu0 0.0
    %618 = vmatprep.subr.mxu0 0.0
    %619 = vmatpush1.msra.mxu0 0.0
    %620 = vmatprep.subr.mxu0 0.0
    %621 = vmatpush1.msra.mxu0 0.0
    %622 = vmatprep.subr.mxu0 0.0
    %623 = vmatpush1.msra.mxu0 0.0
    %624 = vmatprep.subr.mxu0 0.0
    %625 = vmatpush1.msra.mxu0 0.0
    %626 = vmatprep.mubr.f32.mxu0 0.0
    %627 = vmatmul.mubr.f32.gmra.mrb[0].mxu0 %v560
    %v628 = vpop.f32.mrb[0].mxu0
    %v629 = vadd.f32 %v553, %v628
    %v630 = vpop.f32.mrb[0].mxu0
    %631 = vdwg.mxu0
    %632 = vmatprep.subr.mxu0 0.0
    %633 = vmatpush1.msra.mxu0 %v423
    %634 = vmatprep.subr.mxu0 0.0
    %635 = vmatpush1.msra.mxu0 %v424
    %636 = vmatprep.subr.mxu0 0.0
    %637 = vmatpush1.msra.mxu0 %v425
    %638 = vmatprep.subr.mxu0 0.0
    %639 = vmatpush1.msra.mxu0 %v426
    %640 = vmatprep.subr.mxu0 0.0
    %641 = vmatpush1.msra.mxu0 0.0
    %642 = vmatprep.subr.mxu0 0.0
    %643 = vmatpush1.msra.mxu0 0.0
    %644 = vmatprep.subr.mxu0 0.0
    %645 = vmatpush1.msra.mxu0 0.0
    %646 = vmatprep.subr.mxu0 0.0
    %647 = vmatpush1.msra.mxu0 0.0
    %648 = vmatprep.subr.mxu0 0.0
    %649 = vmatpush1.msra.mxu0 0.0
    %650 = vmatprep.subr.mxu0 0.0
    %651 = vmatpush1.msra.mxu0 0.0
    %652 = vmatprep.subr.mxu0 0.0
    %653 = vmatpush1.msra.mxu0 0.0
    %654 = vmatprep.subr.mxu0 0.0
    %655 = vmatpush1.msra.mxu0 0.0
    %656 = vmatprep.subr.mxu0 0.0
    %657 = vmatpush1.msra.mxu0 0.0
    %658 = vmatprep.subr.mxu0 0.0
    %659 = vmatpush1.msra.mxu0 0.0
    %660 = vmatprep.subr.mxu0 0.0
    %661 = vmatpush1.msra.mxu0 0.0
    %662 = vmatprep.subr.mxu0 0.0
    %663 = vmatpush1.msra.mxu0 0.0
    %664 = vmatprep.subr.mxu0 0.0
    %665 = vmatpush1.msra.mxu0 0.0
    %666 = vmatprep.subr.mxu0 0.0
    %667 = vmatpush1.msra.mxu0 0.0
    %668 = vmatprep.subr.mxu0 0.0
    %669 = vmatpush1.msra.mxu0 0.0
    %670 = vmatprep.subr.mxu0 0.0
    %671 = vmatpush1.msra.mxu0 0.0
    %672 = vmatprep.subr.mxu0 0.0
    %673 = vmatpush1.msra.mxu0 0.0
    %674 = vmatprep.subr.mxu0 0.0
    %675 = vmatpush1.msra.mxu0 0.0
    %676 = vmatprep.subr.mxu0 0.0
    %677 = vmatpush1.msra.mxu0 0.0
    %678 = vmatprep.subr.mxu0 0.0
    %679 = vmatpush1.msra.mxu0 0.0
    %680 = vmatprep.subr.mxu0 0.0
    %681 = vmatpush1.msra.mxu0 0.0
    %682 = vmatprep.subr.mxu0 0.0
    %683 = vmatpush1.msra.mxu0 0.0
    %684 = vmatprep.subr.mxu0 0.0
    %685 = vmatpush1.msra.mxu0 0.0
    %686 = vmatprep.subr.mxu0 0.0
    %687 = vmatpush1.msra.mxu0 0.0
    %688 = vmatprep.subr.mxu0 0.0
    %689 = vmatpush1.msra.mxu0 0.0
    %690 = vmatprep.subr.mxu0 0.0
    %691 = vmatpush1.msra.mxu0 0.0
    %692 = vmatprep.subr.mxu0 0.0
    %693 = vmatpush1.msra.mxu0 0.0
    %694 = vmatprep.subr.mxu0 0.0
    %695 = vmatpush1.msra.mxu0 0.0
    %696 = vmatprep.mubr.f32.mxu0 0.0
    %697 = vmatmul.mubr.f32.gmra.mrb[0].mxu0 %v469
    %v698 = vpop.f32.mrb[0].mxu0
    %v699 = vadd.f32 0.0, %v698
    %v700 = vpop.f32.mrb[0].mxu0
    %701 = vmatprep.mubr.f32.mxu0 0.0
    %702 = vmatmul.mubr.f32.gmra.mrb[0].mxu0 %v472
    %v703 = vpop.f32.mrb[0].mxu0
    %v704 = vadd.f32 0.0, %v703
    %v705 = vpop.f32.mrb[0].mxu0
    %706 = vdwg.mxu0
    %v708 = vlaneseq
    %v709 = vshrl.u32 %v708, 7
    %v710 = vsub.s32 0, %v709
    %v711 = vrot.slane %v464, %v710
    %713 = vmatprep.subr.mxu0 0.0
    %714 = vmatpush1.msra.mxu0 %v427
    %715 = vmatprep.subr.mxu0 0.0
    %716 = vmatpush1.msra.mxu0 %v428
    %717 = vmatprep.subr.mxu0 0.0
    %718 = vmatpush1.msra.mxu0 %v429
    %719 = vmatprep.subr.mxu0 0.0
    %720 = vmatpush1.msra.mxu0 %v430
    %721 = vmatprep.subr.mxu0 0.0
    %722 = vmatpush1.msra.mxu0 0.0
    %723 = vmatprep.subr.mxu0 0.0
    %724 = vmatpush1.msra.mxu0 0.0
    %725 = vmatprep.subr.mxu0 0.0
    %726 = vmatpush1.msra.mxu0 0.0
    %727 = vmatprep.subr.mxu0 0.0
    %728 = vmatpush1.msra.mxu0 0.0
    %729 = vmatprep.subr.mxu0 0.0
    %730 = vmatpush1.msra.mxu0 0.0
    %731 = vmatprep.subr.mxu0 0.0
    %732 = vmatpush1.msra.mxu0 0.0
    %733 = vmatprep.subr.mxu0 0.0
    %734 = vmatpush1.msra.mxu0 0.0
    %735 = vmatprep.subr.mxu0 0.0
    %736 = vmatpush1.msra.mxu0 0.0
    %737 = vmatprep.subr.mxu0 0.0
    %738 = vmatpush1.msra.mxu0 0.0
    %739 = vmatprep.subr.mxu0 0.0
    %740 = vmatpush1.msra.mxu0 0.0
    %741 = vmatprep.subr.mxu0 0.0
    %742 = vmatpush1.msra.mxu0 0.0
    %743 = vmatprep.subr.mxu0 0.0
    %744 = vmatpush1.msra.mxu0 0.0
    %745 = vmatprep.subr.mxu0 0.0
    %746 = vmatpush1.msra.mxu0 0.0
    %747 = vmatprep.subr.mxu0 0.0
    %748 = vmatpush1.msra.mxu0 0.0
    %749 = vmatprep.subr.mxu0 0.0
    %750 = vmatpush1.msra.mxu0 0.0
    %751 = vmatprep.subr.mxu0 0.0
    %752 = vmatpush1.msra.mxu0 0.0
    %753 = vmatprep.subr.mxu0 0.0
    %754 = vmatpush1.msra.mxu0 0.0
    %755 = vmatprep.subr.mxu0 0.0
    %756 = vmatpush1.msra.mxu0 0.0
    %757 = vmatprep.subr.mxu0 0.0
    %758 = vmatpush1.msra.mxu0 0.0
    %759 = vmatprep.subr.mxu0 0.0
    %760 = vmatpush1.msra.mxu0 0.0
    %761 = vmatprep.subr.mxu0 0.0
    %762 = vmatpush1.msra.mxu0 0.0
    %763 = vmatprep.subr.mxu0 0.0
    %764 = vmatpush1.msra.mxu0 0.0
    %765 = vmatprep.subr.mxu0 0.0
    %766 = vmatpush1.msra.mxu0 0.0
    %767 = vmatprep.subr.mxu0 0.0
    %768 = vmatpush1.msra.mxu0 0.0
    %769 = vmatprep.subr.mxu0 0.0
    %770 = vmatpush1.msra.mxu0 0.0
    %771 = vmatprep.subr.mxu0 0.0
    %772 = vmatpush1.msra.mxu0 0.0
    %773 = vmatprep.subr.mxu0 0.0
    %774 = vmatpush1.msra.mxu0 0.0
    %775 = vmatprep.subr.mxu0 0.0
    %776 = vmatpush1.msra.mxu0 0.0
    %777 = vmatprep.mubr.f32.mxu0 0.0
    %778 = vmatmul.mubr.f32.gmra.mrb[0].mxu0 %v560
    %v779 = vpop.f32.mrb[0].mxu0
    %v780 = vadd.f32 %v711, %v779
    %v781 = vpop.f32.mrb[0].mxu0
    %782 = vdwg.mxu0
    %783 = vmatprep.subr.mxu0 0.0
    %784 = vmatpush1.msra.mxu0 %v431
    %785 = vmatprep.subr.mxu0 0.0
    %786 = vmatpush1.msra.mxu0 %v432
    %787 = vmatprep.subr.mxu0 0.0
    %788 = vmatpush1.msra.mxu0 %v433
    %789 = vmatprep.subr.mxu0 0.0
    %790 = vmatpush1.msra.mxu0 %v434
    %791 = vmatprep.subr.mxu0 0.0
    %792 = vmatpush1.msra.mxu0 0.0
    %793 = vmatprep.subr.mxu0 0.0
    %794 = vmatpush1.msra.mxu0 0.0
    %795 = vmatprep.subr.mxu0 0.0
    %796 = vmatpush1.msra.mxu0 0.0
    %797 = vmatprep.subr.mxu0 0.0
    %798 = vmatpush1.msra.mxu0 0.0
    %799 = vmatprep.subr.mxu0 0.0
    %800 = vmatpush1.msra.mxu0 0.0
    %801 = vmatprep.subr.mxu0 0.0
    %802 = vmatpush1.msra.mxu0 0.0
    %803 = vmatprep.subr.mxu0 0.0
    %804 = vmatpush1.msra.mxu0 0.0
    %805 = vmatprep.subr.mxu0 0.0
    %806 = vmatpush1.msra.mxu0 0.0
    %807 = vmatprep.subr.mxu0 0.0
    %808 = vmatpush1.msra.mxu0 0.0
    %809 = vmatprep.subr.mxu0 0.0
    %810 = vmatpush1.msra.mxu0 0.0
    %811 = vmatprep.subr.mxu0 0.0
    %812 = vmatpush1.msra.mxu0 0.0
    %813 = vmatprep.subr.mxu0 0.0
    %814 = vmatpush1.msra.mxu0 0.0
    %815 = vmatprep.subr.mxu0 0.0
    %816 = vmatpush1.msra.mxu0 0.0
    %817 = vmatprep.subr.mxu0 0.0
    %818 = vmatpush1.msra.mxu0 0.0
    %819 = vmatprep.subr.mxu0 0.0
    %820 = vmatpush1.msra.mxu0 0.0
    %821 = vmatprep.subr.mxu0 0.0
    %822 = vmatpush1.msra.mxu0 0.0
    %823 = vmatprep.subr.mxu0 0.0
    %824 = vmatpush1.msra.mxu0 0.0
    %825 = vmatprep.subr.mxu0 0.0
    %826 = vmatpush1.msra.mxu0 0.0
    %827 = vmatprep.subr.mxu0 0.0
    %828 = vmatpush1.msra.mxu0 0.0
    %829 = vmatprep.subr.mxu0 0.0
    %830 = vmatpush1.msra.mxu0 0.0
    %831 = vmatprep.subr.mxu0 0.0
    %832 = vmatpush1.msra.mxu0 0.0
    %833 = vmatprep.subr.mxu0 0.0
    %834 = vmatpush1.msra.mxu0 0.0
    %835 = vmatprep.subr.mxu0 0.0
    %836 = vmatpush1.msra.mxu0 0.0
    %837 = vmatprep.subr.mxu0 0.0
    %838 = vmatpush1.msra.mxu0 0.0
    %839 = vmatprep.subr.mxu0 0.0
    %840 = vmatpush1.msra.mxu0 0.0
    %841 = vmatprep.subr.mxu0 0.0
    %842 = vmatpush1.msra.mxu0 0.0
    %843 = vmatprep.subr.mxu0 0.0
    %844 = vmatpush1.msra.mxu0 0.0
    %845 = vmatprep.subr.mxu0 0.0
    %846 = vmatpush1.msra.mxu0 0.0
    %847 = vmatprep.mubr.f32.mxu0 0.0
    %848 = vmatmul.mubr.f32.gmra.mrb[0].mxu0 %v469
    %v849 = vpop.f32.mrb[0].mxu0
    %v850 = vadd.f32 0.0, %v849
    %v851 = vpop.f32.mrb[0].mxu0
    %852 = vmatprep.mubr.f32.mxu0 0.0
    %853 = vmatmul.mubr.f32.gmra.mrb[0].mxu0 %v472
    %v854 = vpop.f32.mrb[0].mxu0
    %v855 = vadd.f32 0.0, %v854
    %v856 = vpop.f32.mrb[0].mxu0
    %857 = vdwg.mxu0
    %v859 = vlaneseq
    %v860 = vshrl.u32 %v859, 7
    %v861 = vsub.s32 0, %v860
    %v862 = vrot.slane %v465, %v861
    %864 = vmatprep.subr.mxu0 0.0
    %865 = vmatpush1.msra.mxu0 %v435
    %866 = vmatprep.subr.mxu0 0.0
    %867 = vmatpush1.msra.mxu0 %v436
    %868 = vmatprep.subr.mxu0 0.0
    %869 = vmatpush1.msra.mxu0 %v437
    %870 = vmatprep.subr.mxu0 0.0
    %871 = vmatpush1.msra.mxu0 %v438
    %872 = vmatprep.subr.mxu0 0.0
    %873 = vmatpush1.msra.mxu0 0.0
    %874 = vmatprep.subr.mxu0 0.0
    %875 = vmatpush1.msra.mxu0 0.0
    %876 = vmatprep.subr.mxu0 0.0
    %877 = vmatpush1.msra.mxu0 0.0
    %878 = vmatprep.subr.mxu0 0.0
    %879 = vmatpush1.msra.mxu0 0.0
    %880 = vmatprep.subr.mxu0 0.0
    %881 = vmatpush1.msra.mxu0 0.0
    %882 = vmatprep.subr.mxu0 0.0
    %883 = vmatpush1.msra.mxu0 0.0
    %884 = vmatprep.subr.mxu0 0.0
    %885 = vmatpush1.msra.mxu0 0.0
    %886 = vmatprep.subr.mxu0 0.0
    %887 = vmatpush1.msra.mxu0 0.0
    %888 = vmatprep.subr.mxu0 0.0
    %889 = vmatpush1.msra.mxu0 0.0
    %890 = vmatprep.subr.mxu0 0.0
    %891 = vmatpush1.msra.mxu0 0.0
    %892 = vmatprep.subr.mxu0 0.0
    %893 = vmatpush1.msra.mxu0 0.0
    %894 = vmatprep.subr.mxu0 0.0
    %895 = vmatpush1.msra.mxu0 0.0
    %896 = vmatprep.subr.mxu0 0.0
    %897 = vmatpush1.msra.mxu0 0.0
    %898 = vmatprep.subr.mxu0 0.0
    %899 = vmatpush1.msra.mxu0 0.0
    %900 = vmatprep.subr.mxu0 0.0
    %901 = vmatpush1.msra.mxu0 0.0
    %902 = vmatprep.subr.mxu0 0.0
    %903 = vmatpush1.msra.mxu0 0.0
    %904 = vmatprep.subr.mxu0 0.0
    %905 = vmatpush1.msra.mxu0 0.0
    %906 = vmatprep.subr.mxu0 0.0
    %907 = vmatpush1.msra.mxu0 0.0
    %908 = vmatprep.subr.mxu0 0.0
    %909 = vmatpush1.msra.mxu0 0.0
    %910 = vmatprep.subr.mxu0 0.0
    %911 = vmatpush1.msra.mxu0 0.0
    %912 = vmatprep.subr.mxu0 0.0
    %913 = vmatpush1.msra.mxu0 0.0
    %914 = vmatprep.subr.mxu0 0.0
    %915 = vmatpush1.msra.mxu0 0.0
    %916 = vmatprep.subr.mxu0 0.0
    %917 = vmatpush1.msra.mxu0 0.0
    %918 = vmatprep.subr.mxu0 0.0
    %919 = vmatpush1.msra.mxu0 0.0
    %920 = vmatprep.subr.mxu0 0.0
    %921 = vmatpush1.msra.mxu0 0.0
    %922 = vmatprep.subr.mxu0 0.0
    %923 = vmatpush1.msra.mxu0 0.0
    %924 = vmatprep.subr.mxu0 0.0
    %925 = vmatpush1.msra.mxu0 0.0
    %926 = vmatprep.subr.mxu0 0.0
    %927 = vmatpush1.msra.mxu0 0.0
    %928 = vmatprep.mubr.f32.mxu0 0.0
    %929 = vmatmul.mubr.f32.gmra.mrb[0].mxu0 %v560
    %v930 = vpop.f32.mrb[0].mxu0
    %v931 = vadd.f32 %v862, %v930
    %v932 = vpop.f32.mrb[0].mxu0
    %933 = vdwg.mxu0
    %934 = vmatprep.subr.mxu0 0.0
    %935 = vmatpush1.msra.mxu0 %v439
    %936 = vmatprep.subr.mxu0 0.0
    %937 = vmatpush1.msra.mxu0 %v440
    %938 = vmatprep.subr.mxu0 0.0
    %939 = vmatpush1.msra.mxu0 %v441
    %940 = vmatprep.subr.mxu0 0.0
    %941 = vmatpush1.msra.mxu0 %v442
    %942 = vmatprep.subr.mxu0 0.0
    %943 = vmatpush1.msra.mxu0 0.0
    %944 = vmatprep.subr.mxu0 0.0
    %945 = vmatpush1.msra.mxu0 0.0
    %946 = vmatprep.subr.mxu0 0.0
    %947 = vmatpush1.msra.mxu0 0.0
    %948 = vmatprep.subr.mxu0 0.0
    %949 = vmatpush1.msra.mxu0 0.0
    %950 = vmatprep.subr.mxu0 0.0
    %951 = vmatpush1.msra.mxu0 0.0
    %952 = vmatprep.subr.mxu0 0.0
    %953 = vmatpush1.msra.mxu0 0.0
    %954 = vmatprep.subr.mxu0 0.0
    %955 = vmatpush1.msra.mxu0 0.0
    %956 = vmatprep.subr.mxu0 0.0
    %957 = vmatpush1.msra.mxu0 0.0
    %958 = vmatprep.subr.mxu0 0.0
    %959 = vmatpush1.msra.mxu0 0.0
    %960 = vmatprep.subr.mxu0 0.0
    %961 = vmatpush1.msra.mxu0 0.0
    %962 = vmatprep.subr.mxu0 0.0
    %963 = vmatpush1.msra.mxu0 0.0
    %964 = vmatprep.subr.mxu0 0.0
    %965 = vmatpush1.msra.mxu0 0.0
    %966 = vmatprep.subr.mxu0 0.0
    %967 = vmatpush1.msra.mxu0 0.0
    %968 = vmatprep.subr.mxu0 0.0
    %969 = vmatpush1.msra.mxu0 0.0
    %970 = vmatprep.subr.mxu0 0.0
    %971 = vmatpush1.msra.mxu0 0.0
    %972 = vmatprep.subr.mxu0 0.0
    %973 = vmatpush1.msra.mxu0 0.0
    %974 = vmatprep.subr.mxu0 0.0
    %975 = vmatpush1.msra.mxu0 0.0
    %976 = vmatprep.subr.mxu0 0.0
    %977 = vmatpush1.msra.mxu0 0.0
    %978 = vmatprep.subr.mxu0 0.0
    %979 = vmatpush1.msra.mxu0 0.0
    %980 = vmatprep.subr.mxu0 0.0
    %981 = vmatpush1.msra.mxu0 0.0
    %982 = vmatprep.subr.mxu0 0.0
    %983 = vmatpush1.msra.mxu0 0.0
    %984 = vmatprep.subr.mxu0 0.0
    %985 = vmatpush1.msra.mxu0 0.0
    %986 = vmatprep.subr.mxu0 0.0
    %987 = vmatpush1.msra.mxu0 0.0
    %988 = vmatprep.subr.mxu0 0.0
    %989 = vmatpush1.msra.mxu0 0.0
    %990 = vmatprep.subr.mxu0 0.0
    %991 = vmatpush1.msra.mxu0 0.0
    %992 = vmatprep.subr.mxu0 0.0
    %993 = vmatpush1.msra.mxu0 0.0
    %994 = vmatprep.subr.mxu0 0.0
    %995 = vmatpush1.msra.mxu0 0.0
    %996 = vmatprep.subr.mxu0 0.0
    %997 = vmatpush1.msra.mxu0 0.0
    %998 = vmatprep.mubr.f32.mxu0 0.0
    %999 = vmatmul.mubr.f32.gmra.mrb[0].mxu0 %v469
    %v1000 = vpop.f32.mrb[0].mxu0
    %v1001 = vadd.f32 0.0, %v1000
    %v1002 = vpop.f32.mrb[0].mxu0
    %1003 = vmatprep.mubr.f32.mxu0 0.0
    %1004 = vmatmul.mubr.f32.gmra.mrb[0].mxu0 %v472
    %v1005 = vpop.f32.mrb[0].mxu0
    %v1006 = vadd.f32 0.0, %v1005
    %v1007 = vpop.f32.mrb[0].mxu0
    %1008 = vdwg.mxu0
    %v1010 = vlaneseq
    %v1011 = vshrl.u32 %v1010, 7
    %v1012 = vsub.s32 0, %v1011
    %v1013 = vrot.slane %v466, %v1012
    %1015 = vmatprep.subr.mxu0 0.0
    %1016 = vmatpush1.msra.mxu0 %v443
    %1017 = vmatprep.subr.mxu0 0.0
    %1018 = vmatpush1.msra.mxu0 %v444
    %1019 = vmatprep.subr.mxu0 0.0
    %1020 = vmatpush1.msra.mxu0 %v445
    %1021 = vmatprep.subr.mxu0 0.0
    %1022 = vmatpush1.msra.mxu0 %v446
    %1023 = vmatprep.subr.mxu0 0.0
    %1024 = vmatpush1.msra.mxu0 0.0
    %1025 = vmatprep.subr.mxu0 0.0
    %1026 = vmatpush1.msra.mxu0 0.0
    %1027 = vmatprep.subr.mxu0 0.0
    %1028 = vmatpush1.msra.mxu0 0.0
    %1029 = vmatprep.subr.mxu0 0.0
    %1030 = vmatpush1.msra.mxu0 0.0
    %1031 = vmatprep.subr.mxu0 0.0
    %1032 = vmatpush1.msra.mxu0 0.0
    %1033 = vmatprep.subr.mxu0 0.0
    %1034 = vmatpush1.msra.mxu0 0.0
    %1035 = vmatprep.subr.mxu0 0.0
    %1036 = vmatpush1.msra.mxu0 0.0
    %1037 = vmatprep.subr.mxu0 0.0
    %1038 = vmatpush1.msra.mxu0 0.0
    %1039 = vmatprep.subr.mxu0 0.0
    %1040 = vmatpush1.msra.mxu0 0.0
    %1041 = vmatprep.subr.mxu0 0.0
    %1042 = vmatpush1.msra.mxu0 0.0
    %1043 = vmatprep.subr.mxu0 0.0
    %1044 = vmatpush1.msra.mxu0 0.0
    %1045 = vmatprep.subr.mxu0 0.0
    %1046 = vmatpush1.msra.mxu0 0.0
    %1047 = vmatprep.subr.mxu0 0.0
    %1048 = vmatpush1.msra.mxu0 0.0
    %1049 = vmatprep.subr.mxu0 0.0
    %1050 = vmatpush1.msra.mxu0 0.0
    %1051 = vmatprep.subr.mxu0 0.0
    %1052 = vmatpush1.msra.mxu0 0.0
    %1053 = vmatprep.subr.mxu0 0.0
    %1054 = vmatpush1.msra.mxu0 0.0
    %1055 = vmatprep.subr.mxu0 0.0
    %1056 = vmatpush1.msra.mxu0 0.0
    %1057 = vmatprep.subr.mxu0 0.0
    %1058 = vmatpush1.msra.mxu0 0.0
    %1059 = vmatprep.subr.mxu0 0.0
    %1060 = vmatpush1.msra.mxu0 0.0
    %1061 = vmatprep.subr.mxu0 0.0
    %1062 = vmatpush1.msra.mxu0 0.0
    %1063 = vmatprep.subr.mxu0 0.0
    %1064 = vmatpush1.msra.mxu0 0.0
    %1065 = vmatprep.subr.mxu0 0.0
    %1066 = vmatpush1.msra.mxu0 0.0
    %1067 = vmatprep.subr.mxu0 0.0
    %1068 = vmatpush1.msra.mxu0 0.0
    %1069 = vmatprep.subr.mxu0 0.0
    %1070 = vmatpush1.msra.mxu0 0.0
    %1071 = vmatprep.subr.mxu0 0.0
    %1072 = vmatpush1.msra.mxu0 0.0
    %1073 = vmatprep.subr.mxu0 0.0
    %1074 = vmatpush1.msra.mxu0 0.0
    %1075 = vmatprep.subr.mxu0 0.0
    %1076 = vmatpush1.msra.mxu0 0.0
    %1077 = vmatprep.subr.mxu0 0.0
    %1078 = vmatpush1.msra.mxu0 0.0
    %1079 = vmatprep.mubr.f32.mxu0 0.0
    %1080 = vmatmul.mubr.f32.gmra.mrb[0].mxu0 %v560
    %v1081 = vpop.f32.mrb[0].mxu0
    %v1082 = vadd.f32 %v1013, %v1081
    %v1083 = vpop.f32.mrb[0].mxu0
    %1084 = vdwg.mxu0
    %v1085 = vld [vmem:[%s3] sm:$0x3]
    %v1086 = vld [vmem:[%s4] sm:$0x3]
    %v1087 = vadd.f32 %v541, %v629
    %v1089 = vsel %vm467, %v1085, 0
    %1091 = vmatprep.subr.mxu0 0.0
    %1092 = vmatpush1.msra.mxu0 %v447
    %1093 = vmatprep.subr.mxu0 0.0
    %1094 = vmatpush1.msra.mxu0 %v448
    %1095 = vmatprep.subr.mxu0 0.0
    %1096 = vmatpush1.msra.mxu0 %v449
    %1097 = vmatprep.subr.mxu0 0.0
    %1098 = vmatpush1.msra.mxu0 %v450
    %1099 = vmatprep.subr.mxu0 0.0
    %1100 = vmatpush1.msra.mxu0 0.0
    %1101 = vmatprep.subr.mxu0 0.0
    %1102 = vmatpush1.msra.mxu0 0.0
    %1103 = vmatprep.subr.mxu0 0.0
    %1104 = vmatpush1.msra.mxu0 0.0
    %1105 = vmatprep.subr.mxu0 0.0
    %1106 = vmatpush1.msra.mxu0 0.0
    %1107 = vmatprep.subr.mxu0 0.0
    %1108 = vmatpush1.msra.mxu0 0.0
    %1109 = vmatprep.subr.mxu0 0.0
    %1110 = vmatpush1.msra.mxu0 0.0
    %1111 = vmatprep.subr.mxu0 0.0
    %1112 = vmatpush1.msra.mxu0 0.0
    %1113 = vmatprep.subr.mxu0 0.0
    %1114 = vmatpush1.msra.mxu0 0.0
    %1115 = vmatprep.subr.mxu0 0.0
    %1116 = vmatpush1.msra.mxu0 0.0
    %1117 = vmatprep.subr.mxu0 0.0
    %1118 = vmatpush1.msra.mxu0 0.0
    %1119 = vmatprep.subr.mxu0 0.0
    %1120 = vmatpush1.msra.mxu0 0.0
    %1121 = vmatprep.subr.mxu0 0.0
    %1122 = vmatpush1.msra.mxu0 0.0
    %1123 = vmatprep.subr.mxu0 0.0
    %1124 = vmatpush1.msra.mxu0 0.0
    %1125 = vmatprep.subr.mxu0 0.0
    %1126 = vmatpush1.msra.mxu0 0.0
    %1127 = vmatprep.subr.mxu0 0.0
    %1128 = vmatpush1.msra.mxu0 0.0
    %1129 = vmatprep.subr.mxu0 0.0
    %1130 = vmatpush1.msra.mxu0 0.0
    %1131 = vmatprep.subr.mxu0 0.0
    %1132 = vmatpush1.msra.mxu0 0.0
    %1133 = vmatprep.subr.mxu0 0.0
    %1134 = vmatpush1.msra.mxu0 0.0
    %1135 = vmatprep.subr.mxu0 0.0
    %1136 = vmatpush1.msra.mxu0 0.0
    %1137 = vmatprep.subr.mxu0 0.0
    %1138 = vmatpush1.msra.mxu0 0.0
    %1139 = vmatprep.subr.mxu0 0.0
    %1140 = vmatpush1.msra.mxu0 0.0
    %1141 = vmatprep.subr.mxu0 0.0
    %1142 = vmatpush1.msra.mxu0 0.0
    %1143 = vmatprep.subr.mxu0 0.0
    %1144 = vmatpush1.msra.mxu0 0.0
    %1145 = vmatprep.subr.mxu0 0.0
    %1146 = vmatpush1.msra.mxu0 0.0
    %1147 = vmatprep.subr.mxu0 0.0
    %1148 = vmatpush1.msra.mxu0 0.0
    %1149 = vmatprep.subr.mxu0 0.0
    %1150 = vmatpush1.msra.mxu0 0.0
    %1151 = vmatprep.subr.mxu0 0.0
    %1152 = vmatpush1.msra.mxu0 0.0
    %1153 = vmatprep.subr.mxu0 0.0
    %1154 = vmatpush1.msra.mxu0 0.0
    %1155 = vmatprep.mubr.f32.mxu0 0.0
    %1156 = vmatmul.mubr.f32.gmra.mrb[0].mxu0 %v1089
    %v1157 = vpop.f32.mrb[0].mxu0
    %v1158 = vadd.f32 0.0, %v1157
    %v1159 = vpop.f32.mrb[0].mxu0
    %1160 = vdwg.mxu0
    %v1161 = vadd.f32 %v1087, %v1158
    %v1162 = vadd.f32 %v699, %v780
    %1163 = vmatprep.subr.mxu0 0.0
    %1164 = vmatpush1.msra.mxu0 %v451
    %1165 = vmatprep.subr.mxu0 0.0
    %1166 = vmatpush1.msra.mxu0 %v452
    %1167 = vmatprep.subr.mxu0 0.0
    %1168 = vmatpush1.msra.mxu0 %v453
    %1169 = vmatprep.subr.mxu0 0.0
    %1170 = vmatpush1.msra.mxu0 %v454
    %1171 = vmatprep.subr.mxu0 0.0
    %1172 = vmatpush1.msra.mxu0 0.0
    %1173 = vmatprep.subr.mxu0 0.0
    %1174 = vmatpush1.msra.mxu0 0.0
    %1175 = vmatprep.subr.mxu0 0.0
    %1176 = vmatpush1.msra.mxu0 0.0
    %1177 = vmatprep.subr.mxu0 0.0
    %1178 = vmatpush1.msra.mxu0 0.0
    %1179 = vmatprep.subr.mxu0 0.0
    %1180 = vmatpush1.msra.mxu0 0.0
    %1181 = vmatprep.subr.mxu0 0.0
    %1182 = vmatpush1.msra.mxu0 0.0
    %1183 = vmatprep.subr.mxu0 0.0
    %1184 = vmatpush1.msra.mxu0 0.0
    %1185 = vmatprep.subr.mxu0 0.0
    %1186 = vmatpush1.msra.mxu0 0.0
    %1187 = vmatprep.subr.mxu0 0.0
    %1188 = vmatpush1.msra.mxu0 0.0
    %1189 = vmatprep.subr.mxu0 0.0
    %1190 = vmatpush1.msra.mxu0 0.0
    %1191 = vmatprep.subr.mxu0 0.0
    %1192 = vmatpush1.msra.mxu0 0.0
    %1193 = vmatprep.subr.mxu0 0.0
    %1194 = vmatpush1.msra.mxu0 0.0
    %1195 = vmatprep.subr.mxu0 0.0
    %1196 = vmatpush1.msra.mxu0 0.0
    %1197 = vmatprep.subr.mxu0 0.0
    %1198 = vmatpush1.msra.mxu0 0.0
    %1199 = vmatprep.subr.mxu0 0.0
    %1200 = vmatpush1.msra.mxu0 0.0
    %1201 = vmatprep.subr.mxu0 0.0
    %1202 = vmatpush1.msra.mxu0 0.0
    %1203 = vmatprep.subr.mxu0 0.0
    %1204 = vmatpush1.msra.mxu0 0.0
    %1205 = vmatprep.subr.mxu0 0.0
    %1206 = vmatpush1.msra.mxu0 0.0
    %1207 = vmatprep.subr.mxu0 0.0
    %1208 = vmatpush1.msra.mxu0 0.0
    %1209 = vmatprep.subr.mxu0 0.0
    %1210 = vmatpush1.msra.mxu0 0.0
    %1211 = vmatprep.subr.mxu0 0.0
    %1212 = vmatpush1.msra.mxu0 0.0
    %1213 = vmatprep.subr.mxu0 0.0
    %1214 = vmatpush1.msra.mxu0 0.0
    %1215 = vmatprep.subr.mxu0 0.0
    %1216 = vmatpush1.msra.mxu0 0.0
    %1217 = vmatprep.subr.mxu0 0.0
    %1218 = vmatpush1.msra.mxu0 0.0
    %1219 = vmatprep.subr.mxu0 0.0
    %1220 = vmatpush1.msra.mxu0 0.0
    %1221 = vmatprep.subr.mxu0 0.0
    %1222 = vmatpush1.msra.mxu0 0.0
    %1223 = vmatprep.subr.mxu0 0.0
    %1224 = vmatpush1.msra.mxu0 0.0
    %1225 = vmatprep.subr.mxu0 0.0
    %1226 = vmatpush1.msra.mxu0 0.0
    %1227 = vmatprep.mubr.f32.mxu0 0.0
    %1228 = vmatmul.mubr.f32.gmra.mrb[0].mxu0 %v1089
    %v1229 = vpop.f32.mrb[0].mxu0
    %v1230 = vadd.f32 0.0, %v1229
    %v1231 = vpop.f32.mrb[0].mxu0
    %1232 = vdwg.mxu0
    %v1233 = vadd.f32 %v1162, %v1230
    %v1234 = vadd.f32 %v850, %v931
    %1235 = vmatprep.subr.mxu0 0.0
    %1236 = vmatpush1.msra.mxu0 %v455
    %1237 = vmatprep.subr.mxu0 0.0
    %1238 = vmatpush1.msra.mxu0 %v456
    %1239 = vmatprep.subr.mxu0 0.0
    %1240 = vmatpush1.msra.mxu0 %v457
    %1241 = vmatprep.subr.mxu0 0.0
    %1242 = vmatpush1.msra.mxu0 %v458
    %1243 = vmatprep.subr.mxu0 0.0
    %1244 = vmatpush1.msra.mxu0 0.0
    %1245 = vmatprep.subr.mxu0 0.0
    %1246 = vmatpush1.msra.mxu0 0.0
    %1247 = vmatprep.subr.mxu0 0.0
    %1248 = vmatpush1.msra.mxu0 0.0
    %1249 = vmatprep.subr.mxu0 0.0
    %1250 = vmatpush1.msra.mxu0 0.0
    %1251 = vmatprep.subr.mxu0 0.0
    %1252 = vmatpush1.msra.mxu0 0.0
    %1253 = vmatprep.subr.mxu0 0.0
    %1254 = vmatpush1.msra.mxu0 0.0
    %1255 = vmatprep.subr.mxu0 0.0
    %1256 = vmatpush1.msra.mxu0 0.0
    %1257 = vmatprep.subr.mxu0 0.0
    %1258 = vmatpush1.msra.mxu0 0.0
    %1259 = vmatprep.subr.mxu0 0.0
    %1260 = vmatpush1.msra.mxu0 0.0
    %1261 = vmatprep.subr.mxu0 0.0
    %1262 = vmatpush1.msra.mxu0 0.0
    %1263 = vmatprep.subr.mxu0 0.0
    %1264 = vmatpush1.msra.mxu0 0.0
    %1265 = vmatprep.subr.mxu0 0.0
    %1266 = vmatpush1.msra.mxu0 0.0
    %1267 = vmatprep.subr.mxu0 0.0
    %1268 = vmatpush1.msra.mxu0 0.0
    %1269 = vmatprep.subr.mxu0 0.0
    %1270 = vmatpush1.msra.mxu0 0.0
    %1271 = vmatprep.subr.mxu0 0.0
    %1272 = vmatpush1.msra.mxu0 0.0
    %1273 = vmatprep.subr.mxu0 0.0
    %1274 = vmatpush1.msra.mxu0 0.0
    %1275 = vmatprep.subr.mxu0 0.0
    %1276 = vmatpush1.msra.mxu0 0.0
    %1277 = vmatprep.subr.mxu0 0.0
    %1278 = vmatpush1.msra.mxu0 0.0
    %1279 = vmatprep.subr.mxu0 0.0
    %1280 = vmatpush1.msra.mxu0 0.0
    %1281 = vmatprep.subr.mxu0 0.0
    %1282 = vmatpush1.msra.mxu0 0.0
    %1283 = vmatprep.subr.mxu0 0.0
    %1284 = vmatpush1.msra.mxu0 0.0
    %1285 = vmatprep.subr.mxu0 0.0
    %1286 = vmatpush1.msra.mxu0 0.0
    %1287 = vmatprep.subr.mxu0 0.0
    %1288 = vmatpush1.msra.mxu0 0.0
    %1289 = vmatprep.subr.mxu0 0.0
    %1290 = vmatpush1.msra.mxu0 0.0
    %1291 = vmatprep.subr.mxu0 0.0
    %1292 = vmatpush1.msra.mxu0 0.0
    %1293 = vmatprep.subr.mxu0 0.0
    %1294 = vmatpush1.msra.mxu0 0.0
    %1295 = vmatprep.subr.mxu0 0.0
    %1296 = vmatpush1.msra.mxu0 0.0
    %1297 = vmatprep.subr.mxu0 0.0
    %1298 = vmatpush1.msra.mxu0 0.0
    %1299 = vmatprep.mubr.f32.mxu0 0.0
    %1300 = vmatmul.mubr.f32.gmra.mrb[0].mxu0 %v1089
    %v1301 = vpop.f32.mrb[0].mxu0
    %v1302 = vadd.f32 0.0, %v1301
    %v1303 = vpop.f32.mrb[0].mxu0
    %1304 = vdwg.mxu0
    %v1305 = vadd.f32 %v1234, %v1302
    %v1306 = vadd.f32 %v1001, %v1082
    %1307 = vmatprep.subr.mxu0 0.0
    %1308 = vmatpush1.msra.mxu0 %v459
    %1309 = vmatprep.subr.mxu0 0.0
    %1310 = vmatpush1.msra.mxu0 %v460
    %1311 = vmatprep.subr.mxu0 0.0
    %1312 = vmatpush1.msra.mxu0 %v461
    %1313 = vmatprep.subr.mxu0 0.0
    %1314 = vmatpush1.msra.mxu0 %v462
    %1315 = vmatprep.subr.mxu0 0.0
    %1316 = vmatpush1.msra.mxu0 0.0
    %1317 = vmatprep.subr.mxu0 0.0
    %1318 = vmatpush1.msra.mxu0 0.0
    %1319 = vmatprep.subr.mxu0 0.0
    %1320 = vmatpush1.msra.mxu0 0.0
    %1321 = vmatprep.subr.mxu0 0.0
    %1322 = vmatpush1.msra.mxu0 0.0
    %1323 = vmatprep.subr.mxu0 0.0
    %1324 = vmatpush1.msra.mxu0 0.0
    %1325 = vmatprep.subr.mxu0 0.0
    %1326 = vmatpush1.msra.mxu0 0.0
    %1327 = vmatprep.subr.mxu0 0.0
    %1328 = vmatpush1.msra.mxu0 0.0
    %1329 = vmatprep.subr.mxu0 0.0
    %1330 = vmatpush1.msra.mxu0 0.0
    %1331 = vmatprep.subr.mxu0 0.0
    %1332 = vmatpush1.msra.mxu0 0.0
    %1333 = vmatprep.subr.mxu0 0.0
    %1334 = vmatpush1.msra.mxu0 0.0
    %1335 = vmatprep.subr.mxu0 0.0
    %1336 = vmatpush1.msra.mxu0 0.0
    %1337 = vmatprep.subr.mxu0 0.0
    %1338 = vmatpush1.msra.mxu0 0.0
    %1339 = vmatprep.subr.mxu0 0.0
    %1340 = vmatpush1.msra.mxu0 0.0
    %1341 = vmatprep.subr.mxu0 0.0
    %1342 = vmatpush1.msra.mxu0 0.0
    %1343 = vmatprep.subr.mxu0 0.0
    %1344 = vmatpush1.msra.mxu0 0.0
    %1345 = vmatprep.subr.mxu0 0.0
    %1346 = vmatpush1.msra.mxu0 0.0
    %1347 = vmatprep.subr.mxu0 0.0
    %1348 = vmatpush1.msra.mxu0 0.0
    %1349 = vmatprep.subr.mxu0 0.0
    %1350 = vmatpush1.msra.mxu0 0.0
    %1351 = vmatprep.subr.mxu0 0.0
    %1352 = vmatpush1.msra.mxu0 0.0
    %1353 = vmatprep.subr.mxu0 0.0
    %1354 = vmatpush1.msra.mxu0 0.0
    %1355 = vmatprep.subr.mxu0 0.0
    %1356 = vmatpush1.msra.mxu0 0.0
    %1357 = vmatprep.subr.mxu0 0.0
    %1358 = vmatpush1.msra.mxu0 0.0
    %1359 = vmatprep.subr.mxu0 0.0
    %1360 = vmatpush1.msra.mxu0 0.0
    %1361 = vmatprep.subr.mxu0 0.0
    %1362 = vmatpush1.msra.mxu0 0.0
    %1363 = vmatprep.subr.mxu0 0.0
    %1364 = vmatpush1.msra.mxu0 0.0
    %1365 = vmatprep.subr.mxu0 0.0
    %1366 = vmatpush1.msra.mxu0 0.0
    %1367 = vmatprep.subr.mxu0 0.0
    %1368 = vmatpush1.msra.mxu0 0.0
    %1369 = vmatprep.subr.mxu0 0.0
    %1370 = vmatpush1.msra.mxu0 0.0
    %1371 = vmatprep.mubr.f32.mxu0 0.0
    %1372 = vmatmul.mubr.f32.gmra.mrb[0].mxu0 %v1089
    %v1373 = vpop.f32.mrb[0].mxu0
    %v1374 = vadd.f32 0.0, %v1373
    %v1375 = vpop.f32.mrb[0].mxu0
    %1376 = vdwg.mxu0
    %v1377 = vadd.f32 %v1306, %v1374
    %v1378 = vxor.u32 %v1161, 2147483648
    %v1379 = vmul.f32 %v1378, 1.442695
    %v1380 = vpow.pop %v1379
    %v1381 = vadd.f32 %v1380, 1.0
    %v1382 = vrcp.pop %v1381
    %v1383 = vmul.f32 1.0, %v1382
    %v1384 = vxor.u32 %v1233, 2147483648
    %v1385 = vmul.f32 %v1384, 1.442695
    %v1386 = vpow.pop %v1385
    %v1387 = vadd.f32 %v1386, 1.0
    %v1388 = vrcp.pop %v1387
    %v1389 = vmul.f32 1.0, %v1388
    %v1390 = vtanh.pop %v1305
    %v1391 = vxor.u32 %v1377, 2147483648
    %v1392 = vmul.f32 %v1391, 1.442695
    %v1393 = vpow.pop %v1392
    %v1394 = vadd.f32 %v1393, 1.0
    %v1395 = vrcp.pop %v1394
    %v1396 = vmul.f32 1.0, %v1395
    %v1397 = vmul.f32 %v1389, %v1086
    %v1398 = vmul.f32 %v1383, %v1390
    %v1399 = vadd.f32 %v1397, %v1398
    %v1400 = vtanh.pop %v1399
    %v1401 = vmul.f32 %v1396, %v1400
    %v1404 = vunpack.c.l.s4 1966171168
    %v1405 = vunpack.c.0.s8 %v1404
    %v1406 = vlaneseq
    %v1407 = vshrl.u32 %v1406, 7
    %v1408 = vsub.s32 %v1405, %v1407
    %v1409 = vrot.slane %v1401, %v1408
    %v1410 = vcombine.high %v1409, %v1409
    %v1412 = vunpack.c.l.s4 1966171168
    %v1413 = vunpack.c.0.s8 %v1412
    %v1414 = vlaneseq
    %v1415 = vshrl.u32 %v1414, 7
    %v1416 = vsub.s32 %v1413, %v1415
    %v1417 = vrot.slane %v1409, %v1416
    %v1419 = vunpack.c.l.s4 1966171168
    %v1420 = vunpack.c.0.s8 %v1419
    %v1421 = vlaneseq
    %v1422 = vshrl.u32 %v1421, 7
    %v1423 = vsub.s32 %v1420, %v1422
    %v1424 = vrot.slane %v1410, %v1423
    %vm1427 = vcmask 253952
    %1428 = vst.msk [vmem:[#allocation2] sm:$0x1] %vm1427, %v1417
    %1429 = vst.msk [vmem:[#allocation2 + $0x8] sm:$0x1] %vm1427, %v1424
    %v1431 = vrot.slane %v629, 6
    %v1433 = vadd.f32 %v541, %v1431
    %v1434 = vsel %vm467, %v1401, 0
    %1436 = vmatprep.subr.mxu0 0.0
    %1437 = vmatpush1.msra.mxu0 %v447
    %1438 = vmatprep.subr.mxu0 0.0
    %1439 = vmatpush1.msra.mxu0 %v448
    %1440 = vmatprep.subr.mxu0 0.0
    %1441 = vmatpush1.msra.mxu0 %v449
    %1442 = vmatprep.subr.mxu0 0.0
    %1443 = vmatpush1.msra.mxu0 %v450
    %1444 = vmatprep.subr.mxu0 0.0
    %1445 = vmatpush1.msra.mxu0 0.0
    %1446 = vmatprep.subr.mxu0 0.0
    %1447 = vmatpush1.msra.mxu0 0.0
    %1448 = vmatprep.subr.mxu0 0.0
    %1449 = vmatpush1.msra.mxu0 0.0
    %1450 = vmatprep.subr.mxu0 0.0
    %1451 = vmatpush1.msra.mxu0 0.0
    %1452 = vmatprep.subr.mxu0 0.0
    %1453 = vmatpush1.msra.mxu0 0.0
    %1454 = vmatprep.subr.mxu0 0.0
    %1455 = vmatpush1.msra.mxu0 0.0
    %1456 = vmatprep.subr.mxu0 0.0
    %1457 = vmatpush1.msra.mxu0 0.0
    %1458 = vmatprep.subr.mxu0 0.0
    %1459 = vmatpush1.msra.mxu0 0.0
    %1460 = vmatprep.subr.mxu0 0.0
    %1461 = vmatpush1.msra.mxu0 0.0
    %1462 = vmatprep.subr.mxu0 0.0
    %1463 = vmatpush1.msra.mxu0 0.0
    %1464 = vmatprep.subr.mxu0 0.0
    %1465 = vmatpush1.msra.mxu0 0.0
    %1466 = vmatprep.subr.mxu0 0.0
    %1467 = vmatpush1.msra.mxu0 0.0
    %1468 = vmatprep.subr.mxu0 0.0
    %1469 = vmatpush1.msra.mxu0 0.0
    %1470 = vmatprep.subr.mxu0 0.0
    %1471 = vmatpush1.msra.mxu0 0.0
    %1472 = vmatprep.subr.mxu0 0.0
    %1473 = vmatpush1.msra.mxu0 0.0
    %1474 = vmatprep.subr.mxu0 0.0
    %1475 = vmatpush1.msra.mxu0 0.0
    %1476 = vmatprep.subr.mxu0 0.0
    %1477 = vmatpush1.msra.mxu0 0.0
    %1478 = vmatprep.subr.mxu0 0.0
    %1479 = vmatpush1.msra.mxu0 0.0
    %1480 = vmatprep.subr.mxu0 0.0
    %1481 = vmatpush1.msra.mxu0 0.0
    %1482 = vmatprep.subr.mxu0 0.0
    %1483 = vmatpush1.msra.mxu0 0.0
    %1484 = vmatprep.subr.mxu0 0.0
    %1485 = vmatpush1.msra.mxu0 0.0
    %1486 = vmatprep.subr.mxu0 0.0
    %1487 = vmatpush1.msra.mxu0 0.0
    %1488 = vmatprep.subr.mxu0 0.0
    %1489 = vmatpush1.msra.mxu0 0.0
    %1490 = vmatprep.subr.mxu0 0.0
    %1491 = vmatpush1.msra.mxu0 0.0
    %1492 = vmatprep.subr.mxu0 0.0
    %1493 = vmatpush1.msra.mxu0 0.0
    %1494 = vmatprep.subr.mxu0 0.0
    %1495 = vmatpush1.msra.mxu0 0.0
    %1496 = vmatprep.subr.mxu0 0.0
    %1497 = vmatpush1.msra.mxu0 0.0
    %1498 = vmatprep.subr.mxu0 0.0
    %1499 = vmatpush1.msra.mxu0 0.0
    %1500 = vmatprep.mubr.f32.mxu0 0.0
    %1501 = vmatmul.mubr.f32.gmra.mrb[0].mxu0 %v1434
    %v1502 = vpop.f32.mrb[0].mxu0
    %v1503 = vadd.f32 0.0, %v1502
    %v1504 = vpop.f32.mrb[0].mxu0
    %1505 = vdwg.mxu0
    %v1507 = vrot.slane %v1503, 6
    %v1509 = vadd.f32 %v1433, %v1507
    %v1511 = vrot.slane %v780, 6
    %v1513 = vadd.f32 %v699, %v1511
    %1514 = vmatprep.subr.mxu0 0.0
    %1515 = vmatpush1.msra.mxu0 %v451
    %1516 = vmatprep.subr.mxu0 0.0
    %1517 = vmatpush1.msra.mxu0 %v452
    %1518 = vmatprep.subr.mxu0 0.0
    %1519 = vmatpush1.msra.mxu0 %v453
    %1520 = vmatprep.subr.mxu0 0.0
    %1521 = vmatpush1.msra.mxu0 %v454
    %1522 = vmatprep.subr.mxu0 0.0
    %1523 = vmatpush1.msra.mxu0 0.0
    %1524 = vmatprep.subr.mxu0 0.0
    %1525 = vmatpush1.msra.mxu0 0.0
    %1526 = vmatprep.subr.mxu0 0.0
    %1527 = vmatpush1.msra.mxu0 0.0
    %1528 = vmatprep.subr.mxu0 0.0
    %1529 = vmatpush1.msra.mxu0 0.0
    %1530 = vmatprep.subr.mxu0 0.0
    %1531 = vmatpush1.msra.mxu0 0.0
    %1532 = vmatprep.subr.mxu0 0.0
    %1533 = vmatpush1.msra.mxu0 0.0
    %1534 = vmatprep.subr.mxu0 0.0
    %1535 = vmatpush1.msra.mxu0 0.0
    %1536 = vmatprep.subr.mxu0 0.0
    %1537 = vmatpush1.msra.mxu0 0.0
    %1538 = vmatprep.subr.mxu0 0.0
    %1539 = vmatpush1.msra.mxu0 0.0
    %1540 = vmatprep.subr.mxu0 0.0
    %1541 = vmatpush1.msra.mxu0 0.0
    %1542 = vmatprep.subr.mxu0 0.0
    %1543 = vmatpush1.msra.mxu0 0.0
    %1544 = vmatprep.subr.mxu0 0.0
    %1545 = vmatpush1.msra.mxu0 0.0
    %1546 = vmatprep.subr.mxu0 0.0
    %1547 = vmatpush1.msra.mxu0 0.0
    %1548 = vmatprep.subr.mxu0 0.0
    %1549 = vmatpush1.msra.mxu0 0.0
    %1550 = vmatprep.subr.mxu0 0.0
    %1551 = vmatpush1.msra.mxu0 0.0
    %1552 = vmatprep.subr.mxu0 0.0
    %1553 = vmatpush1.msra.mxu0 0.0
    %1554 = vmatprep.subr.mxu0 0.0
    %1555 = vmatpush1.msra.mxu0 0.0
    %1556 = vmatprep.subr.mxu0 0.0
    %1557 = vmatpush1.msra.mxu0 0.0
    %1558 = vmatprep.subr.mxu0 0.0
    %1559 = vmatpush1.msra.mxu0 0.0
    %1560 = vmatprep.subr.mxu0 0.0
    %1561 = vmatpush1.msra.mxu0 0.0
    %1562 = vmatprep.subr.mxu0 0.0
    %1563 = vmatpush1.msra.mxu0 0.0
    %1564 = vmatprep.subr.mxu0 0.0
    %1565 = vmatpush1.msra.mxu0 0.0
    %1566 = vmatprep.subr.mxu0 0.0
    %1567 = vmatpush1.msra.mxu0 0.0
    %1568 = vmatprep.subr.mxu0 0.0
    %1569 = vmatpush1.msra.mxu0 0.0
    %1570 = vmatprep.subr.mxu0 0.0
    %1571 = vmatpush1.msra.mxu0 0.0
    %1572 = vmatprep.subr.mxu0 0.0
    %1573 = vmatpush1.msra.mxu0 0.0
    %1574 = vmatprep.subr.mxu0 0.0
    %1575 = vmatpush1.msra.mxu0 0.0
    %1576 = vmatprep.subr.mxu0 0.0
    %1577 = vmatpush1.msra.mxu0 0.0
    %1578 = vmatprep.mubr.f32.mxu0 0.0
    %1579 = vmatmul.mubr.f32.gmra.mrb[0].mxu0 %v1434
    %v1580 = vpop.f32.mrb[0].mxu0
    %v1581 = vadd.f32 0.0, %v1580
    %v1582 = vpop.f32.mrb[0].mxu0
    %1583 = vdwg.mxu0
    %v1585 = vrot.slane %v1581, 6
    %v1587 = vadd.f32 %v1513, %v1585
    %v1589 = vrot.slane %v931, 6
    %v1591 = vadd.f32 %v850, %v1589
    %1592 = vmatprep.subr.mxu0 0.0
    %1593 = vmatpush1.msra.mxu0 %v455
    %1594 = vmatprep.subr.mxu0 0.0
    %1595 = vmatpush1.msra.mxu0 %v456
    %1596 = vmatprep.subr.mxu0 0.0
    %1597 = vmatpush1.msra.mxu0 %v457
    %1598 = vmatprep.subr.mxu0 0.0
    %1599 = vmatpush1.msra.mxu0 %v458
    %1600 = vmatprep.subr.mxu0 0.0
    %1601 = vmatpush1.msra.mxu0 0.0
    %1602 = vmatprep.subr.mxu0 0.0
    %1603 = vmatpush1.msra.mxu0 0.0
    %1604 = vmatprep.subr.mxu0 0.0
    %1605 = vmatpush1.msra.mxu0 0.0
    %1606 = vmatprep.subr.mxu0 0.0
    %1607 = vmatpush1.msra.mxu0 0.0
    %1608 = vmatprep.subr.mxu0 0.0
    %1609 = vmatpush1.msra.mxu0 0.0
    %1610 = vmatprep.subr.mxu0 0.0
    %1611 = vmatpush1.msra.mxu0 0.0
    %1612 = vmatprep.subr.mxu0 0.0
    %1613 = vmatpush1.msra.mxu0 0.0
    %1614 = vmatprep.subr.mxu0 0.0
    %1615 = vmatpush1.msra.mxu0 0.0
    %1616 = vmatprep.subr.mxu0 0.0
    %1617 = vmatpush1.msra.mxu0 0.0
    %1618 = vmatprep.subr.mxu0 0.0
    %1619 = vmatpush1.msra.mxu0 0.0
    %1620 = vmatprep.subr.mxu0 0.0
    %1621 = vmatpush1.msra.mxu0 0.0
    %1622 = vmatprep.subr.mxu0 0.0
    %1623 = vmatpush1.msra.mxu0 0.0
    %1624 = vmatprep.subr.mxu0 0.0
    %1625 = vmatpush1.msra.mxu0 0.0
    %1626 = vmatprep.subr.mxu0 0.0
    %1627 = vmatpush1.msra.mxu0 0.0
    %1628 = vmatprep.subr.mxu0 0.0
    %1629 = vmatpush1.msra.mxu0 0.0
    %1630 = vmatprep.subr.mxu0 0.0
    %1631 = vmatpush1.msra.mxu0 0.0
    %1632 = vmatprep.subr.mxu0 0.0
    %1633 = vmatpush1.msra.mxu0 0.0
    %1634 = vmatprep.subr.mxu0 0.0
    %1635 = vmatpush1.msra.mxu0 0.0
    %1636 = vmatprep.subr.mxu0 0.0
    %1637 = vmatpush1.msra.mxu0 0.0
    %1638 = vmatprep.subr.mxu0 0.0
    %1639 = vmatpush1.msra.mxu0 0.0
    %1640 = vmatprep.subr.mxu0 0.0
    %1641 = vmatpush1.msra.mxu0 0.0
    %1642 = vmatprep.subr.mxu0 0.0
    %1643 = vmatpush1.msra.mxu0 0.0
    %1644 = vmatprep.subr.mxu0 0.0
    %1645 = vmatpush1.msra.mxu0 0.0
    %1646 = vmatprep.subr.mxu0 0.0
    %1647 = vmatpush1.msra.mxu0 0.0
    %1648 = vmatprep.subr.mxu0 0.0
    %1649 = vmatpush1.msra.mxu0 0.0
    %1650 = vmatprep.subr.mxu0 0.0
    %1651 = vmatpush1.msra.mxu0 0.0
    %1652 = vmatprep.subr.mxu0 0.0
    %1653 = vmatpush1.msra.mxu0 0.0
    %1654 = vmatprep.subr.mxu0 0.0
    %1655 = vmatpush1.msra.mxu0 0.0
    %1656 = vmatprep.mubr.f32.mxu0 0.0
    %1657 = vmatmul.mubr.f32.gmra.mrb[0].mxu0 %v1434
    %v1658 = vpop.f32.mrb[0].mxu0
    %v1659 = vadd.f32 0.0, %v1658
    %v1660 = vpop.f32.mrb[0].mxu0
    %1661 = vdwg.mxu0
    %v1663 = vrot.slane %v1659, 6
    %v1665 = vadd.f32 %v1591, %v1663
    %v1667 = vrot.slane %v1082, 6
    %v1669 = vadd.f32 %v1001, %v1667
    %1670 = vmatprep.subr.mxu0 0.0
    %1671 = vmatpush1.msra.mxu0 %v459
    %1672 = vmatprep.subr.mxu0 0.0
    %1673 = vmatpush1.msra.mxu0 %v460
    %1674 = vmatprep.subr.mxu0 0.0
    %1675 = vmatpush1.msra.mxu0 %v461
    %1676 = vmatprep.subr.mxu0 0.0
    %1677 = vmatpush1.msra.mxu0 %v462
    %1678 = vmatprep.subr.mxu0 0.0
    %1679 = vmatpush1.msra.mxu0 0.0
    %1680 = vmatprep.subr.mxu0 0.0
    %1681 = vmatpush1.msra.mxu0 0.0
    %1682 = vmatprep.subr.mxu0 0.0
    %1683 = vmatpush1.msra.mxu0 0.0
    %1684 = vmatprep.subr.mxu0 0.0
    %1685 = vmatpush1.msra.mxu0 0.0
    %1686 = vmatprep.subr.mxu0 0.0
    %1687 = vmatpush1.msra.mxu0 0.0
    %1688 = vmatprep.subr.mxu0 0.0
    %1689 = vmatpush1.msra.mxu0 0.0
    %1690 = vmatprep.subr.mxu0 0.0
    %1691 = vmatpush1.msra.mxu0 0.0
    %1692 = vmatprep.subr.mxu0 0.0
    %1693 = vmatpush1.msra.mxu0 0.0
    %1694 = vmatprep.subr.mxu0 0.0
    %1695 = vmatpush1.msra.mxu0 0.0
    %1696 = vmatprep.subr.mxu0 0.0
    %1697 = vmatpush1.msra.mxu0 0.0
    %1698 = vmatprep.subr.mxu0 0.0
    %1699 = vmatpush1.msra.mxu0 0.0
    %1700 = vmatprep.subr.mxu0 0.0
    %1701 = vmatpush1.msra.mxu0 0.0
    %1702 = vmatprep.subr.mxu0 0.0
    %1703 = vmatpush1.msra.mxu0 0.0
    %1704 = vmatprep.subr.mxu0 0.0
    %1705 = vmatpush1.msra.mxu0 0.0
    %1706 = vmatprep.subr.mxu0 0.0
    %1707 = vmatpush1.msra.mxu0 0.0
    %1708 = vmatprep.subr.mxu0 0.0
    %1709 = vmatpush1.msra.mxu0 0.0
    %1710 = vmatprep.subr.mxu0 0.0
    %1711 = vmatpush1.msra.mxu0 0.0
    %1712 = vmatprep.subr.mxu0 0.0
    %1713 = vmatpush1.msra.mxu0 0.0
    %1714 = vmatprep.subr.mxu0 0.0
    %1715 = vmatpush1.msra.mxu0 0.0
    %1716 = vmatprep.subr.mxu0 0.0
    %1717 = vmatpush1.msra.mxu0 0.0
    %1718 = vmatprep.subr.mxu0 0.0
    %1719 = vmatpush1.msra.mxu0 0.0
    %1720 = vmatprep.subr.mxu0 0.0
    %1721 = vmatpush1.msra.mxu0 0.0
    %1722 = vmatprep.subr.mxu0 0.0
    %1723 = vmatpush1.msra.mxu0 0.0
    %1724 = vmatprep.subr.mxu0 0.0
    %1725 = vmatpush1.msra.mxu0 0.0
    %1726 = vmatprep.subr.mxu0 0.0
    %1727 = vmatpush1.msra.mxu0 0.0
    %1728 = vmatprep.subr.mxu0 0.0
    %1729 = vmatpush1.msra.mxu0 0.0
    %1730 = vmatprep.subr.mxu0 0.0
    %1731 = vmatpush1.msra.mxu0 0.0
    %1732 = vmatprep.subr.mxu0 0.0
    %1733 = vmatpush1.msra.mxu0 0.0
    %1734 = vmatprep.mubr.f32.mxu0 0.0
    %1735 = vmatmul.mubr.f32.gmra.mrb[0].mxu0 %v1434
    %v1736 = vpop.f32.mrb[0].mxu0
    %v1737 = vadd.f32 0.0, %v1736
    %v1738 = vpop.f32.mrb[0].mxu0
    %1739 = vdwg.mxu0
    %v1741 = vrot.slane %v1737, 6
    %v1743 = vadd.f32 %v1669, %v1741
    %v1744 = vxor.u32 %v1509, 2147483648
    %v1745 = vmul.f32 %v1744, 1.442695
    %v1746 = vpow.pop %v1745
    %v1747 = vadd.f32 %v1746, 1.0
    %v1748 = vrcp.pop %v1747
    %v1749 = vmul.f32 1.0, %v1748
    %v1750 = vxor.u32 %v1587, 2147483648
    %v1751 = vmul.f32 %v1750, 1.442695
    %v1752 = vpow.pop %v1751
    %v1753 = vadd.f32 %v1752, 1.0
    %v1754 = vrcp.pop %v1753
    %v1755 = vmul.f32 1.0, %v1754
    %v1756 = vtanh.pop %v1665
    %v1757 = vxor.u32 %v1743, 2147483648
    %v1758 = vmul.f32 %v1757, 1.442695
    %v1759 = vpow.pop %v1758
    %v1760 = vadd.f32 %v1759, 1.0
    %v1761 = vrcp.pop %v1760
    %v1762 = vmul.f32 1.0, %v1761
    %v1764 = vrot.slane %v1399, 6
    %v1766 = vmul.f32 %v1755, %v1764
    %v1767 = vmul.f32 %v1749, %v1756
    %v1768 = vadd.f32 %v1766, %v1767
    %v1769 = vtanh.pop %v1768
    %v1770 = vmul.f32 %v1762, %v1769
    %v1773 = vunpack.c.l.s4 1966171168
    %v1774 = vunpack.c.0.s8 %v1773
    %v1775 = vlaneseq
    %v1776 = vshrl.u32 %v1775, 7
    %v1777 = vsub.s32 %v1774, %v1776
    %v1778 = vrot.slane %v1770, %v1777
    %v1779 = vcombine.high %v1778, %v1778
    %v1781 = vunpack.c.l.s4 1966171168
    %v1782 = vunpack.c.0.s8 %v1781
    %v1783 = vlaneseq
    %v1784 = vshrl.u32 %v1783, 7
    %v1785 = vsub.s32 %v1782, %v1784
    %v1786 = vrot.slane %v1778, %v1785
    %v1788 = vunpack.c.l.s4 1966171168
    %v1789 = vunpack.c.0.s8 %v1788
    %v1790 = vlaneseq
    %v1791 = vshrl.u32 %v1790, 7
    %v1792 = vsub.s32 %v1789, %v1791
    %v1793 = vrot.slane %v1779, %v1792
    %v1794 = vcombine.high %v1786, %v1786
    %v1795 = vcombine.high %v1793, %v1793
    %1798 = vst.msk [vmem:[#allocation2 + $0x1] sm:$0x1] %vm1427, %v1794
    %1799 = vst.msk [vmem:[#allocation2 + $0x9] sm:$0x1] %vm1427, %v1795
    %v1800 = vrot.slane %v629, 4
    %v1802 = vadd.f32 %v541, %v1800
    %v1803 = vrot.slane %v1770, 2
    %v1804 = vsel %vm467, %v1803, 0
    %1806 = vmatprep.subr.mxu0 0.0
    %1807 = vmatpush1.msra.mxu0 %v447
    %1808 = vmatprep.subr.mxu0 0.0
    %1809 = vmatpush1.msra.mxu0 %v448
    %1810 = vmatprep.subr.mxu0 0.0
    %1811 = vmatpush1.msra.mxu0 %v449
    %1812 = vmatprep.subr.mxu0 0.0
    %1813 = vmatpush1.msra.mxu0 %v450
    %1814 = vmatprep.subr.mxu0 0.0
    %1815 = vmatpush1.msra.mxu0 0.0
    %1816 = vmatprep.subr.mxu0 0.0
    %1817 = vmatpush1.msra.mxu0 0.0
    %1818 = vmatprep.subr.mxu0 0.0
    %1819 = vmatpush1.msra.mxu0 0.0
    %1820 = vmatprep.subr.mxu0 0.0
    %1821 = vmatpush1.msra.mxu0 0.0
    %1822 = vmatprep.subr.mxu0 0.0
    %1823 = vmatpush1.msra.mxu0 0.0
    %1824 = vmatprep.subr.mxu0 0.0
    %1825 = vmatpush1.msra.mxu0 0.0
    %1826 = vmatprep.subr.mxu0 0.0
    %1827 = vmatpush1.msra.mxu0 0.0
    %1828 = vmatprep.subr.mxu0 0.0
    %1829 = vmatpush1.msra.mxu0 0.0
    %1830 = vmatprep.subr.mxu0 0.0
    %1831 = vmatpush1.msra.mxu0 0.0
    %1832 = vmatprep.subr.mxu0 0.0
    %1833 = vmatpush1.msra.mxu0 0.0
    %1834 = vmatprep.subr.mxu0 0.0
    %1835 = vmatpush1.msra.mxu0 0.0
    %1836 = vmatprep.subr.mxu0 0.0
    %1837 = vmatpush1.msra.mxu0 0.0
    %1838 = vmatprep.subr.mxu0 0.0
    %1839 = vmatpush1.msra.mxu0 0.0
    %1840 = vmatprep.subr.mxu0 0.0
    %1841 = vmatpush1.msra.mxu0 0.0
    %1842 = vmatprep.subr.mxu0 0.0
    %1843 = vmatpush1.msra.mxu0 0.0
    %1844 = vmatprep.subr.mxu0 0.0
    %1845 = vmatpush1.msra.mxu0 0.0
    %1846 = vmatprep.subr.mxu0 0.0
    %1847 = vmatpush1.msra.mxu0 0.0
    %1848 = vmatprep.subr.mxu0 0.0
    %1849 = vmatpush1.msra.mxu0 0.0
    %1850 = vmatprep.subr.mxu0 0.0
    %1851 = vmatpush1.msra.mxu0 0.0
    %1852 = vmatprep.subr.mxu0 0.0
    %1853 = vmatpush1.msra.mxu0 0.0
    %1854 = vmatprep.subr.mxu0 0.0
    %1855 = vmatpush1.msra.mxu0 0.0
    %1856 = vmatprep.subr.mxu0 0.0
    %1857 = vmatpush1.msra.mxu0 0.0
    %1858 = vmatprep.subr.mxu0 0.0
    %1859 = vmatpush1.msra.mxu0 0.0
    %1860 = vmatprep.subr.mxu0 0.0
    %1861 = vmatpush1.msra.mxu0 0.0
    %1862 = vmatprep.subr.mxu0 0.0
    %1863 = vmatpush1.msra.mxu0 0.0
    %1864 = vmatprep.subr.mxu0 0.0
    %1865 = vmatpush1.msra.mxu0 0.0
    %1866 = vmatprep.subr.mxu0 0.0
    %1867 = vmatpush1.msra.mxu0 0.0
    %1868 = vmatprep.subr.mxu0 0.0
    %1869 = vmatpush1.msra.mxu0 0.0
    %1870 = vmatprep.mubr.f32.mxu0 0.0
    %1871 = vmatmul.mubr.f32.gmra.mrb[0].mxu0 %v1804
    %v1872 = vpop.f32.mrb[0].mxu0
    %v1873 = vadd.f32 0.0, %v1872
    %v1874 = vpop.f32.mrb[0].mxu0
    %1875 = vdwg.mxu0
    %v1877 = vrot.slane %v1873, 4
    %v1879 = vadd.f32 %v1802, %v1877
    %v1880 = vrot.slane %v780, 4
    %v1882 = vadd.f32 %v699, %v1880
    %1883 = vmatprep.subr.mxu0 0.0
    %1884 = vmatpush1.msra.mxu0 %v451
    %1885 = vmatprep.subr.mxu0 0.0
    %1886 = vmatpush1.msra.mxu0 %v452
    %1887 = vmatprep.subr.mxu0 0.0
    %1888 = vmatpush1.msra.mxu0 %v453
    %1889 = vmatprep.subr.mxu0 0.0
    %1890 = vmatpush1.msra.mxu0 %v454
    %1891 = vmatprep.subr.mxu0 0.0
    %1892 = vmatpush1.msra.mxu0 0.0
    %1893 = vmatprep.subr.mxu0 0.0
    %1894 = vmatpush1.msra.mxu0 0.0
    %1895 = vmatprep.subr.mxu0 0.0
    %1896 = vmatpush1.msra.mxu0 0.0
    %1897 = vmatprep.subr.mxu0 0.0
    %1898 = vmatpush1.msra.mxu0 0.0
    %1899 = vmatprep.subr.mxu0 0.0
    %1900 = vmatpush1.msra.mxu0 0.0
    %1901 = vmatprep.subr.mxu0 0.0
    %1902 = vmatpush1.msra.mxu0 0.0
    %1903 = vmatprep.subr.mxu0 0.0
    %1904 = vmatpush1.msra.mxu0 0.0
    %1905 = vmatprep.subr.mxu0 0.0
    %1906 = vmatpush1.msra.mxu0 0.0
    %1907 = vmatprep.subr.mxu0 0.0
    %1908 = vmatpush1.msra.mxu0 0.0
    %1909 = vmatprep.subr.mxu0 0.0
    %1910 = vmatpush1.msra.mxu0 0.0
    %1911 = vmatprep.subr.mxu0 0.0
    %1912 = vmatpush1.msra.mxu0 0.0
    %1913 = vmatprep.subr.mxu0 0.0
    %1914 = vmatpush1.msra.mxu0 0.0
    %1915 = vmatprep.subr.mxu0 0.0
    %1916 = vmatpush1.msra.mxu0 0.0
    %1917 = vmatprep.subr.mxu0 0.0
    %1918 = vmatpush1.msra.mxu0 0.0
    %1919 = vmatprep.subr.mxu0 0.0
    %1920 = vmatpush1.msra.mxu0 0.0
    %1921 = vmatprep.subr.mxu0 0.0
    %1922 = vmatpush1.msra.mxu0 0.0
    %1923 = vmatprep.subr.mxu0 0.0
    %1924 = vmatpush1.msra.mxu0 0.0
    %1925 = vmatprep.subr.mxu0 0.0
    %1926 = vmatpush1.msra.mxu0 0.0
    %1927 = vmatprep.subr.mxu0 0.0
    %1928 = vmatpush1.msra.mxu0 0.0
    %1929 = vmatprep.subr.mxu0 0.0
    %1930 = vmatpush1.msra.mxu0 0.0
    %1931 = vmatprep.subr.mxu0 0.0
    %1932 = vmatpush1.msra.mxu0 0.0
    %1933 = vmatprep.subr.mxu0 0.0
    %1934 = vmatpush1.msra.mxu0 0.0
    %1935 = vmatprep.subr.mxu0 0.0
    %1936 = vmatpush1.msra.mxu0 0.0
    %1937 = vmatprep.subr.mxu0 0.0
    %1938 = vmatpush1.msra.mxu0 0.0
    %1939 = vmatprep.subr.mxu0 0.0
    %1940 = vmatpush1.msra.mxu0 0.0
    %1941 = vmatprep.subr.mxu0 0.0
    %1942 = vmatpush1.msra.mxu0 0.0
    %1943 = vmatprep.subr.mxu0 0.0
    %1944 = vmatpush1.msra.mxu0 0.0
    %1945 = vmatprep.subr.mxu0 0.0
    %1946 = vmatpush1.msra.mxu0 0.0
    %1947 = vmatprep.mubr.f32.mxu0 0.0
    %1948 = vmatmul.mubr.f32.gmra.mrb[0].mxu0 %v1804
    %v1949 = vpop.f32.mrb[0].mxu0
    %v1950 = vadd.f32 0.0, %v1949
    %v1951 = vpop.f32.mrb[0].mxu0
    %1952 = vdwg.mxu0
    %v1954 = vrot.slane %v1950, 4
    %v1956 = vadd.f32 %v1882, %v1954
    %v1957 = vrot.slane %v931, 4
    %v1959 = vadd.f32 %v850, %v1957
    %1960 = vmatprep.subr.mxu0 0.0
    %1961 = vmatpush1.msra.mxu0 %v455
    %1962 = vmatprep.subr.mxu0 0.0
    %1963 = vmatpush1.msra.mxu0 %v456
    %1964 = vmatprep.subr.mxu0 0.0
    %1965 = vmatpush1.msra.mxu0 %v457
    %1966 = vmatprep.subr.mxu0 0.0
    %1967 = vmatpush1.msra.mxu0 %v458
    %1968 = vmatprep.subr.mxu0 0.0
    %1969 = vmatpush1.msra.mxu0 0.0
    %1970 = vmatprep.subr.mxu0 0.0
    %1971 = vmatpush1.msra.mxu0 0.0
    %1972 = vmatprep.subr.mxu0 0.0
    %1973 = vmatpush1.msra.mxu0 0.0
    %1974 = vmatprep.subr.mxu0 0.0
    %1975 = vmatpush1.msra.mxu0 0.0
    %1976 = vmatprep.subr.mxu0 0.0
    %1977 = vmatpush1.msra.mxu0 0.0
    %1978 = vmatprep.subr.mxu0 0.0
    %1979 = vmatpush1.msra.mxu0 0.0
    %1980 = vmatprep.subr.mxu0 0.0
    %1981 = vmatpush1.msra.mxu0 0.0
    %1982 = vmatprep.subr.mxu0 0.0
    %1983 = vmatpush1.msra.mxu0 0.0
    %1984 = vmatprep.subr.mxu0 0.0
    %1985 = vmatpush1.msra.mxu0 0.0
    %1986 = vmatprep.subr.mxu0 0.0
    %1987 = vmatpush1.msra.mxu0 0.0
    %1988 = vmatprep.subr.mxu0 0.0
    %1989 = vmatpush1.msra.mxu0 0.0
    %1990 = vmatprep.subr.mxu0 0.0
    %1991 = vmatpush1.msra.mxu0 0.0
    %1992 = vmatprep.subr.mxu0 0.0
    %1993 = vmatpush1.msra.mxu0 0.0
    %1994 = vmatprep.subr.mxu0 0.0
    %1995 = vmatpush1.msra.mxu0 0.0
    %1996 = vmatprep.subr.mxu0 0.0
    %1997 = vmatpush1.msra.mxu0 0.0
    %1998 = vmatprep.subr.mxu0 0.0
    %1999 = vmatpush1.msra.mxu0 0.0
    %2000 = vmatprep.subr.mxu0 0.0
    %2001 = vmatpush1.msra.mxu0 0.0
    %2002 = vmatprep.subr.mxu0 0.0
    %2003 = vmatpush1.msra.mxu0 0.0
    %2004 = vmatprep.subr.mxu0 0.0
    %2005 = vmatpush1.msra.mxu0 0.0
    %2006 = vmatprep.subr.mxu0 0.0
    %2007 = vmatpush1.msra.mxu0 0.0
    %2008 = vmatprep.subr.mxu0 0.0
    %2009 = vmatpush1.msra.mxu0 0.0
    %2010 = vmatprep.subr.mxu0 0.0
    %2011 = vmatpush1.msra.mxu0 0.0
    %2012 = vmatprep.subr.mxu0 0.0
    %2013 = vmatpush1.msra.mxu0 0.0
    %2014 = vmatprep.subr.mxu0 0.0
    %2015 = vmatpush1.msra.mxu0 0.0
    %2016 = vmatprep.subr.mxu0 0.0
    %2017 = vmatpush1.msra.mxu0 0.0
    %2018 = vmatprep.subr.mxu0 0.0
    %2019 = vmatpush1.msra.mxu0 0.0
    %2020 = vmatprep.subr.mxu0 0.0
    %2021 = vmatpush1.msra.mxu0 0.0
    %2022 = vmatprep.subr.mxu0 0.0
    %2023 = vmatpush1.msra.mxu0 0.0
    %2024 = vmatprep.mubr.f32.mxu0 0.0
    %2025 = vmatmul.mubr.f32.gmra.mrb[0].mxu0 %v1804
    %v2026 = vpop.f32.mrb[0].mxu0
    %v2027 = vadd.f32 0.0, %v2026
    %v2028 = vpop.f32.mrb[0].mxu0
    %2029 = vdwg.mxu0
    %v2031 = vrot.slane %v2027, 4
    %v2033 = vadd.f32 %v1959, %v2031
    %v2034 = vrot.slane %v1082, 4
    %v2036 = vadd.f32 %v1001, %v2034
    %2037 = vmatprep.subr.mxu0 0.0
    %2038 = vmatpush1.msra.mxu0 %v459
    %2039 = vmatprep.subr.mxu0 0.0
    %2040 = vmatpush1.msra.mxu0 %v460
    %2041 = vmatprep.subr.mxu0 0.0
    %2042 = vmatpush1.msra.mxu0 %v461
    %2043 = vmatprep.subr.mxu0 0.0
    %2044 = vmatpush1.msra.mxu0 %v462
    %2045 = vmatprep.subr.mxu0 0.0
    %2046 = vmatpush1.msra.mxu0 0.0
    %2047 = vmatprep.subr.mxu0 0.0
    %2048 = vmatpush1.msra.mxu0 0.0
    %2049 = vmatprep.subr.mxu0 0.0
    %2050 = vmatpush1.msra.mxu0 0.0
    %2051 = vmatprep.subr.mxu0 0.0
    %2052 = vmatpush1.msra.mxu0 0.0
    %2053 = vmatprep.subr.mxu0 0.0
    %2054 = vmatpush1.msra.mxu0 0.0
    %2055 = vmatprep.subr.mxu0 0.0
    %2056 = vmatpush1.msra.mxu0 0.0
    %2057 = vmatprep.subr.mxu0 0.0
    %2058 = vmatpush1.msra.mxu0 0.0
    %2059 = vmatprep.subr.mxu0 0.0
    %2060 = vmatpush1.msra.mxu0 0.0
    %2061 = vmatprep.subr.mxu0 0.0
    %2062 = vmatpush1.msra.mxu0 0.0
    %2063 = vmatprep.subr.mxu0 0.0
    %2064 = vmatpush1.msra.mxu0 0.0
    %2065 = vmatprep.subr.mxu0 0.0
    %2066 = vmatpush1.msra.mxu0 0.0
    %2067 = vmatprep.subr.mxu0 0.0
    %2068 = vmatpush1.msra.mxu0 0.0
    %2069 = vmatprep.subr.mxu0 0.0
    %2070 = vmatpush1.msra.mxu0 0.0
    %2071 = vmatprep.subr.mxu0 0.0
    %2072 = vmatpush1.msra.mxu0 0.0
    %2073 = vmatprep.subr.mxu0 0.0
    %2074 = vmatpush1.msra.mxu0 0.0
    %2075 = vmatprep.subr.mxu0 0.0
    %2076 = vmatpush1.msra.mxu0 0.0
    %2077 = vmatprep.subr.mxu0 0.0
    %2078 = vmatpush1.msra.mxu0 0.0
    %2079 = vmatprep.subr.mxu0 0.0
    %2080 = vmatpush1.msra.mxu0 0.0
    %2081 = vmatprep.subr.mxu0 0.0
    %2082 = vmatpush1.msra.mxu0 0.0
    %2083 = vmatprep.subr.mxu0 0.0
    %2084 = vmatpush1.msra.mxu0 0.0
    %2085 = vmatprep.subr.mxu0 0.0
    %2086 = vmatpush1.msra.mxu0 0.0
    %2087 = vmatprep.subr.mxu0 0.0
    %2088 = vmatpush1.msra.mxu0 0.0
    %2089 = vmatprep.subr.mxu0 0.0
    %2090 = vmatpush1.msra.mxu0 0.0
    %2091 = vmatprep.subr.mxu0 0.0
    %2092 = vmatpush1.msra.mxu0 0.0
    %2093 = vmatprep.subr.mxu0 0.0
    %2094 = vmatpush1.msra.mxu0 0.0
    %2095 = vmatprep.subr.mxu0 0.0
    %2096 = vmatpush1.msra.mxu0 0.0
    %2097 = vmatprep.subr.mxu0 0.0
    %2098 = vmatpush1.msra.mxu0 0.0
    %2099 = vmatprep.subr.mxu0 0.0
    %2100 = vmatpush1.msra.mxu0 0.0
    %2101 = vmatprep.mubr.f32.mxu0 0.0
    %2102 = vmatmul.mubr.f32.gmra.mrb[0].mxu0 %v1804
    %v2103 = vpop.f32.mrb[0].mxu0
    %v2104 = vadd.f32 0.0, %v2103
    %v2105 = vpop.f32.mrb[0].mxu0
    %2106 = vdwg.mxu0
    %v2108 = vrot.slane %v2104, 4
    %v2110 = vadd.f32 %v2036, %v2108
    %v2111 = vxor.u32 %v1879, 2147483648
    %v2112 = vmul.f32 %v2111, 1.442695
    %v2113 = vpow.pop %v2112
    %v2114 = vadd.f32 %v2113, 1.0
    %v2115 = vrcp.pop %v2114
    %v2116 = vmul.f32 1.0, %v2115
    %v2117 = vxor.u32 %v1956, 2147483648
    %v2118 = vmul.f32 %v2117, 1.442695
    %v2119 = vpow.pop %v2118
    %v2120 = vadd.f32 %v2119, 1.0
    %v2121 = vrcp.pop %v2120
    %v2122 = vmul.f32 1.0, %v2121
    %v2123 = vtanh.pop %v2033
    %v2124 = vxor.u32 %v2110, 2147483648
    %v2125 = vmul.f32 %v2124, 1.442695
    %v2126 = vpow.pop %v2125
    %v2127 = vadd.f32 %v2126, 1.0
    %v2128 = vrcp.pop %v2127
    %v2129 = vmul.f32 1.0, %v2128
    %v2131 = vrot.slane %v1768, 6
    %v2133 = vmul.f32 %v2122, %v2131
    %v2134 = vmul.f32 %v2116, %v2123
    %v2135 = vadd.f32 %v2133, %v2134
    %v2136 = vtanh.pop %v2135
    %v2137 = vmul.f32 %v2129, %v2136
    %v2139 = vcombine.high %v2137, %v2137
    %v2141 = vunpack.c.l.s4 1966171168
    %v2142 = vunpack.c.0.s8 %v2141
    %v2143 = vlaneseq
    %v2144 = vshrl.u32 %v2143, 7
    %v2145 = vsub.s32 %v2142, %v2144
    %v2146 = vrot.slane %v2139, %v2145
    %v2147 = vcombine.high %v2146, %v2146
    %v2149 = vunpack.c.l.s4 1966171168
    %v2150 = vunpack.c.0.s8 %v2149
    %v2151 = vlaneseq
    %v2152 = vshrl.u32 %v2151, 7
    %v2153 = vsub.s32 %v2150, %v2152
    %v2154 = vrot.slane %v2146, %v2153
    %v2156 = vunpack.c.l.s4 1966171168
    %v2157 = vunpack.c.0.s8 %v2156
    %v2158 = vlaneseq
    %v2159 = vshrl.u32 %v2158, 7
    %v2160 = vsub.s32 %v2157, %v2159
    %v2161 = vrot.slane %v2147, %v2160
    %2164 = vst.msk [vmem:[#allocation2 + $0x2] sm:$0x1] %vm1427, %v2154
    %2165 = vst.msk [vmem:[#allocation2 + $0xa] sm:$0x1] %vm1427, %v2161
    %v2166 = vrot.slane %v629, 2
    %v2168 = vadd.f32 %v541, %v2166
    %v2169 = vrot.slane %v2137, 4
    %v2170 = vsel %vm467, %v2169, 0
    %2172 = vmatprep.subr.mxu0 0.0
    %2173 = vmatpush1.msra.mxu0 %v447
    %2174 = vmatprep.subr.mxu0 0.0
    %2175 = vmatpush1.msra.mxu0 %v448
    %2176 = vmatprep.subr.mxu0 0.0
    %2177 = vmatpush1.msra.mxu0 %v449
    %2178 = vmatprep.subr.mxu0 0.0
    %2179 = vmatpush1.msra.mxu0 %v450
    %2180 = vmatprep.subr.mxu0 0.0
    %2181 = vmatpush1.msra.mxu0 0.0
    %2182 = vmatprep.subr.mxu0 0.0
    %2183 = vmatpush1.msra.mxu0 0.0
    %2184 = vmatprep.subr.mxu0 0.0
    %2185 = vmatpush1.msra.mxu0 0.0
    %2186 = vmatprep.subr.mxu0 0.0
    %2187 = vmatpush1.msra.mxu0 0.0
    %2188 = vmatprep.subr.mxu0 0.0
    %2189 = vmatpush1.msra.mxu0 0.0
    %2190 = vmatprep.subr.mxu0 0.0
    %2191 = vmatpush1.msra.mxu0 0.0
    %2192 = vmatprep.subr.mxu0 0.0
    %2193 = vmatpush1.msra.mxu0 0.0
    %2194 = vmatprep.subr.mxu0 0.0
    %2195 = vmatpush1.msra.mxu0 0.0
    %2196 = vmatprep.subr.mxu0 0.0
    %2197 = vmatpush1.msra.mxu0 0.0
    %2198 = vmatprep.subr.mxu0 0.0
    %2199 = vmatpush1.msra.mxu0 0.0
    %2200 = vmatprep.subr.mxu0 0.0
    %2201 = vmatpush1.msra.mxu0 0.0
    %2202 = vmatprep.subr.mxu0 0.0
    %2203 = vmatpush1.msra.mxu0 0.0
    %2204 = vmatprep.subr.mxu0 0.0
    %2205 = vmatpush1.msra.mxu0 0.0
    %2206 = vmatprep.subr.mxu0 0.0
    %2207 = vmatpush1.msra.mxu0 0.0
    %2208 = vmatprep.subr.mxu0 0.0
    %2209 = vmatpush1.msra.mxu0 0.0
    %2210 = vmatprep.subr.mxu0 0.0
    %2211 = vmatpush1.msra.mxu0 0.0
    %2212 = vmatprep.subr.mxu0 0.0
    %2213 = vmatpush1.msra.mxu0 0.0
    %2214 = vmatprep.subr.mxu0 0.0
    %2215 = vmatpush1.msra.mxu0 0.0
    %2216 = vmatprep.subr.mxu0 0.0
    %2217 = vmatpush1.msra.mxu0 0.0
    %2218 = vmatprep.subr.mxu0 0.0
    %2219 = vmatpush1.msra.mxu0 0.0
    %2220 = vmatprep.subr.mxu0 0.0
    %2221 = vmatpush1.msra.mxu0 0.0
    %2222 = vmatprep.subr.mxu0 0.0
    %2223 = vmatpush1.msra.mxu0 0.0
    %2224 = vmatprep.subr.mxu0 0.0
    %2225 = vmatpush1.msra.mxu0 0.0
    %2226 = vmatprep.subr.mxu0 0.0
    %2227 = vmatpush1.msra.mxu0 0.0
    %2228 = vmatprep.subr.mxu0 0.0
    %2229 = vmatpush1.msra.mxu0 0.0
    %2230 = vmatprep.subr.mxu0 0.0
    %2231 = vmatpush1.msra.mxu0 0.0
    %2232 = vmatprep.subr.mxu0 0.0
    %2233 = vmatpush1.msra.mxu0 0.0
    %2234 = vmatprep.subr.mxu0 0.0
    %2235 = vmatpush1.msra.mxu0 0.0
    %2236 = vmatprep.mubr.f32.mxu0 0.0
    %2237 = vmatmul.mubr.f32.gmra.mrb[0].mxu0 %v2170
    %v2238 = vpop.f32.mrb[0].mxu0
    %v2239 = vadd.f32 0.0, %v2238
    %v2240 = vpop.f32.mrb[0].mxu0
    %2241 = vdwg.mxu0
    %v2243 = vrot.slane %v2239, 2
    %v2245 = vadd.f32 %v2168, %v2243
    %v2246 = vrot.slane %v780, 2
    %v2248 = vadd.f32 %v699, %v2246
    %2249 = vmatprep.subr.mxu0 0.0
    %2250 = vmatpush1.msra.mxu0 %v451
    %2251 = vmatprep.subr.mxu0 0.0
    %2252 = vmatpush1.msra.mxu0 %v452
    %2253 = vmatprep.subr.mxu0 0.0
    %2254 = vmatpush1.msra.mxu0 %v453
    %2255 = vmatprep.subr.mxu0 0.0
    %2256 = vmatpush1.msra.mxu0 %v454
    %2257 = vmatprep.subr.mxu0 0.0
    %2258 = vmatpush1.msra.mxu0 0.0
    %2259 = vmatprep.subr.mxu0 0.0
    %2260 = vmatpush1.msra.mxu0 0.0
    %2261 = vmatprep.subr.mxu0 0.0
    %2262 = vmatpush1.msra.mxu0 0.0
    %2263 = vmatprep.subr.mxu0 0.0
    %2264 = vmatpush1.msra.mxu0 0.0
    %2265 = vmatprep.subr.mxu0 0.0
    %2266 = vmatpush1.msra.mxu0 0.0
    %2267 = vmatprep.subr.mxu0 0.0
    %2268 = vmatpush1.msra.mxu0 0.0
    %2269 = vmatprep.subr.mxu0 0.0
    %2270 = vmatpush1.msra.mxu0 0.0
    %2271 = vmatprep.subr.mxu0 0.0
    %2272 = vmatpush1.msra.mxu0 0.0
    %2273 = vmatprep.subr.mxu0 0.0
    %2274 = vmatpush1.msra.mxu0 0.0
    %2275 = vmatprep.subr.mxu0 0.0
    %2276 = vmatpush1.msra.mxu0 0.0
    %2277 = vmatprep.subr.mxu0 0.0
    %2278 = vmatpush1.msra.mxu0 0.0
    %2279 = vmatprep.subr.mxu0 0.0
    %2280 = vmatpush1.msra.mxu0 0.0
    %2281 = vmatprep.subr.mxu0 0.0
    %2282 = vmatpush1.msra.mxu0 0.0
    %2283 = vmatprep.subr.mxu0 0.0
    %2284 = vmatpush1.msra.mxu0 0.0
    %2285 = vmatprep.subr.mxu0 0.0
    %2286 = vmatpush1.msra.mxu0 0.0
    %2287 = vmatprep.subr.mxu0 0.0
    %2288 = vmatpush1.msra.mxu0 0.0
    %2289 = vmatprep.subr.mxu0 0.0
    %2290 = vmatpush1.msra.mxu0 0.0
    %2291 = vmatprep.subr.mxu0 0.0
    %2292 = vmatpush1.msra.mxu0 0.0
    %2293 = vmatprep.subr.mxu0 0.0
    %2294 = vmatpush1.msra.mxu0 0.0
    %2295 = vmatprep.subr.mxu0 0.0
    %2296 = vmatpush1.msra.mxu0 0.0
    %2297 = vmatprep.subr.mxu0 0.0
    %2298 = vmatpush1.msra.mxu0 0.0
    %2299 = vmatprep.subr.mxu0 0.0
    %2300 = vmatpush1.msra.mxu0 0.0
    %2301 = vmatprep.subr.mxu0 0.0
    %2302 = vmatpush1.msra.mxu0 0.0
    %2303 = vmatprep.subr.mxu0 0.0
    %2304 = vmatpush1.msra.mxu0 0.0
    %2305 = vmatprep.subr.mxu0 0.0
    %2306 = vmatpush1.msra.mxu0 0.0
    %2307 = vmatprep.subr.mxu0 0.0
    %2308 = vmatpush1.msra.mxu0 0.0
    %2309 = vmatprep.subr.mxu0 0.0
    %2310 = vmatpush1.msra.mxu0 0.0
    %2311 = vmatprep.subr.mxu0 0.0
    %2312 = vmatpush1.msra.mxu0 0.0
    %2313 = vmatprep.mubr.f32.mxu0 0.0
    %2314 = vmatmul.mubr.f32.gmra.mrb[0].mxu0 %v2170
    %v2315 = vpop.f32.mrb[0].mxu0
    %v2316 = vadd.f32 0.0, %v2315
    %v2317 = vpop.f32.mrb[0].mxu0
    %2318 = vdwg.mxu0
    %v2320 = vrot.slane %v2316, 2
    %v2322 = vadd.f32 %v2248, %v2320
    %v2323 = vrot.slane %v931, 2
    %v2325 = vadd.f32 %v850, %v2323
    %2326 = vmatprep.subr.mxu0 0.0
    %2327 = vmatpush1.msra.mxu0 %v455
    %2328 = vmatprep.subr.mxu0 0.0
    %2329 = vmatpush1.msra.mxu0 %v456
    %2330 = vmatprep.subr.mxu0 0.0
    %2331 = vmatpush1.msra.mxu0 %v457
    %2332 = vmatprep.subr.mxu0 0.0
    %2333 = vmatpush1.msra.mxu0 %v458
    %2334 = vmatprep.subr.mxu0 0.0
    %2335 = vmatpush1.msra.mxu0 0.0
    %2336 = vmatprep.subr.mxu0 0.0
    %2337 = vmatpush1.msra.mxu0 0.0
    %2338 = vmatprep.subr.mxu0 0.0
    %2339 = vmatpush1.msra.mxu0 0.0
    %2340 = vmatprep.subr.mxu0 0.0
    %2341 = vmatpush1.msra.mxu0 0.0
    %2342 = vmatprep.subr.mxu0 0.0
    %2343 = vmatpush1.msra.mxu0 0.0
    %2344 = vmatprep.subr.mxu0 0.0
    %2345 = vmatpush1.msra.mxu0 0.0
    %2346 = vmatprep.subr.mxu0 0.0
    %2347 = vmatpush1.msra.mxu0 0.0
    %2348 = vmatprep.subr.mxu0 0.0
    %2349 = vmatpush1.msra.mxu0 0.0
    %2350 = vmatprep.subr.mxu0 0.0
    %2351 = vmatpush1.msra.mxu0 0.0
    %2352 = vmatprep.subr.mxu0 0.0
    %2353 = vmatpush1.msra.mxu0 0.0
    %2354 = vmatprep.subr.mxu0 0.0
    %2355 = vmatpush1.msra.mxu0 0.0
    %2356 = vmatprep.subr.mxu0 0.0
    %2357 = vmatpush1.msra.mxu0 0.0
    %2358 = vmatprep.subr.mxu0 0.0
    %2359 = vmatpush1.msra.mxu0 0.0
    %2360 = vmatprep.subr.mxu0 0.0
    %2361 = vmatpush1.msra.mxu0 0.0
    %2362 = vmatprep.subr.mxu0 0.0
    %2363 = vmatpush1.msra.mxu0 0.0
    %2364 = vmatprep.subr.mxu0 0.0
    %2365 = vmatpush1.msra.mxu0 0.0
    %2366 = vmatprep.subr.mxu0 0.0
    %2367 = vmatpush1.msra.mxu0 0.0
    %2368 = vmatprep.subr.mxu0 0.0
    %2369 = vmatpush1.msra.mxu0 0.0
    %2370 = vmatprep.subr.mxu0 0.0
    %2371 = vmatpush1.msra.mxu0 0.0
    %2372 = vmatprep.subr.mxu0 0.0
    %2373 = vmatpush1.msra.mxu0 0.0
    %2374 = vmatprep.subr.mxu0 0.0
    %2375 = vmatpush1.msra.mxu0 0.0
    %2376 = vmatprep.subr.mxu0 0.0
    %2377 = vmatpush1.msra.mxu0 0.0
    %2378 = vmatprep.subr.mxu0 0.0
    %2379 = vmatpush1.msra.mxu0 0.0
    %2380 = vmatprep.subr.mxu0 0.0
    %2381 = vmatpush1.msra.mxu0 0.0
    %2382 = vmatprep.subr.mxu0 0.0
    %2383 = vmatpush1.msra.mxu0 0.0
    %2384 = vmatprep.subr.mxu0 0.0
    %2385 = vmatpush1.msra.mxu0 0.0
    %2386 = vmatprep.subr.mxu0 0.0
    %2387 = vmatpush1.msra.mxu0 0.0
    %2388 = vmatprep.subr.mxu0 0.0
    %2389 = vmatpush1.msra.mxu0 0.0
    %2390 = vmatprep.mubr.f32.mxu0 0.0
    %2391 = vmatmul.mubr.f32.gmra.mrb[0].mxu0 %v2170
    %v2392 = vpop.f32.mrb[0].mxu0
    %v2393 = vadd.f32 0.0, %v2392
    %v2394 = vpop.f32.mrb[0].mxu0
    %2395 = vdwg.mxu0
    %v2397 = vrot.slane %v2393, 2
    %v2399 = vadd.f32 %v2325, %v2397
    %v2400 = vrot.slane %v1082, 2
    %v2402 = vadd.f32 %v1001, %v2400
    %2403 = vmatprep.subr.mxu0 0.0
    %2404 = vmatpush1.msra.mxu0 %v459
    %2405 = vmatprep.subr.mxu0 0.0
    %2406 = vmatpush1.msra.mxu0 %v460
    %2407 = vmatprep.subr.mxu0 0.0
    %2408 = vmatpush1.msra.mxu0 %v461
    %2409 = vmatprep.subr.mxu0 0.0
    %2410 = vmatpush1.msra.mxu0 %v462
    %2411 = vmatprep.subr.mxu0 0.0
    %2412 = vmatpush1.msra.mxu0 0.0
    %2413 = vmatprep.subr.mxu0 0.0
    %2414 = vmatpush1.msra.mxu0 0.0
    %2415 = vmatprep.subr.mxu0 0.0
    %2416 = vmatpush1.msra.mxu0 0.0
    %2417 = vmatprep.subr.mxu0 0.0
    %2418 = vmatpush1.msra.mxu0 0.0
    %2419 = vmatprep.subr.mxu0 0.0
    %2420 = vmatpush1.msra.mxu0 0.0
    %2421 = vmatprep.subr.mxu0 0.0
    %2422 = vmatpush1.msra.mxu0 0.0
    %2423 = vmatprep.subr.mxu0 0.0
    %2424 = vmatpush1.msra.mxu0 0.0
    %2425 = vmatprep.subr.mxu0 0.0
    %2426 = vmatpush1.msra.mxu0 0.0
    %2427 = vmatprep.subr.mxu0 0.0
    %2428 = vmatpush1.msra.mxu0 0.0
    %2429 = vmatprep.subr.mxu0 0.0
    %2430 = vmatpush1.msra.mxu0 0.0
    %2431 = vmatprep.subr.mxu0 0.0
    %2432 = vmatpush1.msra.mxu0 0.0
    %2433 = vmatprep.subr.mxu0 0.0
    %2434 = vmatpush1.msra.mxu0 0.0
    %2435 = vmatprep.subr.mxu0 0.0
    %2436 = vmatpush1.msra.mxu0 0.0
    %2437 = vmatprep.subr.mxu0 0.0
    %2438 = vmatpush1.msra.mxu0 0.0
    %2439 = vmatprep.subr.mxu0 0.0
    %2440 = vmatpush1.msra.mxu0 0.0
    %2441 = vmatprep.subr.mxu0 0.0
    %2442 = vmatpush1.msra.mxu0 0.0
    %2443 = vmatprep.subr.mxu0 0.0
    %2444 = vmatpush1.msra.mxu0 0.0
    %2445 = vmatprep.subr.mxu0 0.0
    %2446 = vmatpush1.msra.mxu0 0.0
    %2447 = vmatprep.subr.mxu0 0.0
    %2448 = vmatpush1.msra.mxu0 0.0
    %2449 = vmatprep.subr.mxu0 0.0
    %2450 = vmatpush1.msra.mxu0 0.0
    %2451 = vmatprep.subr.mxu0 0.0
    %2452 = vmatpush1.msra.mxu0 0.0
    %2453 = vmatprep.subr.mxu0 0.0
    %2454 = vmatpush1.msra.mxu0 0.0
    %2455 = vmatprep.subr.mxu0 0.0
    %2456 = vmatpush1.msra.mxu0 0.0
    %2457 = vmatprep.subr.mxu0 0.0
    %2458 = vmatpush1.msra.mxu0 0.0
    %2459 = vmatprep.subr.mxu0 0.0
    %2460 = vmatpush1.msra.mxu0 0.0
    %2461 = vmatprep.subr.mxu0 0.0
    %2462 = vmatpush1.msra.mxu0 0.0
    %2463 = vmatprep.subr.mxu0 0.0
    %2464 = vmatpush1.msra.mxu0 0.0
    %2465 = vmatprep.subr.mxu0 0.0
    %2466 = vmatpush1.msra.mxu0 0.0
    %2467 = vmatprep.mubr.f32.mxu0 0.0
    %2468 = vmatmul.mubr.f32.gmra.mrb[0].mxu0 %v2170
    %v2469 = vpop.f32.mrb[0].mxu0
    %v2470 = vadd.f32 0.0, %v2469
    %v2471 = vpop.f32.mrb[0].mxu0
    %2472 = vdwg.mxu0
    %v2474 = vrot.slane %v2470, 2
    %v2476 = vadd.f32 %v2402, %v2474
    %v2477 = vxor.u32 %v2245, 2147483648
    %v2478 = vmul.f32 %v2477, 1.442695
    %v2479 = vpow.pop %v2478
    %v2480 = vadd.f32 %v2479, 1.0
    %v2481 = vrcp.pop %v2480
    %v2482 = vmul.f32 1.0, %v2481
    %v2483 = vxor.u32 %v2322, 2147483648
    %v2484 = vmul.f32 %v2483, 1.442695
    %v2485 = vpow.pop %v2484
    %v2486 = vadd.f32 %v2485, 1.0
    %v2487 = vrcp.pop %v2486
    %v2488 = vmul.f32 1.0, %v2487
    %v2489 = vtanh.pop %v2399
    %v2490 = vxor.u32 %v2476, 2147483648
    %v2491 = vmul.f32 %v2490, 1.442695
    %v2492 = vpow.pop %v2491
    %v2493 = vadd.f32 %v2492, 1.0
    %v2494 = vrcp.pop %v2493
    %v2495 = vmul.f32 1.0, %v2494
    %v2497 = vrot.slane %v2135, 6
    %v2499 = vmul.f32 %v2488, %v2497
    %v2500 = vmul.f32 %v2482, %v2489
    %v2501 = vadd.f32 %v2499, %v2500
    %v2502 = vtanh.pop %v2501
    %v2503 = vmul.f32 %v2495, %v2502
    %v2505 = vcombine.high %v2503, %v2503
    %v2507 = vunpack.c.l.s4 1966171168
    %v2508 = vunpack.c.0.s8 %v2507
    %v2509 = vlaneseq
    %v2510 = vshrl.u32 %v2509, 7
    %v2511 = vsub.s32 %v2508, %v2510
    %v2512 = vrot.slane %v2505, %v2511
    %v2513 = vcombine.high %v2512, %v2512
    %v2515 = vunpack.c.l.s4 1966171168
    %v2516 = vunpack.c.0.s8 %v2515
    %v2517 = vlaneseq
    %v2518 = vshrl.u32 %v2517, 7
    %v2519 = vsub.s32 %v2516, %v2518
    %v2520 = vrot.slane %v2512, %v2519
    %v2522 = vunpack.c.l.s4 1966171168
    %v2523 = vunpack.c.0.s8 %v2522
    %v2524 = vlaneseq
    %v2525 = vshrl.u32 %v2524, 7
    %v2526 = vsub.s32 %v2523, %v2525
    %v2527 = vrot.slane %v2513, %v2526
    %v2528 = vcombine.high %v2520, %v2520
    %v2529 = vcombine.high %v2527, %v2527
    %2532 = vst.msk [vmem:[#allocation2 + $0x3] sm:$0x1] %vm1427, %v2528
    %2533 = vst.msk [vmem:[#allocation2 + $0xb] sm:$0x1] %vm1427, %v2529
    %v2534 = vadd.f32 %v546, %v629
    %v2535 = vrot.slane %v2503, 6
    %v2536 = vsel %vm467, %v2535, 0
    %2538 = vmatprep.subr.mxu0 0.0
    %2539 = vmatpush1.msra.mxu0 %v447
    %2540 = vmatprep.subr.mxu0 0.0
    %2541 = vmatpush1.msra.mxu0 %v448
    %2542 = vmatprep.subr.mxu0 0.0
    %2543 = vmatpush1.msra.mxu0 %v449
    %2544 = vmatprep.subr.mxu0 0.0
    %2545 = vmatpush1.msra.mxu0 %v450
    %2546 = vmatprep.subr.mxu0 0.0
    %2547 = vmatpush1.msra.mxu0 0.0
    %2548 = vmatprep.subr.mxu0 0.0
    %2549 = vmatpush1.msra.mxu0 0.0
    %2550 = vmatprep.subr.mxu0 0.0
    %2551 = vmatpush1.msra.mxu0 0.0
    %2552 = vmatprep.subr.mxu0 0.0
    %2553 = vmatpush1.msra.mxu0 0.0
    %2554 = vmatprep.subr.mxu0 0.0
    %2555 = vmatpush1.msra.mxu0 0.0
    %2556 = vmatprep.subr.mxu0 0.0
    %2557 = vmatpush1.msra.mxu0 0.0
    %2558 = vmatprep.subr.mxu0 0.0
    %2559 = vmatpush1.msra.mxu0 0.0
    %2560 = vmatprep.subr.mxu0 0.0
    %2561 = vmatpush1.msra.mxu0 0.0
    %2562 = vmatprep.subr.mxu0 0.0
    %2563 = vmatpush1.msra.mxu0 0.0
    %2564 = vmatprep.subr.mxu0 0.0
    %2565 = vmatpush1.msra.mxu0 0.0
    %2566 = vmatprep.subr.mxu0 0.0
    %2567 = vmatpush1.msra.mxu0 0.0
    %2568 = vmatprep.subr.mxu0 0.0
    %2569 = vmatpush1.msra.mxu0 0.0
    %2570 = vmatprep.subr.mxu0 0.0
    %2571 = vmatpush1.msra.mxu0 0.0
    %2572 = vmatprep.subr.mxu0 0.0
    %2573 = vmatpush1.msra.mxu0 0.0
    %2574 = vmatprep.subr.mxu0 0.0
    %2575 = vmatpush1.msra.mxu0 0.0
    %2576 = vmatprep.subr.mxu0 0.0
    %2577 = vmatpush1.msra.mxu0 0.0
    %2578 = vmatprep.subr.mxu0 0.0
    %2579 = vmatpush1.msra.mxu0 0.0
    %2580 = vmatprep.subr.mxu0 0.0
    %2581 = vmatpush1.msra.mxu0 0.0
    %2582 = vmatprep.subr.mxu0 0.0
    %2583 = vmatpush1.msra.mxu0 0.0
    %2584 = vmatprep.subr.mxu0 0.0
    %2585 = vmatpush1.msra.mxu0 0.0
    %2586 = vmatprep.subr.mxu0 0.0
    %2587 = vmatpush1.msra.mxu0 0.0
    %2588 = vmatprep.subr.mxu0 0.0
    %2589 = vmatpush1.msra.mxu0 0.0
    %2590 = vmatprep.subr.mxu0 0.0
    %2591 = vmatpush1.msra.mxu0 0.0
    %2592 = vmatprep.subr.mxu0 0.0
    %2593 = vmatpush1.msra.mxu0 0.0
    %2594 = vmatprep.subr.mxu0 0.0
    %2595 = vmatpush1.msra.mxu0 0.0
    %2596 = vmatprep.subr.mxu0 0.0
    %2597 = vmatpush1.msra.mxu0 0.0
    %2598 = vmatprep.subr.mxu0 0.0
    %2599 = vmatpush1.msra.mxu0 0.0
    %2600 = vmatprep.subr.mxu0 0.0
    %2601 = vmatpush1.msra.mxu0 0.0
    %2602 = vmatprep.mubr.f32.mxu0 0.0
    %2603 = vmatmul.mubr.f32.gmra.mrb[0].mxu0 %v2536
    %v2604 = vpop.f32.mrb[0].mxu0
    %v2605 = vadd.f32 0.0, %v2604
    %v2606 = vpop.f32.mrb[0].mxu0
    %2607 = vdwg.mxu0
    %v2608 = vadd.f32 %v2534, %v2605
    %v2609 = vadd.f32 %v704, %v780
    %2610 = vmatprep.subr.mxu0 0.0
    %2611 = vmatpush1.msra.mxu0 %v451
    %2612 = vmatprep.subr.mxu0 0.0
    %2613 = vmatpush1.msra.mxu0 %v452
    %2614 = vmatprep.subr.mxu0 0.0
    %2615 = vmatpush1.msra.mxu0 %v453
    %2616 = vmatprep.subr.mxu0 0.0
    %2617 = vmatpush1.msra.mxu0 %v454
    %2618 = vmatprep.subr.mxu0 0.0
    %2619 = vmatpush1.msra.mxu0 0.0
    %2620 = vmatprep.subr.mxu0 0.0
    %2621 = vmatpush1.msra.mxu0 0.0
    %2622 = vmatprep.subr.mxu0 0.0
    %2623 = vmatpush1.msra.mxu0 0.0
    %2624 = vmatprep.subr.mxu0 0.0
    %2625 = vmatpush1.msra.mxu0 0.0
    %2626 = vmatprep.subr.mxu0 0.0
    %2627 = vmatpush1.msra.mxu0 0.0
    %2628 = vmatprep.subr.mxu0 0.0
    %2629 = vmatpush1.msra.mxu0 0.0
    %2630 = vmatprep.subr.mxu0 0.0
    %2631 = vmatpush1.msra.mxu0 0.0
    %2632 = vmatprep.subr.mxu0 0.0
    %2633 = vmatpush1.msra.mxu0 0.0
    %2634 = vmatprep.subr.mxu0 0.0
    %2635 = vmatpush1.msra.mxu0 0.0
    %2636 = vmatprep.subr.mxu0 0.0
    %2637 = vmatpush1.msra.mxu0 0.0
    %2638 = vmatprep.subr.mxu0 0.0
    %2639 = vmatpush1.msra.mxu0 0.0
    %2640 = vmatprep.subr.mxu0 0.0
    %2641 = vmatpush1.msra.mxu0 0.0
    %2642 = vmatprep.subr.mxu0 0.0
    %2643 = vmatpush1.msra.mxu0 0.0
    %2644 = vmatprep.subr.mxu0 0.0
    %2645 = vmatpush1.msra.mxu0 0.0
    %2646 = vmatprep.subr.mxu0 0.0
    %2647 = vmatpush1.msra.mxu0 0.0
    %2648 = vmatprep.subr.mxu0 0.0
    %2649 = vmatpush1.msra.mxu0 0.0
    %2650 = vmatprep.subr.mxu0 0.0
    %2651 = vmatpush1.msra.mxu0 0.0
    %2652 = vmatprep.subr.mxu0 0.0
    %2653 = vmatpush1.msra.mxu0 0.0
    %2654 = vmatprep.subr.mxu0 0.0
    %2655 = vmatpush1.msra.mxu0 0.0
    %2656 = vmatprep.subr.mxu0 0.0
    %2657 = vmatpush1.msra.mxu0 0.0
    %2658 = vmatprep.subr.mxu0 0.0
    %2659 = vmatpush1.msra.mxu0 0.0
    %2660 = vmatprep.subr.mxu0 0.0
    %2661 = vmatpush1.msra.mxu0 0.0
    %2662 = vmatprep.subr.mxu0 0.0
    %2663 = vmatpush1.msra.mxu0 0.0
    %2664 = vmatprep.subr.mxu0 0.0
    %2665 = vmatpush1.msra.mxu0 0.0
    %2666 = vmatprep.subr.mxu0 0.0
    %2667 = vmatpush1.msra.mxu0 0.0
    %2668 = vmatprep.subr.mxu0 0.0
    %2669 = vmatpush1.msra.mxu0 0.0
    %2670 = vmatprep.subr.mxu0 0.0
    %2671 = vmatpush1.msra.mxu0 0.0
    %2672 = vmatprep.subr.mxu0 0.0
    %2673 = vmatpush1.msra.mxu0 0.0
    %2674 = vmatprep.mubr.f32.mxu0 0.0
    %2675 = vmatmul.mubr.f32.gmra.mrb[0].mxu0 %v2536
    %v2676 = vpop.f32.mrb[0].mxu0
    %v2677 = vadd.f32 0.0, %v2676
    %v2678 = vpop.f32.mrb[0].mxu0
    %2679 = vdwg.mxu0
    %v2680 = vadd.f32 %v2609, %v2677
    %v2681 = vadd.f32 %v855, %v931
    %2682 = vmatprep.subr.mxu0 0.0
    %2683 = vmatpush1.msra.mxu0 %v455
    %2684 = vmatprep.subr.mxu0 0.0
    %2685 = vmatpush1.msra.mxu0 %v456
    %2686 = vmatprep.subr.mxu0 0.0
    %2687 = vmatpush1.msra.mxu0 %v457
    %2688 = vmatprep.subr.mxu0 0.0
    %2689 = vmatpush1.msra.mxu0 %v458
    %2690 = vmatprep.subr.mxu0 0.0
    %2691 = vmatpush1.msra.mxu0 0.0
    %2692 = vmatprep.subr.mxu0 0.0
    %2693 = vmatpush1.msra.mxu0 0.0
    %2694 = vmatprep.subr.mxu0 0.0
    %2695 = vmatpush1.msra.mxu0 0.0
    %2696 = vmatprep.subr.mxu0 0.0
    %2697 = vmatpush1.msra.mxu0 0.0
    %2698 = vmatprep.subr.mxu0 0.0
    %2699 = vmatpush1.msra.mxu0 0.0
    %2700 = vmatprep.subr.mxu0 0.0
    %2701 = vmatpush1.msra.mxu0 0.0
    %2702 = vmatprep.subr.mxu0 0.0
    %2703 = vmatpush1.msra.mxu0 0.0
    %2704 = vmatprep.subr.mxu0 0.0
    %2705 = vmatpush1.msra.mxu0 0.0
    %2706 = vmatprep.subr.mxu0 0.0
    %2707 = vmatpush1.msra.mxu0 0.0
    %2708 = vmatprep.subr.mxu0 0.0
    %2709 = vmatpush1.msra.mxu0 0.0
    %2710 = vmatprep.subr.mxu0 0.0
    %2711 = vmatpush1.msra.mxu0 0.0
    %2712 = vmatprep.subr.mxu0 0.0
    %2713 = vmatpush1.msra.mxu0 0.0
    %2714 = vmatprep.subr.mxu0 0.0
    %2715 = vmatpush1.msra.mxu0 0.0
    %2716 = vmatprep.subr.mxu0 0.0
    %2717 = vmatpush1.msra.mxu0 0.0
    %2718 = vmatprep.subr.mxu0 0.0
    %2719 = vmatpush1.msra.mxu0 0.0
    %2720 = vmatprep.subr.mxu0 0.0
    %2721 = vmatpush1.msra.mxu0 0.0
    %2722 = vmatprep.subr.mxu0 0.0
    %2723 = vmatpush1.msra.mxu0 0.0
    %2724 = vmatprep.subr.mxu0 0.0
    %2725 = vmatpush1.msra.mxu0 0.0
    %2726 = vmatprep.subr.mxu0 0.0
    %2727 = vmatpush1.msra.mxu0 0.0
    %2728 = vmatprep.subr.mxu0 0.0
    %2729 = vmatpush1.msra.mxu0 0.0
    %2730 = vmatprep.subr.mxu0 0.0
    %2731 = vmatpush1.msra.mxu0 0.0
    %2732 = vmatprep.subr.mxu0 0.0
    %2733 = vmatpush1.msra.mxu0 0.0
    %2734 = vmatprep.subr.mxu0 0.0
    %2735 = vmatpush1.msra.mxu0 0.0
    %2736 = vmatprep.subr.mxu0 0.0
    %2737 = vmatpush1.msra.mxu0 0.0
    %2738 = vmatprep.subr.mxu0 0.0
    %2739 = vmatpush1.msra.mxu0 0.0
    %2740 = vmatprep.subr.mxu0 0.0
    %2741 = vmatpush1.msra.mxu0 0.0
    %2742 = vmatprep.subr.mxu0 0.0
    %2743 = vmatpush1.msra.mxu0 0.0
    %2744 = vmatprep.subr.mxu0 0.0
    %2745 = vmatpush1.msra.mxu0 0.0
    %2746 = vmatprep.mubr.f32.mxu0 0.0
    %2747 = vmatmul.mubr.f32.gmra.mrb[0].mxu0 %v2536
    %v2748 = vpop.f32.mrb[0].mxu0
    %v2749 = vadd.f32 0.0, %v2748
    %v2750 = vpop.f32.mrb[0].mxu0
    %2751 = vdwg.mxu0
    %v2752 = vadd.f32 %v2681, %v2749
    %v2753 = vadd.f32 %v1006, %v1082
    %2754 = vmatprep.subr.mxu0 0.0
    %2755 = vmatpush1.msra.mxu0 %v459
    %2756 = vmatprep.subr.mxu0 0.0
    %2757 = vmatpush1.msra.mxu0 %v460
    %2758 = vmatprep.subr.mxu0 0.0
    %2759 = vmatpush1.msra.mxu0 %v461
    %2760 = vmatprep.subr.mxu0 0.0
    %2761 = vmatpush1.msra.mxu0 %v462
    %2762 = vmatprep.subr.mxu0 0.0
    %2763 = vmatpush1.msra.mxu0 0.0
    %2764 = vmatprep.subr.mxu0 0.0
    %2765 = vmatpush1.msra.mxu0 0.0
    %2766 = vmatprep.subr.mxu0 0.0
    %2767 = vmatpush1.msra.mxu0 0.0
    %2768 = vmatprep.subr.mxu0 0.0
    %2769 = vmatpush1.msra.mxu0 0.0
    %2770 = vmatprep.subr.mxu0 0.0
    %2771 = vmatpush1.msra.mxu0 0.0
    %2772 = vmatprep.subr.mxu0 0.0
    %2773 = vmatpush1.msra.mxu0 0.0
    %2774 = vmatprep.subr.mxu0 0.0
    %2775 = vmatpush1.msra.mxu0 0.0
    %2776 = vmatprep.subr.mxu0 0.0
    %2777 = vmatpush1.msra.mxu0 0.0
    %2778 = vmatprep.subr.mxu0 0.0
    %2779 = vmatpush1.msra.mxu0 0.0
    %2780 = vmatprep.subr.mxu0 0.0
    %2781 = vmatpush1.msra.mxu0 0.0
    %2782 = vmatprep.subr.mxu0 0.0
    %2783 = vmatpush1.msra.mxu0 0.0
    %2784 = vmatprep.subr.mxu0 0.0
    %2785 = vmatpush1.msra.mxu0 0.0
    %2786 = vmatprep.subr.mxu0 0.0
    %2787 = vmatpush1.msra.mxu0 0.0
    %2788 = vmatprep.subr.mxu0 0.0
    %2789 = vmatpush1.msra.mxu0 0.0
    %2790 = vmatprep.subr.mxu0 0.0
    %2791 = vmatpush1.msra.mxu0 0.0
    %2792 = vmatprep.subr.mxu0 0.0
    %2793 = vmatpush1.msra.mxu0 0.0
    %2794 = vmatprep.subr.mxu0 0.0
    %2795 = vmatpush1.msra.mxu0 0.0
    %2796 = vmatprep.subr.mxu0 0.0
    %2797 = vmatpush1.msra.mxu0 0.0
    %2798 = vmatprep.subr.mxu0 0.0
    %2799 = vmatpush1.msra.mxu0 0.0
    %2800 = vmatprep.subr.mxu0 0.0
    %2801 = vmatpush1.msra.mxu0 0.0
    %2802 = vmatprep.subr.mxu0 0.0
    %2803 = vmatpush1.msra.mxu0 0.0
    %2804 = vmatprep.subr.mxu0 0.0
    %2805 = vmatpush1.msra.mxu0 0.0
    %2806 = vmatprep.subr.mxu0 0.0
    %2807 = vmatpush1.msra.mxu0 0.0
    %2808 = vmatprep.subr.mxu0 0.0
    %2809 = vmatpush1.msra.mxu0 0.0
    %2810 = vmatprep.subr.mxu0 0.0
    %2811 = vmatpush1.msra.mxu0 0.0
    %2812 = vmatprep.subr.mxu0 0.0
    %2813 = vmatpush1.msra.mxu0 0.0
    %2814 = vmatprep.subr.mxu0 0.0
    %2815 = vmatpush1.msra.mxu0 0.0
    %2816 = vmatprep.subr.mxu0 0.0
    %2817 = vmatpush1.msra.mxu0 0.0
    %2818 = vmatprep.mubr.f32.mxu0 0.0
    %2819 = vmatmul.mubr.f32.gmra.mrb[0].mxu0 %v2536
    %v2820 = vpop.f32.mrb[0].mxu0
    %v2821 = vadd.f32 0.0, %v2820
    %v2822 = vpop.f32.mrb[0].mxu0
    %2823 = vdwg.mxu0
    %v2824 = vadd.f32 %v2753, %v2821
    %v2825 = vxor.u32 %v2608, 2147483648
    %v2826 = vmul.f32 %v2825, 1.442695
    %v2827 = vpow.pop %v2826
    %v2828 = vadd.f32 %v2827, 1.0
    %v2829 = vrcp.pop %v2828
    %v2830 = vmul.f32 1.0, %v2829
    %v2831 = vxor.u32 %v2680, 2147483648
    %v2832 = vmul.f32 %v2831, 1.442695
    %v2833 = vpow.pop %v2832
    %v2834 = vadd.f32 %v2833, 1.0
    %v2835 = vrcp.pop %v2834
    %v2836 = vmul.f32 1.0, %v2835
    %v2837 = vtanh.pop %v2752
    %v2838 = vxor.u32 %v2824, 2147483648
    %v2839 = vmul.f32 %v2838, 1.442695
    %v2840 = vpow.pop %v2839
    %v2841 = vadd.f32 %v2840, 1.0
    %v2842 = vrcp.pop %v2841
    %v2843 = vmul.f32 1.0, %v2842
    %v2845 = vrot.slane %v2501, 6
    %v2847 = vmul.f32 %v2836, %v2845
    %v2848 = vmul.f32 %v2830, %v2837
    %v2849 = vadd.f32 %v2847, %v2848
    %v2850 = vtanh.pop %v2849
    %v2851 = vmul.f32 %v2843, %v2850
    %v2854 = vunpack.c.l.s4 1966171168
    %v2855 = vunpack.c.0.s8 %v2854
    %v2856 = vlaneseq
    %v2857 = vshrl.u32 %v2856, 7
    %v2858 = vsub.s32 %v2855, %v2857
    %v2859 = vrot.slane %v2851, %v2858
    %v2860 = vcombine.high %v2859, %v2859
    %v2862 = vunpack.c.l.s4 1966171168
    %v2863 = vunpack.c.0.s8 %v2862
    %v2864 = vlaneseq
    %v2865 = vshrl.u32 %v2864, 7
    %v2866 = vsub.s32 %v2863, %v2865
    %v2867 = vrot.slane %v2859, %v2866
    %v2869 = vunpack.c.l.s4 1966171168
    %v2870 = vunpack.c.0.s8 %v2869
    %v2871 = vlaneseq
    %v2872 = vshrl.u32 %v2871, 7
    %v2873 = vsub.s32 %v2870, %v2872
    %v2874 = vrot.slane %v2860, %v2873
    %2877 = vst.msk [vmem:[#allocation2 + $0x4] sm:$0x1] %vm1427, %v2867
    %2878 = vst.msk [vmem:[#allocation2 + $0xc] sm:$0x1] %vm1427, %v2874
    %v2879 = vadd.f32 %v546, %v1431
    %v2880 = vsel %vm467, %v2851, 0
    %2882 = vmatprep.subr.mxu0 0.0
    %2883 = vmatpush1.msra.mxu0 %v447
    %2884 = vmatprep.subr.mxu0 0.0
    %2885 = vmatpush1.msra.mxu0 %v448
    %2886 = vmatprep.subr.mxu0 0.0
    %2887 = vmatpush1.msra.mxu0 %v449
    %2888 = vmatprep.subr.mxu0 0.0
    %2889 = vmatpush1.msra.mxu0 %v450
    %2890 = vmatprep.subr.mxu0 0.0
    %2891 = vmatpush1.msra.mxu0 0.0
    %2892 = vmatprep.subr.mxu0 0.0
    %2893 = vmatpush1.msra.mxu0 0.0
    %2894 = vmatprep.subr.mxu0 0.0
    %2895 = vmatpush1.msra.mxu0 0.0
    %2896 = vmatprep.subr.mxu0 0.0
    %2897 = vmatpush1.msra.mxu0 0.0
    %2898 = vmatprep.subr.mxu0 0.0
    %2899 = vmatpush1.msra.mxu0 0.0
    %2900 = vmatprep.subr.mxu0 0.0
    %2901 = vmatpush1.msra.mxu0 0.0
    %2902 = vmatprep.subr.mxu0 0.0
    %2903 = vmatpush1.msra.mxu0 0.0
    %2904 = vmatprep.subr.mxu0 0.0
    %2905 = vmatpush1.msra.mxu0 0.0
    %2906 = vmatprep.subr.mxu0 0.0
    %2907 = vmatpush1.msra.mxu0 0.0
    %2908 = vmatprep.subr.mxu0 0.0
    %2909 = vmatpush1.msra.mxu0 0.0
    %2910 = vmatprep.subr.mxu0 0.0
    %2911 = vmatpush1.msra.mxu0 0.0
    %2912 = vmatprep.subr.mxu0 0.0
    %2913 = vmatpush1.msra.mxu0 0.0
    %2914 = vmatprep.subr.mxu0 0.0
    %2915 = vmatpush1.msra.mxu0 0.0
    %2916 = vmatprep.subr.mxu0 0.0
    %2917 = vmatpush1.msra.mxu0 0.0
    %2918 = vmatprep.subr.mxu0 0.0
    %2919 = vmatpush1.msra.mxu0 0.0
    %2920 = vmatprep.subr.mxu0 0.0
    %2921 = vmatpush1.msra.mxu0 0.0
    %2922 = vmatprep.subr.mxu0 0.0
    %2923 = vmatpush1.msra.mxu0 0.0
    %2924 = vmatprep.subr.mxu0 0.0
    %2925 = vmatpush1.msra.mxu0 0.0
    %2926 = vmatprep.subr.mxu0 0.0
    %2927 = vmatpush1.msra.mxu0 0.0
    %2928 = vmatprep.subr.mxu0 0.0
    %2929 = vmatpush1.msra.mxu0 0.0
    %2930 = vmatprep.subr.mxu0 0.0
    %2931 = vmatpush1.msra.mxu0 0.0
    %2932 = vmatprep.subr.mxu0 0.0
    %2933 = vmatpush1.msra.mxu0 0.0
    %2934 = vmatprep.subr.mxu0 0.0
    %2935 = vmatpush1.msra.mxu0 0.0
    %2936 = vmatprep.subr.mxu0 0.0
    %2937 = vmatpush1.msra.mxu0 0.0
    %2938 = vmatprep.subr.mxu0 0.0
    %2939 = vmatpush1.msra.mxu0 0.0
    %2940 = vmatprep.subr.mxu0 0.0
    %2941 = vmatpush1.msra.mxu0 0.0
    %2942 = vmatprep.subr.mxu0 0.0
    %2943 = vmatpush1.msra.mxu0 0.0
    %2944 = vmatprep.subr.mxu0 0.0
    %2945 = vmatpush1.msra.mxu0 0.0
    %2946 = vmatprep.mubr.f32.mxu0 0.0
    %2947 = vmatmul.mubr.f32.gmra.mrb[0].mxu0 %v2880
    %v2948 = vpop.f32.mrb[0].mxu0
    %v2949 = vadd.f32 0.0, %v2948
    %v2950 = vpop.f32.mrb[0].mxu0
    %2951 = vdwg.mxu0
    %v2953 = vrot.slane %v2949, 6
    %v2955 = vadd.f32 %v2879, %v2953
    %v2956 = vadd.f32 %v704, %v1511
    %2957 = vmatprep.subr.mxu0 0.0
    %2958 = vmatpush1.msra.mxu0 %v451
    %2959 = vmatprep.subr.mxu0 0.0
    %2960 = vmatpush1.msra.mxu0 %v452
    %2961 = vmatprep.subr.mxu0 0.0
    %2962 = vmatpush1.msra.mxu0 %v453
    %2963 = vmatprep.subr.mxu0 0.0
    %2964 = vmatpush1.msra.mxu0 %v454
    %2965 = vmatprep.subr.mxu0 0.0
    %2966 = vmatpush1.msra.mxu0 0.0
    %2967 = vmatprep.subr.mxu0 0.0
    %2968 = vmatpush1.msra.mxu0 0.0
    %2969 = vmatprep.subr.mxu0 0.0
    %2970 = vmatpush1.msra.mxu0 0.0
    %2971 = vmatprep.subr.mxu0 0.0
    %2972 = vmatpush1.msra.mxu0 0.0
    %2973 = vmatprep.subr.mxu0 0.0
    %2974 = vmatpush1.msra.mxu0 0.0
    %2975 = vmatprep.subr.mxu0 0.0
    %2976 = vmatpush1.msra.mxu0 0.0
    %2977 = vmatprep.subr.mxu0 0.0
    %2978 = vmatpush1.msra.mxu0 0.0
    %2979 = vmatprep.subr.mxu0 0.0
    %2980 = vmatpush1.msra.mxu0 0.0
    %2981 = vmatprep.subr.mxu0 0.0
    %2982 = vmatpush1.msra.mxu0 0.0
    %2983 = vmatprep.subr.mxu0 0.0
    %2984 = vmatpush1.msra.mxu0 0.0
    %2985 = vmatprep.subr.mxu0 0.0
    %2986 = vmatpush1.msra.mxu0 0.0
    %2987 = vmatprep.subr.mxu0 0.0
    %2988 = vmatpush1.msra.mxu0 0.0
    %2989 = vmatprep.subr.mxu0 0.0
    %2990 = vmatpush1.msra.mxu0 0.0
    %2991 = vmatprep.subr.mxu0 0.0
    %2992 = vmatpush1.msra.mxu0 0.0
    %2993 = vmatprep.subr.mxu0 0.0
    %2994 = vmatpush1.msra.mxu0 0.0
    %2995 = vmatprep.subr.mxu0 0.0
    %2996 = vmatpush1.msra.mxu0 0.0
    %2997 = vmatprep.subr.mxu0 0.0
    %2998 = vmatpush1.msra.mxu0 0.0
    %2999 = vmatprep.subr.mxu0 0.0
    %3000 = vmatpush1.msra.mxu0 0.0
    %3001 = vmatprep.subr.mxu0 0.0
    %3002 = vmatpush1.msra.mxu0 0.0
    %3003 = vmatprep.subr.mxu0 0.0
    %3004 = vmatpush1.msra.mxu0 0.0
    %3005 = vmatprep.subr.mxu0 0.0
    %3006 = vmatpush1.msra.mxu0 0.0
    %3007 = vmatprep.subr.mxu0 0.0
    %3008 = vmatpush1.msra.mxu0 0.0
    %3009 = vmatprep.subr.mxu0 0.0
    %3010 = vmatpush1.msra.mxu0 0.0
    %3011 = vmatprep.subr.mxu0 0.0
    %3012 = vmatpush1.msra.mxu0 0.0
    %3013 = vmatprep.subr.mxu0 0.0
    %3014 = vmatpush1.msra.mxu0 0.0
    %3015 = vmatprep.subr.mxu0 0.0
    %3016 = vmatpush1.msra.mxu0 0.0
    %3017 = vmatprep.subr.mxu0 0.0
    %3018 = vmatpush1.msra.mxu0 0.0
    %3019 = vmatprep.subr.mxu0 0.0
    %3020 = vmatpush1.msra.mxu0 0.0
    %3021 = vmatprep.mubr.f32.mxu0 0.0
    %3022 = vmatmul.mubr.f32.gmra.mrb[0].mxu0 %v2880
    %v3023 = vpop.f32.mrb[0].mxu0
    %v3024 = vadd.f32 0.0, %v3023
    %v3025 = vpop.f32.mrb[0].mxu0
    %3026 = vdwg.mxu0
    %v3028 = vrot.slane %v3024, 6
    %v3030 = vadd.f32 %v2956, %v3028
    %v3031 = vadd.f32 %v855, %v1589
    %3032 = vmatprep.subr.mxu0 0.0
    %3033 = vmatpush1.msra.mxu0 %v455
    %3034 = vmatprep.subr.mxu0 0.0
    %3035 = vmatpush1.msra.mxu0 %v456
    %3036 = vmatprep.subr.mxu0 0.0
    %3037 = vmatpush1.msra.mxu0 %v457
    %3038 = vmatprep.subr.mxu0 0.0
    %3039 = vmatpush1.msra.mxu0 %v458
    %3040 = vmatprep.subr.mxu0 0.0
    %3041 = vmatpush1.msra.mxu0 0.0
    %3042 = vmatprep.subr.mxu0 0.0
    %3043 = vmatpush1.msra.mxu0 0.0
    %3044 = vmatprep.subr.mxu0 0.0
    %3045 = vmatpush1.msra.mxu0 0.0
    %3046 = vmatprep.subr.mxu0 0.0
    %3047 = vmatpush1.msra.mxu0 0.0
    %3048 = vmatprep.subr.mxu0 0.0
    %3049 = vmatpush1.msra.mxu0 0.0
    %3050 = vmatprep.subr.mxu0 0.0
    %3051 = vmatpush1.msra.mxu0 0.0
    %3052 = vmatprep.subr.mxu0 0.0
    %3053 = vmatpush1.msra.mxu0 0.0
    %3054 = vmatprep.subr.mxu0 0.0
    %3055 = vmatpush1.msra.mxu0 0.0
    %3056 = vmatprep.subr.mxu0 0.0
    %3057 = vmatpush1.msra.mxu0 0.0
    %3058 = vmatprep.subr.mxu0 0.0
    %3059 = vmatpush1.msra.mxu0 0.0
    %3060 = vmatprep.subr.mxu0 0.0
    %3061 = vmatpush1.msra.mxu0 0.0
    %3062 = vmatprep.subr.mxu0 0.0
    %3063 = vmatpush1.msra.mxu0 0.0
    %3064 = vmatprep.subr.mxu0 0.0
    %3065 = vmatpush1.msra.mxu0 0.0
    %3066 = vmatprep.subr.mxu0 0.0
    %3067 = vmatpush1.msra.mxu0 0.0
    %3068 = vmatprep.subr.mxu0 0.0
    %3069 = vmatpush1.msra.mxu0 0.0
    %3070 = vmatprep.subr.mxu0 0.0
    %3071 = vmatpush1.msra.mxu0 0.0
    %3072 = vmatprep.subr.mxu0 0.0
    %3073 = vmatpush1.msra.mxu0 0.0
    %3074 = vmatprep.subr.mxu0 0.0
    %3075 = vmatpush1.msra.mxu0 0.0
    %3076 = vmatprep.subr.mxu0 0.0
    %3077 = vmatpush1.msra.mxu0 0.0
    %3078 = vmatprep.subr.mxu0 0.0
    %3079 = vmatpush1.msra.mxu0 0.0
    %3080 = vmatprep.subr.mxu0 0.0
    %3081 = vmatpush1.msra.mxu0 0.0
    %3082 = vmatprep.subr.mxu0 0.0
    %3083 = vmatpush1.msra.mxu0 0.0
    %3084 = vmatprep.subr.mxu0 0.0
    %3085 = vmatpush1.msra.mxu0 0.0
    %3086 = vmatprep.subr.mxu0 0.0
    %3087 = vmatpush1.msra.mxu0 0.0
    %3088 = vmatprep.subr.mxu0 0.0
    %3089 = vmatpush1.msra.mxu0 0.0
    %3090 = vmatprep.subr.mxu0 0.0
    %3091 = vmatpush1.msra.mxu0 0.0
    %3092 = vmatprep.subr.mxu0 0.0
    %3093 = vmatpush1.msra.mxu0 0.0
    %3094 = vmatprep.subr.mxu0 0.0
    %3095 = vmatpush1.msra.mxu0 0.0
    %3096 = vmatprep.mubr.f32.mxu0 0.0
    %3097 = vmatmul.mubr.f32.gmra.mrb[0].mxu0 %v2880
    %v3098 = vpop.f32.mrb[0].mxu0
    %v3099 = vadd.f32 0.0, %v3098
    %v3100 = vpop.f32.mrb[0].mxu0
    %3101 = vdwg.mxu0
    %v3103 = vrot.slane %v3099, 6
    %v3105 = vadd.f32 %v3031, %v3103
    %v3106 = vadd.f32 %v1006, %v1667
    %3107 = vmatprep.subr.mxu0 0.0
    %3108 = vmatpush1.msra.mxu0 %v459
    %3109 = vmatprep.subr.mxu0 0.0
    %3110 = vmatpush1.msra.mxu0 %v460
    %3111 = vmatprep.subr.mxu0 0.0
    %3112 = vmatpush1.msra.mxu0 %v461
    %3113 = vmatprep.subr.mxu0 0.0
    %3114 = vmatpush1.msra.mxu0 %v462
    %3115 = vmatprep.subr.mxu0 0.0
    %3116 = vmatpush1.msra.mxu0 0.0
    %3117 = vmatprep.subr.mxu0 0.0
    %3118 = vmatpush1.msra.mxu0 0.0
    %3119 = vmatprep.subr.mxu0 0.0
    %3120 = vmatpush1.msra.mxu0 0.0
    %3121 = vmatprep.subr.mxu0 0.0
    %3122 = vmatpush1.msra.mxu0 0.0
    %3123 = vmatprep.subr.mxu0 0.0
    %3124 = vmatpush1.msra.mxu0 0.0
    %3125 = vmatprep.subr.mxu0 0.0
    %3126 = vmatpush1.msra.mxu0 0.0
    %3127 = vmatprep.subr.mxu0 0.0
    %3128 = vmatpush1.msra.mxu0 0.0
    %3129 = vmatprep.subr.mxu0 0.0
    %3130 = vmatpush1.msra.mxu0 0.0
    %3131 = vmatprep.subr.mxu0 0.0
    %3132 = vmatpush1.msra.mxu0 0.0
    %3133 = vmatprep.subr.mxu0 0.0
    %3134 = vmatpush1.msra.mxu0 0.0
    %3135 = vmatprep.subr.mxu0 0.0
    %3136 = vmatpush1.msra.mxu0 0.0
    %3137 = vmatprep.subr.mxu0 0.0
    %3138 = vmatpush1.msra.mxu0 0.0
    %3139 = vmatprep.subr.mxu0 0.0
    %3140 = vmatpush1.msra.mxu0 0.0
    %3141 = vmatprep.subr.mxu0 0.0
    %3142 = vmatpush1.msra.mxu0 0.0
    %3143 = vmatprep.subr.mxu0 0.0
    %3144 = vmatpush1.msra.mxu0 0.0
    %3145 = vmatprep.subr.mxu0 0.0
    %3146 = vmatpush1.msra.mxu0 0.0
    %3147 = vmatprep.subr.mxu0 0.0
    %3148 = vmatpush1.msra.mxu0 0.0
    %3149 = vmatprep.subr.mxu0 0.0
    %3150 = vmatpush1.msra.mxu0 0.0
    %3151 = vmatprep.subr.mxu0 0.0
    %3152 = vmatpush1.msra.mxu0 0.0
    %3153 = vmatprep.subr.mxu0 0.0
    %3154 = vmatpush1.msra.mxu0 0.0
    %3155 = vmatprep.subr.mxu0 0.0
    %3156 = vmatpush1.msra.mxu0 0.0
    %3157 = vmatprep.subr.mxu0 0.0
    %3158 = vmatpush1.msra.mxu0 0.0
    %3159 = vmatprep.subr.mxu0 0.0
    %3160 = vmatpush1.msra.mxu0 0.0
    %3161 = vmatprep.subr.mxu0 0.0
    %3162 = vmatpush1.msra.mxu0 0.0
    %3163 = vmatprep.subr.mxu0 0.0
    %3164 = vmatpush1.msra.mxu0 0.0
    %3165 = vmatprep.subr.mxu0 0.0
    %3166 = vmatpush1.msra.mxu0 0.0
    %3167 = vmatprep.subr.mxu0 0.0
    %3168 = vmatpush1.msra.mxu0 0.0
    %3169 = vmatprep.subr.mxu0 0.0
    %3170 = vmatpush1.msra.mxu0 0.0
    %3171 = vmatprep.mubr.f32.mxu0 0.0
    %3172 = vmatmul.mubr.f32.gmra.mrb[0].mxu0 %v2880
    %v3173 = vpop.f32.mrb[0].mxu0
    %v3174 = vadd.f32 0.0, %v3173
    %v3175 = vpop.f32.mrb[0].mxu0
    %3176 = vdwg.mxu0
    %v3178 = vrot.slane %v3174, 6
    %v3180 = vadd.f32 %v3106, %v3178
    %v3181 = vxor.u32 %v2955, 2147483648
    %v3182 = vmul.f32 %v3181, 1.442695
    %v3183 = vpow.pop %v3182
    %v3184 = vadd.f32 %v3183, 1.0
    %v3185 = vrcp.pop %v3184
    %v3186 = vmul.f32 1.0, %v3185
    %v3187 = vxor.u32 %v3030, 2147483648
    %v3188 = vmul.f32 %v3187, 1.442695
    %v3189 = vpow.pop %v3188
    %v3190 = vadd.f32 %v3189, 1.0
    %v3191 = vrcp.pop %v3190
    %v3192 = vmul.f32 1.0, %v3191
    %v3193 = vtanh.pop %v3105
    %v3194 = vxor.u32 %v3180, 2147483648
    %v3195 = vmul.f32 %v3194, 1.442695
    %v3196 = vpow.pop %v3195
    %v3197 = vadd.f32 %v3196, 1.0
    %v3198 = vrcp.pop %v3197
    %v3199 = vmul.f32 1.0, %v3198
    %v3201 = vrot.slane %v2849, 6
    %v3203 = vmul.f32 %v3192, %v3201
    %v3204 = vmul.f32 %v3186, %v3193
    %v3205 = vadd.f32 %v3203, %v3204
    %v3206 = vtanh.pop %v3205
    %v3207 = vmul.f32 %v3199, %v3206
    %v3210 = vunpack.c.l.s4 1966171168
    %v3211 = vunpack.c.0.s8 %v3210
    %v3212 = vlaneseq
    %v3213 = vshrl.u32 %v3212, 7
    %v3214 = vsub.s32 %v3211, %v3213
    %v3215 = vrot.slane %v3207, %v3214
    %v3216 = vcombine.high %v3215, %v3215
    %v3218 = vunpack.c.l.s4 1966171168
    %v3219 = vunpack.c.0.s8 %v3218
    %v3220 = vlaneseq
    %v3221 = vshrl.u32 %v3220, 7
    %v3222 = vsub.s32 %v3219, %v3221
    %v3223 = vrot.slane %v3215, %v3222
    %v3225 = vunpack.c.l.s4 1966171168
    %v3226 = vunpack.c.0.s8 %v3225
    %v3227 = vlaneseq
    %v3228 = vshrl.u32 %v3227, 7
    %v3229 = vsub.s32 %v3226, %v3228
    %v3230 = vrot.slane %v3216, %v3229
    %v3231 = vcombine.high %v3223, %v3223
    %v3232 = vcombine.high %v3230, %v3230
    %3235 = vst.msk [vmem:[#allocation2 + $0x5] sm:$0x1] %vm1427, %v3231
    %3236 = vst.msk [vmem:[#allocation2 + $0xd] sm:$0x1] %vm1427, %v3232
    %v3237 = vadd.f32 %v546, %v1800
    %v3238 = vrot.slane %v3207, 2
    %v3239 = vsel %vm467, %v3238, 0
    %3241 = vmatprep.subr.mxu0 0.0
    %3242 = vmatpush1.msra.mxu0 %v447
    %3243 = vmatprep.subr.mxu0 0.0
    %3244 = vmatpush1.msra.mxu0 %v448
    %3245 = vmatprep.subr.mxu0 0.0
    %3246 = vmatpush1.msra.mxu0 %v449
    %3247 = vmatprep.subr.mxu0 0.0
    %3248 = vmatpush1.msra.mxu0 %v450
    %3249 = vmatprep.subr.mxu0 0.0
    %3250 = vmatpush1.msra.mxu0 0.0
    %3251 = vmatprep.subr.mxu0 0.0
    %3252 = vmatpush1.msra.mxu0 0.0
    %3253 = vmatprep.subr.mxu0 0.0
    %3254 = vmatpush1.msra.mxu0 0.0
    %3255 = vmatprep.subr.mxu0 0.0
    %3256 = vmatpush1.msra.mxu0 0.0
    %3257 = vmatprep.subr.mxu0 0.0
    %3258 = vmatpush1.msra.mxu0 0.0
    %3259 = vmatprep.subr.mxu0 0.0
    %3260 = vmatpush1.msra.mxu0 0.0
    %3261 = vmatprep.subr.mxu0 0.0
    %3262 = vmatpush1.msra.mxu0 0.0
    %3263 = vmatprep.subr.mxu0 0.0
    %3264 = vmatpush1.msra.mxu0 0.0
    %3265 = vmatprep.subr.mxu0 0.0
    %3266 = vmatpush1.msra.mxu0 0.0
    %3267 = vmatprep.subr.mxu0 0.0
    %3268 = vmatpush1.msra.mxu0 0.0
    %3269 = vmatprep.subr.mxu0 0.0
    %3270 = vmatpush1.msra.mxu0 0.0
    %3271 = vmatprep.subr.mxu0 0.0
    %3272 = vmatpush1.msra.mxu0 0.0
    %3273 = vmatprep.subr.mxu0 0.0
    %3274 = vmatpush1.msra.mxu0 0.0
    %3275 = vmatprep.subr.mxu0 0.0
    %3276 = vmatpush1.msra.mxu0 0.0
    %3277 = vmatprep.subr.mxu0 0.0
    %3278 = vmatpush1.msra.mxu0 0.0
    %3279 = vmatprep.subr.mxu0 0.0
    %3280 = vmatpush1.msra.mxu0 0.0
    %3281 = vmatprep.subr.mxu0 0.0
    %3282 = vmatpush1.msra.mxu0 0.0
    %3283 = vmatprep.subr.mxu0 0.0
    %3284 = vmatpush1.msra.mxu0 0.0
    %3285 = vmatprep.subr.mxu0 0.0
    %3286 = vmatpush1.msra.mxu0 0.0
    %3287 = vmatprep.subr.mxu0 0.0
    %3288 = vmatpush1.msra.mxu0 0.0
    %3289 = vmatprep.subr.mxu0 0.0
    %3290 = vmatpush1.msra.mxu0 0.0
    %3291 = vmatprep.subr.mxu0 0.0
    %3292 = vmatpush1.msra.mxu0 0.0
    %3293 = vmatprep.subr.mxu0 0.0
    %3294 = vmatpush1.msra.mxu0 0.0
    %3295 = vmatprep.subr.mxu0 0.0
    %3296 = vmatpush1.msra.mxu0 0.0
    %3297 = vmatprep.subr.mxu0 0.0
    %3298 = vmatpush1.msra.mxu0 0.0
    %3299 = vmatprep.subr.mxu0 0.0
    %3300 = vmatpush1.msra.mxu0 0.0
    %3301 = vmatprep.subr.mxu0 0.0
    %3302 = vmatpush1.msra.mxu0 0.0
    %3303 = vmatprep.subr.mxu0 0.0
    %3304 = vmatpush1.msra.mxu0 0.0
    %3305 = vmatprep.mubr.f32.mxu0 0.0
    %3306 = vmatmul.mubr.f32.gmra.mrb[0].mxu0 %v3239
    %v3307 = vpop.f32.mrb[0].mxu0
    %v3308 = vadd.f32 0.0, %v3307
    %v3309 = vpop.f32.mrb[0].mxu0
    %3310 = vdwg.mxu0
    %v3312 = vrot.slane %v3308, 4
    %v3314 = vadd.f32 %v3237, %v3312
    %v3315 = vadd.f32 %v704, %v1880
    %3316 = vmatprep.subr.mxu0 0.0
    %3317 = vmatpush1.msra.mxu0 %v451
    %3318 = vmatprep.subr.mxu0 0.0
    %3319 = vmatpush1.msra.mxu0 %v452
    %3320 = vmatprep.subr.mxu0 0.0
    %3321 = vmatpush1.msra.mxu0 %v453
    %3322 = vmatprep.subr.mxu0 0.0
    %3323 = vmatpush1.msra.mxu0 %v454
    %3324 = vmatprep.subr.mxu0 0.0
    %3325 = vmatpush1.msra.mxu0 0.0
    %3326 = vmatprep.subr.mxu0 0.0
    %3327 = vmatpush1.msra.mxu0 0.0
    %3328 = vmatprep.subr.mxu0 0.0
    %3329 = vmatpush1.msra.mxu0 0.0
    %3330 = vmatprep.subr.mxu0 0.0
    %3331 = vmatpush1.msra.mxu0 0.0
    %3332 = vmatprep.subr.mxu0 0.0
    %3333 = vmatpush1.msra.mxu0 0.0
    %3334 = vmatprep.subr.mxu0 0.0
    %3335 = vmatpush1.msra.mxu0 0.0
    %3336 = vmatprep.subr.mxu0 0.0
    %3337 = vmatpush1.msra.mxu0 0.0
    %3338 = vmatprep.subr.mxu0 0.0
    %3339 = vmatpush1.msra.mxu0 0.0
    %3340 = vmatprep.subr.mxu0 0.0
    %3341 = vmatpush1.msra.mxu0 0.0
    %3342 = vmatprep.subr.mxu0 0.0
    %3343 = vmatpush1.msra.mxu0 0.0
    %3344 = vmatprep.subr.mxu0 0.0
    %3345 = vmatpush1.msra.mxu0 0.0
    %3346 = vmatprep.subr.mxu0 0.0
    %3347 = vmatpush1.msra.mxu0 0.0
    %3348 = vmatprep.subr.mxu0 0.0
    %3349 = vmatpush1.msra.mxu0 0.0
    %3350 = vmatprep.subr.mxu0 0.0
    %3351 = vmatpush1.msra.mxu0 0.0
    %3352 = vmatprep.subr.mxu0 0.0
    %3353 = vmatpush1.msra.mxu0 0.0
    %3354 = vmatprep.subr.mxu0 0.0
    %3355 = vmatpush1.msra.mxu0 0.0
    %3356 = vmatprep.subr.mxu0 0.0
    %3357 = vmatpush1.msra.mxu0 0.0
    %3358 = vmatprep.subr.mxu0 0.0
    %3359 = vmatpush1.msra.mxu0 0.0
    %3360 = vmatprep.subr.mxu0 0.0
    %3361 = vmatpush1.msra.mxu0 0.0
    %3362 = vmatprep.subr.mxu0 0.0
    %3363 = vmatpush1.msra.mxu0 0.0
    %3364 = vmatprep.subr.mxu0 0.0
    %3365 = vmatpush1.msra.mxu0 0.0
    %3366 = vmatprep.subr.mxu0 0.0
    %3367 = vmatpush1.msra.mxu0 0.0
    %3368 = vmatprep.subr.mxu0 0.0
    %3369 = vmatpush1.msra.mxu0 0.0
    %3370 = vmatprep.subr.mxu0 0.0
    %3371 = vmatpush1.msra.mxu0 0.0
    %3372 = vmatprep.subr.mxu0 0.0
    %3373 = vmatpush1.msra.mxu0 0.0
    %3374 = vmatprep.subr.mxu0 0.0
    %3375 = vmatpush1.msra.mxu0 0.0
    %3376 = vmatprep.subr.mxu0 0.0
    %3377 = vmatpush1.msra.mxu0 0.0
    %3378 = vmatprep.subr.mxu0 0.0
    %3379 = vmatpush1.msra.mxu0 0.0
    %3380 = vmatprep.mubr.f32.mxu0 0.0
    %3381 = vmatmul.mubr.f32.gmra.mrb[0].mxu0 %v3239
    %v3382 = vpop.f32.mrb[0].mxu0
    %v3383 = vadd.f32 0.0, %v3382
    %v3384 = vpop.f32.mrb[0].mxu0
    %3385 = vdwg.mxu0
    %v3387 = vrot.slane %v3383, 4
    %v3389 = vadd.f32 %v3315, %v3387
    %v3390 = vadd.f32 %v855, %v1957
    %3391 = vmatprep.subr.mxu0 0.0
    %3392 = vmatpush1.msra.mxu0 %v455
    %3393 = vmatprep.subr.mxu0 0.0
    %3394 = vmatpush1.msra.mxu0 %v456
    %3395 = vmatprep.subr.mxu0 0.0
    %3396 = vmatpush1.msra.mxu0 %v457
    %3397 = vmatprep.subr.mxu0 0.0
    %3398 = vmatpush1.msra.mxu0 %v458
    %3399 = vmatprep.subr.mxu0 0.0
    %3400 = vmatpush1.msra.mxu0 0.0
    %3401 = vmatprep.subr.mxu0 0.0
    %3402 = vmatpush1.msra.mxu0 0.0
    %3403 = vmatprep.subr.mxu0 0.0
    %3404 = vmatpush1.msra.mxu0 0.0
    %3405 = vmatprep.subr.mxu0 0.0
    %3406 = vmatpush1.msra.mxu0 0.0
    %3407 = vmatprep.subr.mxu0 0.0
    %3408 = vmatpush1.msra.mxu0 0.0
    %3409 = vmatprep.subr.mxu0 0.0
    %3410 = vmatpush1.msra.mxu0 0.0
    %3411 = vmatprep.subr.mxu0 0.0
    %3412 = vmatpush1.msra.mxu0 0.0
    %3413 = vmatprep.subr.mxu0 0.0
    %3414 = vmatpush1.msra.mxu0 0.0
    %3415 = vmatprep.subr.mxu0 0.0
    %3416 = vmatpush1.msra.mxu0 0.0
    %3417 = vmatprep.subr.mxu0 0.0
    %3418 = vmatpush1.msra.mxu0 0.0
    %3419 = vmatprep.subr.mxu0 0.0
    %3420 = vmatpush1.msra.mxu0 0.0
    %3421 = vmatprep.subr.mxu0 0.0
    %3422 = vmatpush1.msra.mxu0 0.0
    %3423 = vmatprep.subr.mxu0 0.0
    %3424 = vmatpush1.msra.mxu0 0.0
    %3425 = vmatprep.subr.mxu0 0.0
    %3426 = vmatpush1.msra.mxu0 0.0
    %3427 = vmatprep.subr.mxu0 0.0
    %3428 = vmatpush1.msra.mxu0 0.0
    %3429 = vmatprep.subr.mxu0 0.0
    %3430 = vmatpush1.msra.mxu0 0.0
    %3431 = vmatprep.subr.mxu0 0.0
    %3432 = vmatpush1.msra.mxu0 0.0
    %3433 = vmatprep.subr.mxu0 0.0
    %3434 = vmatpush1.msra.mxu0 0.0
    %3435 = vmatprep.subr.mxu0 0.0
    %3436 = vmatpush1.msra.mxu0 0.0
    %3437 = vmatprep.subr.mxu0 0.0
    %3438 = vmatpush1.msra.mxu0 0.0
    %3439 = vmatprep.subr.mxu0 0.0
    %3440 = vmatpush1.msra.mxu0 0.0
    %3441 = vmatprep.subr.mxu0 0.0
    %3442 = vmatpush1.msra.mxu0 0.0
    %3443 = vmatprep.subr.mxu0 0.0
    %3444 = vmatpush1.msra.mxu0 0.0
    %3445 = vmatprep.subr.mxu0 0.0
    %3446 = vmatpush1.msra.mxu0 0.0
    %3447 = vmatprep.subr.mxu0 0.0
    %3448 = vmatpush1.msra.mxu0 0.0
    %3449 = vmatprep.subr.mxu0 0.0
    %3450 = vmatpush1.msra.mxu0 0.0
    %3451 = vmatprep.subr.mxu0 0.0
    %3452 = vmatpush1.msra.mxu0 0.0
    %3453 = vmatprep.subr.mxu0 0.0
    %3454 = vmatpush1.msra.mxu0 0.0
    %3455 = vmatprep.mubr.f32.mxu0 0.0
    %3456 = vmatmul.mubr.f32.gmra.mrb[0].mxu0 %v3239
    %v3457 = vpop.f32.mrb[0].mxu0
    %v3458 = vadd.f32 0.0, %v3457
    %v3459 = vpop.f32.mrb[0].mxu0
    %3460 = vdwg.mxu0
    %v3462 = vrot.slane %v3458, 4
    %v3464 = vadd.f32 %v3390, %v3462
    %v3465 = vadd.f32 %v1006, %v2034
    %3466 = vmatprep.subr.mxu0 0.0
    %3467 = vmatpush1.msra.mxu0 %v459
    %3468 = vmatprep.subr.mxu0 0.0
    %3469 = vmatpush1.msra.mxu0 %v460
    %3470 = vmatprep.subr.mxu0 0.0
    %3471 = vmatpush1.msra.mxu0 %v461
    %3472 = vmatprep.subr.mxu0 0.0
    %3473 = vmatpush1.msra.mxu0 %v462
    %3474 = vmatprep.subr.mxu0 0.0
    %3475 = vmatpush1.msra.mxu0 0.0
    %3476 = vmatprep.subr.mxu0 0.0
    %3477 = vmatpush1.msra.mxu0 0.0
    %3478 = vmatprep.subr.mxu0 0.0
    %3479 = vmatpush1.msra.mxu0 0.0
    %3480 = vmatprep.subr.mxu0 0.0
    %3481 = vmatpush1.msra.mxu0 0.0
    %3482 = vmatprep.subr.mxu0 0.0
    %3483 = vmatpush1.msra.mxu0 0.0
    %3484 = vmatprep.subr.mxu0 0.0
    %3485 = vmatpush1.msra.mxu0 0.0
    %3486 = vmatprep.subr.mxu0 0.0
    %3487 = vmatpush1.msra.mxu0 0.0
    %3488 = vmatprep.subr.mxu0 0.0
    %3489 = vmatpush1.msra.mxu0 0.0
    %3490 = vmatprep.subr.mxu0 0.0
    %3491 = vmatpush1.msra.mxu0 0.0
    %3492 = vmatprep.subr.mxu0 0.0
    %3493 = vmatpush1.msra.mxu0 0.0
    %3494 = vmatprep.subr.mxu0 0.0
    %3495 = vmatpush1.msra.mxu0 0.0
    %3496 = vmatprep.subr.mxu0 0.0
    %3497 = vmatpush1.msra.mxu0 0.0
    %3498 = vmatprep.subr.mxu0 0.0
    %3499 = vmatpush1.msra.mxu0 0.0
    %3500 = vmatprep.subr.mxu0 0.0
    %3501 = vmatpush1.msra.mxu0 0.0
    %3502 = vmatprep.subr.mxu0 0.0
    %3503 = vmatpush1.msra.mxu0 0.0
    %3504 = vmatprep.subr.mxu0 0.0
    %3505 = vmatpush1.msra.mxu0 0.0
    %3506 = vmatprep.subr.mxu0 0.0
    %3507 = vmatpush1.msra.mxu0 0.0
    %3508 = vmatprep.subr.mxu0 0.0
    %3509 = vmatpush1.msra.mxu0 0.0
    %3510 = vmatprep.subr.mxu0 0.0
    %3511 = vmatpush1.msra.mxu0 0.0
    %3512 = vmatprep.subr.mxu0 0.0
    %3513 = vmatpush1.msra.mxu0 0.0
    %3514 = vmatprep.subr.mxu0 0.0
    %3515 = vmatpush1.msra.mxu0 0.0
    %3516 = vmatprep.subr.mxu0 0.0
    %3517 = vmatpush1.msra.mxu0 0.0
    %3518 = vmatprep.subr.mxu0 0.0
    %3519 = vmatpush1.msra.mxu0 0.0
    %3520 = vmatprep.subr.mxu0 0.0
    %3521 = vmatpush1.msra.mxu0 0.0
    %3522 = vmatprep.subr.mxu0 0.0
    %3523 = vmatpush1.msra.mxu0 0.0
    %3524 = vmatprep.subr.mxu0 0.0
    %3525 = vmatpush1.msra.mxu0 0.0
    %3526 = vmatprep.subr.mxu0 0.0
    %3527 = vmatpush1.msra.mxu0 0.0
    %3528 = vmatprep.subr.mxu0 0.0
    %3529 = vmatpush1.msra.mxu0 0.0
    %3530 = vmatprep.mubr.f32.mxu0 0.0
    %3531 = vmatmul.mubr.f32.gmra.mrb[0].mxu0 %v3239
    %v3532 = vpop.f32.mrb[0].mxu0
    %v3533 = vadd.f32 0.0, %v3532
    %v3534 = vpop.f32.mrb[0].mxu0
    %3535 = vdwg.mxu0
    %v3537 = vrot.slane %v3533, 4
    %v3539 = vadd.f32 %v3465, %v3537
    %v3540 = vxor.u32 %v3314, 2147483648
    %v3541 = vmul.f32 %v3540, 1.442695
    %v3542 = vpow.pop %v3541
    %v3543 = vadd.f32 %v3542, 1.0
    %v3544 = vrcp.pop %v3543
    %v3545 = vmul.f32 1.0, %v3544
    %v3546 = vxor.u32 %v3389, 2147483648
    %v3547 = vmul.f32 %v3546, 1.442695
    %v3548 = vpow.pop %v3547
    %v3549 = vadd.f32 %v3548, 1.0
    %v3550 = vrcp.pop %v3549
    %v3551 = vmul.f32 1.0, %v3550
    %v3552 = vtanh.pop %v3464
    %v3553 = vxor.u32 %v3539, 2147483648
    %v3554 = vmul.f32 %v3553, 1.442695
    %v3555 = vpow.pop %v3554
    %v3556 = vadd.f32 %v3555, 1.0
    %v3557 = vrcp.pop %v3556
    %v3558 = vmul.f32 1.0, %v3557
    %v3560 = vrot.slane %v3205, 6
    %v3562 = vmul.f32 %v3551, %v3560
    %v3563 = vmul.f32 %v3545, %v3552
    %v3564 = vadd.f32 %v3562, %v3563
    %v3565 = vtanh.pop %v3564
    %v3566 = vmul.f32 %v3558, %v3565
    %v3568 = vcombine.high %v3566, %v3566
    %v3570 = vunpack.c.l.s4 1966171168
    %v3571 = vunpack.c.0.s8 %v3570
    %v3572 = vlaneseq
    %v3573 = vshrl.u32 %v3572, 7
    %v3574 = vsub.s32 %v3571, %v3573
    %v3575 = vrot.slane %v3568, %v3574
    %v3576 = vcombine.high %v3575, %v3575
    %v3578 = vunpack.c.l.s4 1966171168
    %v3579 = vunpack.c.0.s8 %v3578
    %v3580 = vlaneseq
    %v3581 = vshrl.u32 %v3580, 7
    %v3582 = vsub.s32 %v3579, %v3581
    %v3583 = vrot.slane %v3575, %v3582
    %v3585 = vunpack.c.l.s4 1966171168
    %v3586 = vunpack.c.0.s8 %v3585
    %v3587 = vlaneseq
    %v3588 = vshrl.u32 %v3587, 7
    %v3589 = vsub.s32 %v3586, %v3588
    %v3590 = vrot.slane %v3576, %v3589
    %3593 = vst.msk [vmem:[#allocation2 + $0x6] sm:$0x1] %vm1427, %v3583
    %3594 = vst.msk [vmem:[#allocation2 + $0xe] sm:$0x1] %vm1427, %v3590
    %v3595 = vadd.f32 %v546, %v2166
    %v3596 = vrot.slane %v3566, 4
    %v3597 = vsel %vm467, %v3596, 0
    %3599 = vmatprep.subr.mxu0 0.0
    %3600 = vmatpush1.msra.mxu0 %v447
    %3601 = vmatprep.subr.mxu0 0.0
    %3602 = vmatpush1.msra.mxu0 %v448
    %3603 = vmatprep.subr.mxu0 0.0
    %3604 = vmatpush1.msra.mxu0 %v449
    %3605 = vmatprep.subr.mxu0 0.0
    %3606 = vmatpush1.msra.mxu0 %v450
    %3607 = vmatprep.subr.mxu0 0.0
    %3608 = vmatpush1.msra.mxu0 0.0
    %3609 = vmatprep.subr.mxu0 0.0
    %3610 = vmatpush1.msra.mxu0 0.0
    %3611 = vmatprep.subr.mxu0 0.0
    %3612 = vmatpush1.msra.mxu0 0.0
    %3613 = vmatprep.subr.mxu0 0.0
    %3614 = vmatpush1.msra.mxu0 0.0
    %3615 = vmatprep.subr.mxu0 0.0
    %3616 = vmatpush1.msra.mxu0 0.0
    %3617 = vmatprep.subr.mxu0 0.0
    %3618 = vmatpush1.msra.mxu0 0.0
    %3619 = vmatprep.subr.mxu0 0.0
    %3620 = vmatpush1.msra.mxu0 0.0
    %3621 = vmatprep.subr.mxu0 0.0
    %3622 = vmatpush1.msra.mxu0 0.0
    %3623 = vmatprep.subr.mxu0 0.0
    %3624 = vmatpush1.msra.mxu0 0.0
    %3625 = vmatprep.subr.mxu0 0.0
    %3626 = vmatpush1.msra.mxu0 0.0
    %3627 = vmatprep.subr.mxu0 0.0
    %3628 = vmatpush1.msra.mxu0 0.0
    %3629 = vmatprep.subr.mxu0 0.0
    %3630 = vmatpush1.msra.mxu0 0.0
    %3631 = vmatprep.subr.mxu0 0.0
    %3632 = vmatpush1.msra.mxu0 0.0
    %3633 = vmatprep.subr.mxu0 0.0
    %3634 = vmatpush1.msra.mxu0 0.0
    %3635 = vmatprep.subr.mxu0 0.0
    %3636 = vmatpush1.msra.mxu0 0.0
    %3637 = vmatprep.subr.mxu0 0.0
    %3638 = vmatpush1.msra.mxu0 0.0
    %3639 = vmatprep.subr.mxu0 0.0
    %3640 = vmatpush1.msra.mxu0 0.0
    %3641 = vmatprep.subr.mxu0 0.0
    %3642 = vmatpush1.msra.mxu0 0.0
    %3643 = vmatprep.subr.mxu0 0.0
    %3644 = vmatpush1.msra.mxu0 0.0
    %3645 = vmatprep.subr.mxu0 0.0
    %3646 = vmatpush1.msra.mxu0 0.0
    %3647 = vmatprep.subr.mxu0 0.0
    %3648 = vmatpush1.msra.mxu0 0.0
    %3649 = vmatprep.subr.mxu0 0.0
    %3650 = vmatpush1.msra.mxu0 0.0
    %3651 = vmatprep.subr.mxu0 0.0
    %3652 = vmatpush1.msra.mxu0 0.0
    %3653 = vmatprep.subr.mxu0 0.0
    %3654 = vmatpush1.msra.mxu0 0.0
    %3655 = vmatprep.subr.mxu0 0.0
    %3656 = vmatpush1.msra.mxu0 0.0
    %3657 = vmatprep.subr.mxu0 0.0
    %3658 = vmatpush1.msra.mxu0 0.0
    %3659 = vmatprep.subr.mxu0 0.0
    %3660 = vmatpush1.msra.mxu0 0.0
    %3661 = vmatprep.subr.mxu0 0.0
    %3662 = vmatpush1.msra.mxu0 0.0
    %3663 = vmatprep.mubr.f32.mxu0 0.0
    %3664 = vmatmul.mubr.f32.gmra.mrb[0].mxu0 %v3597
    %v3665 = vpop.f32.mrb[0].mxu0
    %v3666 = vadd.f32 0.0, %v3665
    %v3667 = vpop.f32.mrb[0].mxu0
    %3668 = vdwg.mxu0
    %v3670 = vrot.slane %v3666, 2
    %v3672 = vadd.f32 %v3595, %v3670
    %v3673 = vadd.f32 %v704, %v2246
    %3674 = vmatprep.subr.mxu0 0.0
    %3675 = vmatpush1.msra.mxu0 %v451
    %3676 = vmatprep.subr.mxu0 0.0
    %3677 = vmatpush1.msra.mxu0 %v452
    %3678 = vmatprep.subr.mxu0 0.0
    %3679 = vmatpush1.msra.mxu0 %v453
    %3680 = vmatprep.subr.mxu0 0.0
    %3681 = vmatpush1.msra.mxu0 %v454
    %3682 = vmatprep.subr.mxu0 0.0
    %3683 = vmatpush1.msra.mxu0 0.0
    %3684 = vmatprep.subr.mxu0 0.0
    %3685 = vmatpush1.msra.mxu0 0.0
    %3686 = vmatprep.subr.mxu0 0.0
    %3687 = vmatpush1.msra.mxu0 0.0
    %3688 = vmatprep.subr.mxu0 0.0
    %3689 = vmatpush1.msra.mxu0 0.0
    %3690 = vmatprep.subr.mxu0 0.0
    %3691 = vmatpush1.msra.mxu0 0.0
    %3692 = vmatprep.subr.mxu0 0.0
    %3693 = vmatpush1.msra.mxu0 0.0
    %3694 = vmatprep.subr.mxu0 0.0
    %3695 = vmatpush1.msra.mxu0 0.0
    %3696 = vmatprep.subr.mxu0 0.0
    %3697 = vmatpush1.msra.mxu0 0.0
    %3698 = vmatprep.subr.mxu0 0.0
    %3699 = vmatpush1.msra.mxu0 0.0
    %3700 = vmatprep.subr.mxu0 0.0
    %3701 = vmatpush1.msra.mxu0 0.0
    %3702 = vmatprep.subr.mxu0 0.0
    %3703 = vmatpush1.msra.mxu0 0.0
    %3704 = vmatprep.subr.mxu0 0.0
    %3705 = vmatpush1.msra.mxu0 0.0
    %3706 = vmatprep.subr.mxu0 0.0
    %3707 = vmatpush1.msra.mxu0 0.0
    %3708 = vmatprep.subr.mxu0 0.0
    %3709 = vmatpush1.msra.mxu0 0.0
    %3710 = vmatprep.subr.mxu0 0.0
    %3711 = vmatpush1.msra.mxu0 0.0
    %3712 = vmatprep.subr.mxu0 0.0
    %3713 = vmatpush1.msra.mxu0 0.0
    %3714 = vmatprep.subr.mxu0 0.0
    %3715 = vmatpush1.msra.mxu0 0.0
    %3716 = vmatprep.subr.mxu0 0.0
    %3717 = vmatpush1.msra.mxu0 0.0
    %3718 = vmatprep.subr.mxu0 0.0
    %3719 = vmatpush1.msra.mxu0 0.0
    %3720 = vmatprep.subr.mxu0 0.0
    %3721 = vmatpush1.msra.mxu0 0.0
    %3722 = vmatprep.subr.mxu0 0.0
    %3723 = vmatpush1.msra.mxu0 0.0
    %3724 = vmatprep.subr.mxu0 0.0
    %3725 = vmatpush1.msra.mxu0 0.0
    %3726 = vmatprep.subr.mxu0 0.0
    %3727 = vmatpush1.msra.mxu0 0.0
    %3728 = vmatprep.subr.mxu0 0.0
    %3729 = vmatpush1.msra.mxu0 0.0
    %3730 = vmatprep.subr.mxu0 0.0
    %3731 = vmatpush1.msra.mxu0 0.0
    %3732 = vmatprep.subr.mxu0 0.0
    %3733 = vmatpush1.msra.mxu0 0.0
    %3734 = vmatprep.subr.mxu0 0.0
    %3735 = vmatpush1.msra.mxu0 0.0
    %3736 = vmatprep.subr.mxu0 0.0
    %3737 = vmatpush1.msra.mxu0 0.0
    %3738 = vmatprep.mubr.f32.mxu0 0.0
    %3739 = vmatmul.mubr.f32.gmra.mrb[0].mxu0 %v3597
    %v3740 = vpop.f32.mrb[0].mxu0
    %v3741 = vadd.f32 0.0, %v3740
    %v3742 = vpop.f32.mrb[0].mxu0
    %3743 = vdwg.mxu0
    %v3745 = vrot.slane %v3741, 2
    %v3747 = vadd.f32 %v3673, %v3745
    %v3748 = vadd.f32 %v855, %v2323
    %3749 = vmatprep.subr.mxu0 0.0
    %3750 = vmatpush1.msra.mxu0 %v455
    %3751 = vmatprep.subr.mxu0 0.0
    %3752 = vmatpush1.msra.mxu0 %v456
    %3753 = vmatprep.subr.mxu0 0.0
    %3754 = vmatpush1.msra.mxu0 %v457
    %3755 = vmatprep.subr.mxu0 0.0
    %3756 = vmatpush1.msra.mxu0 %v458
    %3757 = vmatprep.subr.mxu0 0.0
    %3758 = vmatpush1.msra.mxu0 0.0
    %3759 = vmatprep.subr.mxu0 0.0
    %3760 = vmatpush1.msra.mxu0 0.0
    %3761 = vmatprep.subr.mxu0 0.0
    %3762 = vmatpush1.msra.mxu0 0.0
    %3763 = vmatprep.subr.mxu0 0.0
    %3764 = vmatpush1.msra.mxu0 0.0
    %3765 = vmatprep.subr.mxu0 0.0
    %3766 = vmatpush1.msra.mxu0 0.0
    %3767 = vmatprep.subr.mxu0 0.0
    %3768 = vmatpush1.msra.mxu0 0.0
    %3769 = vmatprep.subr.mxu0 0.0
    %3770 = vmatpush1.msra.mxu0 0.0
    %3771 = vmatprep.subr.mxu0 0.0
    %3772 = vmatpush1.msra.mxu0 0.0
    %3773 = vmatprep.subr.mxu0 0.0
    %3774 = vmatpush1.msra.mxu0 0.0
    %3775 = vmatprep.subr.mxu0 0.0
    %3776 = vmatpush1.msra.mxu0 0.0
    %3777 = vmatprep.subr.mxu0 0.0
    %3778 = vmatpush1.msra.mxu0 0.0
    %3779 = vmatprep.subr.mxu0 0.0
    %3780 = vmatpush1.msra.mxu0 0.0
    %3781 = vmatprep.subr.mxu0 0.0
    %3782 = vmatpush1.msra.mxu0 0.0
    %3783 = vmatprep.subr.mxu0 0.0
    %3784 = vmatpush1.msra.mxu0 0.0
    %3785 = vmatprep.subr.mxu0 0.0
    %3786 = vmatpush1.msra.mxu0 0.0
    %3787 = vmatprep.subr.mxu0 0.0
    %3788 = vmatpush1.msra.mxu0 0.0
    %3789 = vmatprep.subr.mxu0 0.0
    %3790 = vmatpush1.msra.mxu0 0.0
    %3791 = vmatprep.subr.mxu0 0.0
    %3792 = vmatpush1.msra.mxu0 0.0
    %3793 = vmatprep.subr.mxu0 0.0
    %3794 = vmatpush1.msra.mxu0 0.0
    %3795 = vmatprep.subr.mxu0 0.0
    %3796 = vmatpush1.msra.mxu0 0.0
    %3797 = vmatprep.subr.mxu0 0.0
    %3798 = vmatpush1.msra.mxu0 0.0
    %3799 = vmatprep.subr.mxu0 0.0
    %3800 = vmatpush1.msra.mxu0 0.0
    %3801 = vmatprep.subr.mxu0 0.0
    %3802 = vmatpush1.msra.mxu0 0.0
    %3803 = vmatprep.subr.mxu0 0.0
    %3804 = vmatpush1.msra.mxu0 0.0
    %3805 = vmatprep.subr.mxu0 0.0
    %3806 = vmatpush1.msra.mxu0 0.0
    %3807 = vmatprep.subr.mxu0 0.0
    %3808 = vmatpush1.msra.mxu0 0.0
    %3809 = vmatprep.subr.mxu0 0.0
    %3810 = vmatpush1.msra.mxu0 0.0
    %3811 = vmatprep.subr.mxu0 0.0
    %3812 = vmatpush1.msra.mxu0 0.0
    %3813 = vmatprep.mubr.f32.mxu0 0.0
    %3814 = vmatmul.mubr.f32.gmra.mrb[0].mxu0 %v3597
    %v3815 = vpop.f32.mrb[0].mxu0
    %v3816 = vadd.f32 0.0, %v3815
    %v3817 = vpop.f32.mrb[0].mxu0
    %3818 = vdwg.mxu0
    %v3820 = vrot.slane %v3816, 2
    %v3822 = vadd.f32 %v3748, %v3820
    %v3823 = vadd.f32 %v1006, %v2400
    %3824 = vmatprep.subr.mxu0 0.0
    %3825 = vmatpush1.msra.mxu0 %v459
    %3826 = vmatprep.subr.mxu0 0.0
    %3827 = vmatpush1.msra.mxu0 %v460
    %3828 = vmatprep.subr.mxu0 0.0
    %3829 = vmatpush1.msra.mxu0 %v461
    %3830 = vmatprep.subr.mxu0 0.0
    %3831 = vmatpush1.msra.mxu0 %v462
    %3832 = vmatprep.subr.mxu0 0.0
    %3833 = vmatpush1.msra.mxu0 0.0
    %3834 = vmatprep.subr.mxu0 0.0
    %3835 = vmatpush1.msra.mxu0 0.0
    %3836 = vmatprep.subr.mxu0 0.0
    %3837 = vmatpush1.msra.mxu0 0.0
    %3838 = vmatprep.subr.mxu0 0.0
    %3839 = vmatpush1.msra.mxu0 0.0
    %3840 = vmatprep.subr.mxu0 0.0
    %3841 = vmatpush1.msra.mxu0 0.0
    %3842 = vmatprep.subr.mxu0 0.0
    %3843 = vmatpush1.msra.mxu0 0.0
    %3844 = vmatprep.subr.mxu0 0.0
    %3845 = vmatpush1.msra.mxu0 0.0
    %3846 = vmatprep.subr.mxu0 0.0
    %3847 = vmatpush1.msra.mxu0 0.0
    %3848 = vmatprep.subr.mxu0 0.0
    %3849 = vmatpush1.msra.mxu0 0.0
    %3850 = vmatprep.subr.mxu0 0.0
    %3851 = vmatpush1.msra.mxu0 0.0
    %3852 = vmatprep.subr.mxu0 0.0
    %3853 = vmatpush1.msra.mxu0 0.0
    %3854 = vmatprep.subr.mxu0 0.0
    %3855 = vmatpush1.msra.mxu0 0.0
    %3856 = vmatprep.subr.mxu0 0.0
    %3857 = vmatpush1.msra.mxu0 0.0
    %3858 = vmatprep.subr.mxu0 0.0
    %3859 = vmatpush1.msra.mxu0 0.0
    %3860 = vmatprep.subr.mxu0 0.0
    %3861 = vmatpush1.msra.mxu0 0.0
    %3862 = vmatprep.subr.mxu0 0.0
    %3863 = vmatpush1.msra.mxu0 0.0
    %3864 = vmatprep.subr.mxu0 0.0
    %3865 = vmatpush1.msra.mxu0 0.0
    %3866 = vmatprep.subr.mxu0 0.0
    %3867 = vmatpush1.msra.mxu0 0.0
    %3868 = vmatprep.subr.mxu0 0.0
    %3869 = vmatpush1.msra.mxu0 0.0
    %3870 = vmatprep.subr.mxu0 0.0
    %3871 = vmatpush1.msra.mxu0 0.0
    %3872 = vmatprep.subr.mxu0 0.0
    %3873 = vmatpush1.msra.mxu0 0.0
    %3874 = vmatprep.subr.mxu0 0.0
    %3875 = vmatpush1.msra.mxu0 0.0
    %3876 = vmatprep.subr.mxu0 0.0
    %3877 = vmatpush1.msra.mxu0 0.0
    %3878 = vmatprep.subr.mxu0 0.0
    %3879 = vmatpush1.msra.mxu0 0.0
    %3880 = vmatprep.subr.mxu0 0.0
    %3881 = vmatpush1.msra.mxu0 0.0
    %3882 = vmatprep.subr.mxu0 0.0
    %3883 = vmatpush1.msra.mxu0 0.0
    %3884 = vmatprep.subr.mxu0 0.0
    %3885 = vmatpush1.msra.mxu0 0.0
    %3886 = vmatprep.subr.mxu0 0.0
    %3887 = vmatpush1.msra.mxu0 0.0
    %3888 = vmatprep.mubr.f32.mxu0 0.0
    %3889 = vmatmul.mubr.f32.gmra.mrb[0].mxu0 %v3597
    %v3890 = vpop.f32.mrb[0].mxu0
    %v3891 = vadd.f32 0.0, %v3890
    %v3892 = vpop.f32.mrb[0].mxu0
    %3893 = vdwg.mxu0
    %v3895 = vrot.slane %v3891, 2
    %v3897 = vadd.f32 %v3823, %v3895
    %v3898 = vxor.u32 %v3672, 2147483648
    %v3899 = vmul.f32 %v3898, 1.442695
    %v3900 = vpow.pop %v3899
    %v3901 = vadd.f32 %v3900, 1.0
    %v3902 = vrcp.pop %v3901
    %v3903 = vmul.f32 1.0, %v3902
    %v3904 = vxor.u32 %v3747, 2147483648
    %v3905 = vmul.f32 %v3904, 1.442695
    %v3906 = vpow.pop %v3905
    %v3907 = vadd.f32 %v3906, 1.0
    %v3908 = vrcp.pop %v3907
    %v3909 = vmul.f32 1.0, %v3908
    %v3910 = vtanh.pop %v3822
    %v3911 = vxor.u32 %v3897, 2147483648
    %v3912 = vmul.f32 %v3911, 1.442695
    %v3913 = vpow.pop %v3912
    %v3914 = vadd.f32 %v3913, 1.0
    %v3915 = vrcp.pop %v3914
    %v3916 = vmul.f32 1.0, %v3915
    %v3918 = vrot.slane %v3564, 6
    %v3920 = vmul.f32 %v3909, %v3918
    %v3921 = vmul.f32 %v3903, %v3910
    %v3922 = vadd.f32 %v3920, %v3921
    %v3923 = vtanh.pop %v3922
    %v3924 = vmul.f32 %v3916, %v3923
    %v3926 = vcombine.high %v3924, %v3924
    %v3928 = vunpack.c.l.s4 1966171168
    %v3929 = vunpack.c.0.s8 %v3928
    %v3930 = vlaneseq
    %v3931 = vshrl.u32 %v3930, 7
    %v3932 = vsub.s32 %v3929, %v3931
    %v3933 = vrot.slane %v3926, %v3932
    %v3934 = vcombine.high %v3933, %v3933
    %v3936 = vunpack.c.l.s4 1966171168
    %v3937 = vunpack.c.0.s8 %v3936
    %v3938 = vlaneseq
    %v3939 = vshrl.u32 %v3938, 7
    %v3940 = vsub.s32 %v3937, %v3939
    %v3941 = vrot.slane %v3933, %v3940
    %v3943 = vunpack.c.l.s4 1966171168
    %v3944 = vunpack.c.0.s8 %v3943
    %v3945 = vlaneseq
    %v3946 = vshrl.u32 %v3945, 7
    %v3947 = vsub.s32 %v3944, %v3946
    %v3948 = vrot.slane %v3934, %v3947
    %v3949 = vcombine.high %v3941, %v3941
    %v3950 = vcombine.high %v3948, %v3948
    %3953 = vst.msk [vmem:[#allocation2 + $0x7] sm:$0x1] %vm1427, %v3949
    %3954 = vst.msk [vmem:[#allocation2 + $0xf] sm:$0x1] %vm1427, %v3950
    %vm3955 = vcmask 261126
    %3956 = vst.msk [vmem:[#allocation7 - $0x6] sm:$0xc0] %vm3955, %v3924
    %3957 = vst.msk [vmem:[#allocation9 - $0x6] sm:$0xc0] %vm3955, %v3922
    %v3958 = vld [vmem:[#allocation2] sm:$0xff]
    %v3959 = vld [vmem:[#allocation2 + $0x8] sm:$0xff]
    %v3960 = vld [vmem:[%s8] sm:$0xff]
    %v3961 = vld [vmem:[%s8 + $0x8] sm:$0xff]
    %v3962 = vld [vmem:[%s8 + $0x10] sm:$0xff]
    %v3963 = vld [vmem:[%s8 + $0x18] sm:$0xff]
    %v3964 = vld [vmem:[%s9] sm:$0x1]
    %v3966 = vlaneseq
    %v3967 = vshrl.u32 %v3966, 7
    %v3968 = vsub.s32 0, %v3967
    %v3969 = vrot.slane %v3964, %v3968
    %v3972 = vsel %vm467, %v3958, 0
    %v3975 = vsel %vm467, %v3959, 0
    %3977 = vmatprep.subr.mxu0 0.0
    %3978 = vmatpush1.msra.mxu0 %v3960
    %3979 = vmatprep.subr.mxu0 0.0
    %3980 = vmatpush1.msra.mxu0 %v3961
    %3981 = vmatprep.subr.mxu0 0.0
    %3982 = vmatpush1.msra.mxu0 %v3962
    %3983 = vmatprep.subr.mxu0 0.0
    %3984 = vmatpush1.msra.mxu0 %v3963
    %3985 = vmatprep.subr.mxu0 0.0
    %3986 = vmatpush1.msra.mxu0 0.0
    %3987 = vmatprep.subr.mxu0 0.0
    %3988 = vmatpush1.msra.mxu0 0.0
    %3989 = vmatprep.subr.mxu0 0.0
    %3990 = vmatpush1.msra.mxu0 0.0
    %3991 = vmatprep.subr.mxu0 0.0
    %3992 = vmatpush1.msra.mxu0 0.0
    %3993 = vmatprep.subr.mxu0 0.0
    %3994 = vmatpush1.msra.mxu0 0.0
    %3995 = vmatprep.subr.mxu0 0.0
    %3996 = vmatpush1.msra.mxu0 0.0
    %3997 = vmatprep.subr.mxu0 0.0
    %3998 = vmatpush1.msra.mxu0 0.0
    %3999 = vmatprep.subr.mxu0 0.0
    %4000 = vmatpush1.msra.mxu0 0.0
    %4001 = vmatprep.subr.mxu0 0.0
    %4002 = vmatpush1.msra.mxu0 0.0
    %4003 = vmatprep.subr.mxu0 0.0
    %4004 = vmatpush1.msra.mxu0 0.0
    %4005 = vmatprep.subr.mxu0 0.0
    %4006 = vmatpush1.msra.mxu0 0.0
    %4007 = vmatprep.subr.mxu0 0.0
    %4008 = vmatpush1.msra.mxu0 0.0
    %4009 = vmatprep.subr.mxu0 0.0
    %4010 = vmatpush1.msra.mxu0 0.0
    %4011 = vmatprep.subr.mxu0 0.0
    %4012 = vmatpush1.msra.mxu0 0.0
    %4013 = vmatprep.subr.mxu0 0.0
    %4014 = vmatpush1.msra.mxu0 0.0
    %4015 = vmatprep.subr.mxu0 0.0
    %4016 = vmatpush1.msra.mxu0 0.0
    %4017 = vmatprep.subr.mxu0 0.0
    %4018 = vmatpush1.msra.mxu0 0.0
    %4019 = vmatprep.subr.mxu0 0.0
    %4020 = vmatpush1.msra.mxu0 0.0
    %4021 = vmatprep.subr.mxu0 0.0
    %4022 = vmatpush1.msra.mxu0 0.0
    %4023 = vmatprep.subr.mxu0 0.0
    %4024 = vmatpush1.msra.mxu0 0.0
    %4025 = vmatprep.subr.mxu0 0.0
    %4026 = vmatpush1.msra.mxu0 0.0
    %4027 = vmatprep.subr.mxu0 0.0
    %4028 = vmatpush1.msra.mxu0 0.0
    %4029 = vmatprep.subr.mxu0 0.0
    %4030 = vmatpush1.msra.mxu0 0.0
    %4031 = vmatprep.subr.mxu0 0.0
    %4032 = vmatpush1.msra.mxu0 0.0
    %4033 = vmatprep.subr.mxu0 0.0
    %4034 = vmatpush1.msra.mxu0 0.0
    %4035 = vmatprep.subr.mxu0 0.0
    %4036 = vmatpush1.msra.mxu0 0.0
    %4037 = vmatprep.subr.mxu0 0.0
    %4038 = vmatpush1.msra.mxu0 0.0
    %4039 = vmatprep.subr.mxu0 0.0
    %4040 = vmatpush1.msra.mxu0 0.0
    %4041 = vmatprep.mubr.f32.mxu0 0.0
    %4042 = vmatmul.mubr.f32.gmra.mrb[0].mxu0 %v3972
    %v4043 = vpop.f32.mrb[0].mxu0
    %v4044 = vadd.f32 %v3969, %v4043
    %v4045 = vpop.f32.mrb[0].mxu0
    %4046 = vmatprep.mubr.f32.mxu0 0.0
    %4047 = vmatmul.mubr.f32.gmra.mrb[0].mxu0 %v3975
    %v4048 = vpop.f32.mrb[0].mxu0
    %v4049 = vadd.f32 %v3969, %v4048
    %v4050 = vpop.f32.mrb[0].mxu0
    %4051 = vdwg.mxu0
    %4052 = vst [vmem:[#allocation6] sm:$0xff] %v4044
    %4053 = vst [vmem:[#allocation6 + $0x8] sm:$0xff] %v4049
    // Predicated region
    $region46: #{tpu_custom_call.1} parent=1 // pred_check
      _
    $region47: #{tpu_custom_call.1} parent=1 // pred_check_branch
      %4055 = sbr.rel (0) target = $region49
    $region48: #{tpu_custom_call.1} parent=1 // pred_region
      %s4057 = ssub.s32 256, 256
      %4058 = vsyncadd [#allocation4], %s4057
      %s4059 = sshll.u32 [#allocation6], 4
      %s4060 = int_to_ptr.vmem [resolvable:$true] %s4059
      %4065 = dma.vmem_to_hbm [thread:$0]  %s4060, 256, %s10, [#allocation4], 128, 128, 8
    $region49: #{tpu_custom_call.1} parent=1 // pred_fallthru
      _
    // Predicated region
    $region50: #{tpu_custom_call.1} parent=1 // pred_check
      _
    $region51: #{tpu_custom_call.1} parent=1 // pred_check_branch
      %4067 = sbr.rel (0) target = $region53
    $region52: #{tpu_custom_call.1} parent=1 // pred_region
      %s4069 = ssub.s32 32, 32
      %4070 = vsyncadd [#allocation8], %s4069
      %s4072 = sshll.u32 [#allocation7], 4
      %s4073 = int_to_ptr.vmem [resolvable:$true] %s4072
      %4075 = dma.vmem_to_hbm [thread:$0]  %s4073, 32, %s11, [#allocation8]
    $region53: #{tpu_custom_call.1} parent=1 // pred_fallthru
      _
    // Predicated region
    $region54: #{tpu_custom_call.1} parent=1 // pred_check
      _
    $region55: #{tpu_custom_call.1} parent=1 // pred_check_branch
      %4077 = sbr.rel (0) target = $region57
    $region56: #{tpu_custom_call.1} parent=1 // pred_region
      %s4079 = ssub.s32 32, 32
      %4080 = vsyncadd [#allocation8], %s4079
      %s4082 = sshll.u32 [#allocation9], 4
      %s4083 = int_to_ptr.vmem [resolvable:$true] %s4082
      %4085 = dma.vmem_to_hbm [thread:$0]  %s4083, 32, %s12, [#allocation8]
    $region57: #{tpu_custom_call.1} parent=1 // pred_fallthru
      _
    // Predicated region
    $region58: #{tpu_custom_call.1} parent=1 // pred_check
      _
    $region59: #{tpu_custom_call.1} parent=1 // pred_check_branch
      %4087 = sbr.rel (0) target = $region61
    $region60: #{tpu_custom_call.1} parent=1 // pred_region
      %4088 = dma.done [#allocation4], 256
    $region61: #{tpu_custom_call.1} parent=1 // pred_fallthru
      _
    // Predicated region
    $region62: #{tpu_custom_call.1} parent=1 // pred_check
      _
    $region63: #{tpu_custom_call.1} parent=1 // pred_check_branch
      %4090 = sbr.rel (0) target = $region65
    $region64: #{tpu_custom_call.1} parent=1 // pred_region
      %4091 = dma.done [#allocation8], 32
    $region65: #{tpu_custom_call.1} parent=1 // pred_fallthru
      _
    // Predicated region
    $region66: #{tpu_custom_call.1} parent=1 // pred_check
      _
    $region67: #{tpu_custom_call.1} parent=1 // pred_check_branch
      %4093 = sbr.rel (0) target = $region69
    $region68: #{tpu_custom_call.1} parent=1 // pred_region
      %4094 = dma.done [#allocation8], 32
    $region69: #{tpu_custom_call.1} parent=1 // pred_fallthru
      _
    %4095 = vsyncpa [#allocation4], 1
    %4096 = vsyncpa [#allocation8], 1
    %4097 = vsyncpa [#allocation5], 1

</llo_original>
